<compile_context>
chip_gen: v7x
topology: tpu7x:2x2x1
jax: 0.10.0
libtpu: 0.0.40
codegen_flags: <defaults>
</compile_context>

<pallas_src>
import functools

import jax
import jax.numpy as jnp
from jax.experimental import pallas as pl
from jax.experimental.pallas import tpu as pltpu


_VMEM_LIMIT = 32 * 1024 * 1024   # modest scoped-VMEM request, safe on v5e/v6e/v7x
_LN_EPS = 1e-5                   # PyTorch LayerNorm default
_NEG_INF = -1e30                 # mask value for padded keys


def _round_up(x, m):
    return (x + m - 1) // m * m


def _row_tile(m, target=256):
    """Largest multiple-of-8 divisor of m that is <= target.

    Prefers a divisor strictly smaller than m so the row grid has >= 2
    pipelined (double-buffered) steps whenever the shape allows it.
    """
    best = None
    for t in range(min(m, target), 7, -1):
        if m % t == 0 and t % 8 == 0:
            if t < m:
                return t
            if best is None:
                best = t
    return best if best is not None else m


def _compiler_params(n_axes=1):
    return pltpu.CompilerParams(
        dimension_semantics=("parallel",) * n_axes,
        vmem_limit_bytes=_VMEM_LIMIT,
    )


def _layernorm_f32(x, gamma, beta):
    """Row-wise LayerNorm in f32 (x already f32)."""
    mean = jnp.mean(x, axis=-1, keepdims=True)
    var = jnp.mean(jnp.square(x - mean), axis=-1, keepdims=True)
    return (x - mean) * jax.lax.rsqrt(var + _LN_EPS) * gamma + beta


# ----------------------------------------------------------------------------
# Pallas kernels
# ----------------------------------------------------------------------------
def _linear_kernel(x_ref, w_ref, bias_ref, o_ref):
    # o = x @ w + b  (bf16 MXU operands, f32 accumulation)
    acc = jnp.dot(x_ref[...].astype(jnp.bfloat16),
                  w_ref[...].astype(jnp.bfloat16),
                  preferred_element_type=jnp.float32)
    o_ref[...] = (acc + bias_ref[...].astype(jnp.float32)).astype(o_ref.dtype)


def _ln_linear_kernel(x_ref, g_ref, b_ref, w_ref, bias_ref, o_ref):
    # o = LayerNorm(x) @ w + b   (LN stats in f32, matmul operands bf16)
    x = x_ref[...].astype(jnp.float32)
    h = _layernorm_f32(x, g_ref[...].astype(jnp.float32),
                       b_ref[...].astype(jnp.float32))
    acc = jnp.dot(h.astype(jnp.bfloat16),
                  w_ref[...].astype(jnp.bfloat16),
                  preferred_element_type=jnp.float32)
    o_ref[...] = (acc + bias_ref[...].astype(jnp.float32)).astype(o_ref.dtype)


def _ln_mlp_res_kernel(x_ref, g_ref, b_ref, w1_ref, b1_ref, w2_ref, b2_ref,
                       o_ref):
    # o = x + fc2(GELU(fc1(LayerNorm(x))))   -- fused transformer MLP half
    x = x_ref[...].astype(jnp.float32)
    h = _layernorm_f32(x, g_ref[...].astype(jnp.float32),
                       b_ref[...].astype(jnp.float32))
    a = jnp.dot(h.astype(jnp.bfloat16), w1_ref[...].astype(jnp.bfloat16),
                preferred_element_type=jnp.float32)
    a = a + b1_ref[...].astype(jnp.float32)
    # exact (erf-based) GELU, matching nn.GELU() default, in f32
    a = 0.5 * a * (1.0 + jax.lax.erf(a * 0.7071067811865476))
    out = jnp.dot(a.astype(jnp.bfloat16), w2_ref[...].astype(jnp.bfloat16),
                  preferred_element_type=jnp.float32)
    out = out + b2_ref[...].astype(jnp.float32)
    o_ref[...] = (x + out).astype(o_ref.dtype)


def _attn_block_kernel(qkv_ref, wp_ref, bp_ref, res_ref, o_ref, *,
                       num_heads, head_dim, scale, n_real):
    # Per batch element: multi-head softmax attention on the raw (Np, 3E) QKV
    # block, fused with the output projection and the residual add.
    #   proj(concat_h o_h) = sum_h o_h @ W_proj[h*D:(h+1)*D, :]
    qkv = qkv_ref[...]
    n_pad = qkv.shape[0]
    emb = num_heads * head_dim
    wp = wp_ref[...].astype(jnp.bfloat16)                      # (E, E)

    key_ids = jax.lax.broadcasted_iota(jnp.int32, (n_pad, n_pad), 1)
    valid = key_ids < n_real                                   # mask padded keys

    acc = jnp.zeros((n_pad, emb), jnp.float32)
    for h in range(num_heads):
        lo = h * head_dim
        q = qkv[:, lo:lo + head_dim].astype(jnp.float32)
        k = qkv[:, emb + lo:emb + lo + head_dim].astype(jnp.float32)
        v = qkv[:, 2 * emb + lo:2 * emb + lo + head_dim].astype(jnp.bfloat16)

        s = jnp.dot(q, k.T, preferred_element_type=jnp.float32) * scale
        s = jnp.where(valid, s, _NEG_INF)
        s = s - jnp.max(s, axis=-1, keepdims=True)
        p = jnp.exp(s)
        p = p * pl.reciprocal(jnp.sum(p, axis=-1, keepdims=True), approx=True)

        o_h = jnp.dot(p.astype(jnp.bfloat16), v,
                      preferred_element_type=jnp.float32)      # (Np, D)
        acc = acc + jnp.dot(o_h.astype(jnp.bfloat16),
                            wp[lo:lo + head_dim, :],
                            preferred_element_type=jnp.float32)

    out = res_ref[...].astype(jnp.float32) + acc + bp_ref[...].astype(jnp.float32)
    o_ref[...] = out.astype(o_ref.dtype)


# ----------------------------------------------------------------------------
# Pallas wrappers
# ----------------------------------------------------------------------------
def linear(x, w, b):
    """x: (M, K), w: (K, N), b: (N,) -> (M, N).  Row-tiled, weight resident."""
    M, K = x.shape
    N = w.shape[1]
    tm = _row_tile(M)
    return pl.pallas_call(
        _linear_kernel,
        out_shape=jax.ShapeDtypeStruct((M, N), x.dtype),
        grid=(M // tm,),
        in_specs=[
            pl.BlockSpec((tm, K), lambda i: (i, 0)),
            pl.BlockSpec((K, N), lambda i: (0, 0)),
            pl.BlockSpec((1, N), lambda i: (0, 0)),
        ],
        out_specs=pl.BlockSpec((tm, N), lambda i: (i, 0)),
        compiler_params=_compiler_params(1),
    )(x, w, b.reshape(1, N))


def ln_linear(x, gamma, beta, w, b):
    """Fused LayerNorm + Linear.  x: (M, K) -> (M, N)."""
    M, K = x.shape
    N = w.shape[1]
    tm = _row_tile(M)
    return pl.pallas_call(
        _ln_linear_kernel,
        out_shape=jax.ShapeDtypeStruct((M, N), x.dtype),
        grid=(M // tm,),
        in_specs=[
            pl.BlockSpec((tm, K), lambda i: (i, 0)),
            pl.BlockSpec((1, K), lambda i: (0, 0)),
            pl.BlockSpec((1, K), lambda i: (0, 0)),
            pl.BlockSpec((K, N), lambda i: (0, 0)),
            pl.BlockSpec((1, N), lambda i: (0, 0)),
        ],
        out_specs=pl.BlockSpec((tm, N), lambda i: (i, 0)),
        compiler_params=_compiler_params(1),
    )(x, gamma.reshape(1, K), beta.reshape(1, K), w, b.reshape(1, N))


def ln_mlp_residual(x, gamma, beta, w1, b1, w2, b2):
    """Fused x + fc2(GELU(fc1(LN(x)))).  x: (M, C)."""
    M, C = x.shape
    Hd = w1.shape[1]
    tm = _row_tile(M)
    return pl.pallas_call(
        _ln_mlp_res_kernel,
        out_shape=jax.ShapeDtypeStruct((M, C), x.dtype),
        grid=(M // tm,),
        in_specs=[
            pl.BlockSpec((tm, C), lambda i: (i, 0)),
            pl.BlockSpec((1, C), lambda i: (0, 0)),
            pl.BlockSpec((1, C), lambda i: (0, 0)),
            pl.BlockSpec((C, Hd), lambda i: (0, 0)),
            pl.BlockSpec((1, Hd), lambda i: (0, 0)),
            pl.BlockSpec((Hd, C), lambda i: (0, 0)),
            pl.BlockSpec((1, C), lambda i: (0, 0)),
        ],
        out_specs=pl.BlockSpec((tm, C), lambda i: (i, 0)),
        compiler_params=_compiler_params(1),
    )(x, gamma.reshape(1, C), beta.reshape(1, C),
      w1, b1.reshape(1, Hd), w2, b2.reshape(1, C))


def attention_block(qkv, proj_w, proj_b, residual, *, num_heads, n_real):
    """Fused MHA + output projection + residual.

    qkv: (B, Np, 3E) raw QKV rows; residual: (B, Np, E) block input.
    Returns residual + proj(attention(qkv)).
    """
    B, Np, E3 = qkv.shape
    E = E3 // 3
    D = E // num_heads
    kernel = functools.partial(_attn_block_kernel, num_heads=num_heads,
                               head_dim=D, scale=D ** (-0.5), n_real=n_real)
    return pl.pallas_call(
        kernel,
        out_shape=jax.ShapeDtypeStruct((B, Np, E), residual.dtype),
        grid=(B,),
        in_specs=[
            pl.BlockSpec((None, Np, E3), lambda b: (b, 0, 0)),
            pl.BlockSpec((E, E), lambda b: (0, 0)),
            pl.BlockSpec((1, E), lambda b: (0, 0)),
            pl.BlockSpec((None, Np, E), lambda b: (b, 0, 0)),
        ],
        out_specs=pl.BlockSpec((None, Np, E), lambda b: (b, 0, 0)),
        compiler_params=_compiler_params(1),
    )(qkv, proj_w, proj_b.reshape(1, E), residual)


# ----------------------------------------------------------------------------
# Model
# ----------------------------------------------------------------------------
def init_vit_params(key, image_size, patch_size, in_channels, embed_dim,
                    num_heads, num_layers, num_classes, mlp_ratio=4.0):
    num_patches = (image_size // patch_size) ** 2
    hidden = int(embed_dim * mlp_ratio)
    keys = iter(jax.random.split(key, 8 + 8 * num_layers))

    def nrm(k, shape, scale=0.02):
        return (scale * jax.random.normal(k, shape)).astype(jnp.float32)

    params = {
        "conv_w": nrm(next(keys), (embed_dim, in_channels, patch_size, patch_size)),
        "conv_b": jnp.zeros((embed_dim,), jnp.float32),
        "cls_token": nrm(next(keys), (1, 1, embed_dim), scale=1.0),
        "positions": nrm(next(keys), (num_patches + 1, embed_dim), scale=1.0),
        "ln_g": jnp.ones((embed_dim,), jnp.float32),
        "ln_b": jnp.zeros((embed_dim,), jnp.float32),
        "head_w": nrm(next(keys), (embed_dim, num_classes)),
        "head_b": jnp.zeros((num_classes,), jnp.float32),
        "layers": [],
    }
    for _ in range(num_layers):
        params["layers"].append({
            "ln1_g": jnp.ones((embed_dim,), jnp.float32),
            "ln1_b": jnp.zeros((embed_dim,), jnp.float32),
            "qkv_w": nrm(next(keys), (embed_dim, 3 * embed_dim)),
            "qkv_b": jnp.zeros((3 * embed_dim,), jnp.float32),
            "proj_w": nrm(next(keys), (embed_dim, embed_dim)),
            "proj_b": jnp.zeros((embed_dim,), jnp.float32),
            "ln2_g": jnp.ones((embed_dim,), jnp.float32),
            "ln2_b": jnp.zeros((embed_dim,), jnp.float32),
            "fc1_w": nrm(next(keys), (embed_dim, hidden)),
            "fc1_b": jnp.zeros((hidden,), jnp.float32),
            "fc2_w": nrm(next(keys), (hidden, embed_dim)),
            "fc2_b": jnp.zeros((embed_dim,), jnp.float32),
        })
    return params


def patch_embed(x, params, patch_size, n_pad):
    """x: (B, C, H, W) NCHW -> zero-padded tokens (B, n_pad, E)."""
    B, C, H, W = x.shape
    hp, wp = H // patch_size, W // patch_size
    E = params["conv_w"].shape[0]
    # Conv2d(kernel=stride=patch) == per-patch flatten (c, i, j order) + matmul.
    # TODO(synk): patch extraction reshape/transpose stays as XLA glue.
    xp = x.reshape(B, C, hp, patch_size, wp, patch_size)
    xp = xp.transpose(0, 2, 4, 1, 3, 5).reshape(
        B * hp * wp, C * patch_size * patch_size)
    w = params["conv_w"].reshape(E, -1).T                       # (C*p*p, E)
    tok = linear(xp, w, params["conv_b"]).reshape(B, hp * wp, E)
    cls = jnp.broadcast_to(params["cls_token"], (B, 1, E))
    tok = jnp.concatenate([cls, tok], axis=1) + params["positions"][None, :, :]
    # Pad token axis with zero rows so all downstream blocks are sublane
    # aligned; padded keys are masked inside the attention kernel.
    pad = n_pad - tok.shape[1]
    if pad:
        tok = jnp.pad(tok, ((0, 0), (0, pad), (0, 0)))
    return tok


def transformer_block(tok, lp, *, num_heads, n_real):
    B, Np, E = tok.shape
    rows = tok.reshape(B * Np, E)
    # fused LN1 -> QKV projection (no separate LN HBM pass)
    qkv = ln_linear(rows, lp["ln1_g"], lp["ln1_b"], lp["qkv_w"], lp["qkv_b"])
    qkv = qkv.reshape(B, Np, 3 * E)
    # fused attention + output projection + residual add, one batch per step
    tok = attention_block(qkv, lp["proj_w"], lp["proj_b"], tok,
                          num_heads=num_heads, n_real=n_real)
    # fused LN2 -> fc1 -> GELU -> fc2 -> +residual
    rows = ln_mlp_residual(tok.reshape(B * Np, E), lp["ln2_g"], lp["ln2_b"],
                           lp["fc1_w"], lp["fc1_b"], lp["fc2_w"], lp["fc2_b"])
    return rows.reshape(B, Np, E)


def vit_forward(params, x, *, patch_size, num_heads):
    n_real = params["positions"].shape[0]          # num_patches + 1
    n_pad = _round_up(n_real, 8)
    tok = patch_embed(x, params, patch_size, n_pad)            # (B, Np, E)
    for lp in params["layers"]:
        tok = transformer_block(tok, lp, num_heads=num_heads, n_real=n_real)
    # LayerNorm is row-wise, so LN(tokens)[:, 0] == LN(tokens[:, 0]);
    # select cls first, then run the fused LN + classifier head.
    cls = tok[:, 0]                                            # (B, E)
    return ln_linear(cls, params["ln_g"], params["ln_b"],
                     params["head_w"], params["head_b"])       # (B, num_classes)


# ----------------------------------------------------------------------------
# Demo
# ----------------------------------------------------------------------------
if __name__ == "__main__":
    # Small ViT config
    image_size = 16
    patch_size = 4
    in_channels = 4
    embed_dim = 32
    num_heads = 4
    num_layers = 2
    num_classes = 10

    key = jax.random.PRNGKey(0)
    pkey, xkey = jax.random.split(key)

    params = init_vit_params(pkey, image_size, patch_size, in_channels,
                             embed_dim, num_heads, num_layers, num_classes)

    # layout: NCHW input, same as PyTorch
    x = jax.random.normal(xkey, (2, in_channels, image_size, image_size),
                          dtype=jnp.float32)

    fwd = jax.jit(functools.partial(vit_forward,
                                    patch_size=patch_size,
                                    num_heads=num_heads))
    logits = fwd(params, x)
    jax.block_until_ready(logits)

    assert logits.shape == (2, num_classes), logits.shape
    assert jnp.all(jnp.isfinite(logits))
    print("KERNEL_OK")
</pallas_src>

<mosaic_0001>
module attributes {stable_mosaic.version = 11 : i64} {
  func.func @_linear_kernel(%arg0: i32, %arg1: memref<16x64xf32, #tpu.memory_space<vmem>>, %arg2: memref<64x32xf32, #tpu.memory_space<vmem>>, %arg3: memref<1x32xf32, #tpu.memory_space<vmem>>, %arg4: memref<16x32xf32, #tpu.memory_space<vmem>>) attributes {dimension_semantics = [#tpu.dimension_semantics<parallel>], iteration_bounds = array<i64: 2>, scalar_prefetch = 0 : i64, scratch_operands = 0 : i64, tpu.core_type = #tpu.core_type<tc>, window_params = [{transform_indices = @transform_0, window_bounds = array<i64: 16, 64>}, {pipeline_mode = #tpu.pipeline_mode<synchronous>, transform_indices = @transform_1, window_bounds = array<i64: 64, 32>}, {pipeline_mode = #tpu.pipeline_mode<synchronous>, transform_indices = @transform_2, window_bounds = array<i64: 1, 32>}, {transform_indices = @transform_3, window_bounds = array<i64: 16, 32>}]} {
    %c0 = arith.constant 0 : index
    %c0_0 = arith.constant 0 : index
    %0 = vector.load %arg1[%c0, %c0_0] : memref<16x64xf32, #tpu.memory_space<vmem>>, vector<16x64xf32>
    %1 = arith.truncf %0 : vector<16x64xf32> to vector<16x64xbf16>
    %c0_1 = arith.constant 0 : index
    %c0_2 = arith.constant 0 : index
    %2 = vector.load %arg2[%c0_1, %c0_2] : memref<64x32xf32, #tpu.memory_space<vmem>>, vector<64x32xf32>
    %3 = arith.truncf %2 : vector<64x32xf32> to vector<64x32xbf16>
    %cst = arith.constant dense<0.000000e+00> : vector<16x32xf32>
    %4 = tpu.matmul %1, %3, %cst {dimension_numbers = #tpu.dot_dimension_numbers<[1], [0], [0], [1], [0, 0, 1, 1], [], []>} : vector<16x64xbf16>, vector<64x32xbf16>, vector<16x32xf32> -> vector<16x32xf32>
    %c0_3 = arith.constant 0 : index
    %c0_4 = arith.constant 0 : index
    %5 = vector.load %arg3[%c0_3, %c0_4] : memref<1x32xf32, #tpu.memory_space<vmem>>, vector<1x32xf32>
    %6 = vector.broadcast %5 : vector<1x32xf32> to vector<16x32xf32>
    %7 = arith.addf %4, %6 : vector<16x32xf32>
    %c0_5 = arith.constant 0 : index
    %c0_6 = arith.constant 0 : index
    %8 = vector.load %arg4[%c0_5, %c0_6] : memref<16x32xf32, #tpu.memory_space<vmem>>, vector<16x32xf32>
    tpu.vector_store %arg4[%c0_5, %c0_6], %7 {strides = array<i32>} : memref<16x32xf32, #tpu.memory_space<vmem>>, vector<16x32xf32>,
    return
  }
  func.func @transform_0(%arg0: i32) -> (i32, i32) {
    %c0_i32 = arith.constant 0 : i32
    %c0_i32_0 = arith.constant 0 : i32
    return %arg0, %c0_i32 : i32, i32
  }
  func.func @transform_1(%arg0: i32) -> (i32, i32) {
    %c0_i32 = arith.constant 0 : i32
    %c0_i32_0 = arith.constant 0 : i32
    %c0_i32_1 = arith.constant 0 : i32
    return %c0_i32, %c0_i32_0 : i32, i32
  }
  func.func @transform_2(%arg0: i32) -> (i32, i32) {
    %c0_i32 = arith.constant 0 : i32
    %c0_i32_0 = arith.constant 0 : i32
    %c0_i32_1 = arith.constant 0 : i32
    return %c0_i32, %c0_i32_0 : i32, i32
  }
  func.func @transform_3(%arg0: i32) -> (i32, i32) {
    %c0_i32 = arith.constant 0 : i32
    %c0_i32_0 = arith.constant 0 : i32
    return %arg0, %c0_i32 : i32, i32
  }
}

module attributes {stable_mosaic.version = 11 : i64} {
  func.func @_ln_linear_kernel(%arg0: i32, %arg1: memref<24x32xf32, #tpu.memory_space<vmem>>, %arg2: memref<1x32xf32, #tpu.memory_space<vmem>>, %arg3: memref<1x32xf32, #tpu.memory_space<vmem>>, %arg4: memref<32x96xf32, #tpu.memory_space<vmem>>, %arg5: memref<1x96xf32, #tpu.memory_space<vmem>>, %arg6: memref<24x96xf32, #tpu.memory_space<vmem>>) attributes {dimension_semantics = [#tpu.dimension_semantics<parallel>], iteration_bounds = array<i64: 2>, scalar_prefetch = 0 : i64, scratch_operands = 0 : i64, tpu.core_type = #tpu.core_type<tc>, window_params = [{transform_indices = @transform_0, window_bounds = array<i64: 24, 32>}, {pipeline_mode = #tpu.pipeline_mode<synchronous>, transform_indices = @transform_1, window_bounds = array<i64: 1, 32>}, {pipeline_mode = #tpu.pipeline_mode<synchronous>, transform_indices = @transform_2, window_bounds = array<i64: 1, 32>}, {pipeline_mode = #tpu.pipeline_mode<synchronous>, transform_indices = @transform_3, window_bounds = array<i64: 32, 96>}, {pipeline_mode = #tpu.pipeline_mode<synchronous>, transform_indices = @transform_4, window_bounds = array<i64: 1, 96>}, {transform_indices = @transform_5, window_bounds = array<i64: 24, 96>}]} {
    %c0 = arith.constant 0 : index
    %c0_0 = arith.constant 0 : index
    %0 = vector.load %arg1[%c0, %c0_0] : memref<24x32xf32, #tpu.memory_space<vmem>>, vector<24x32xf32>
    %c0_1 = arith.constant 0 : index
    %c0_2 = arith.constant 0 : index
    %1 = vector.load %arg2[%c0_1, %c0_2] : memref<1x32xf32, #tpu.memory_space<vmem>>, vector<1x32xf32>
    %c0_3 = arith.constant 0 : index
    %c0_4 = arith.constant 0 : index
    %2 = vector.load %arg3[%c0_3, %c0_4] : memref<1x32xf32, #tpu.memory_space<vmem>>, vector<1x32xf32>
    %cst = arith.constant dense<0.000000e+00> : vector<24xf32>
    %3 = vector.multi_reduction <add>, %0, %cst [1] : vector<24x32xf32> to vector<24xf32>
    %4 = vector.shape_cast %3 : vector<24xf32> to vector<24x1xf32>
    %cst_5 = arith.constant 3.200000e+01 : f32
    %5 = vector.broadcast %cst_5 : f32 to vector<24x1xf32>
    %6 = arith.divf %4, %5 : vector<24x1xf32>
    %7 = vector.broadcast %6 : vector<24x1xf32> to vector<24x32xf32>
    %8 = arith.subf %0, %7 : vector<24x32xf32>
    %9 = arith.mulf %8, %8 : vector<24x32xf32>
    %cst_6 = arith.constant dense<0.000000e+00> : vector<24xf32>
    %10 = vector.multi_reduction <add>, %9, %cst_6 [1] : vector<24x32xf32> to vector<24xf32>
    %11 = vector.shape_cast %10 : vector<24xf32> to vector<24x1xf32>
    %cst_7 = arith.constant 3.200000e+01 : f32
    %12 = vector.broadcast %cst_7 : f32 to vector<24x1xf32>
    %13 = arith.divf %11, %12 : vector<24x1xf32>
    %14 = vector.broadcast %6 : vector<24x1xf32> to vector<24x32xf32>
    %15 = arith.subf %0, %14 : vector<24x32xf32>
    %cst_8 = arith.constant 9.99999974E-6 : f32
    %16 = vector.broadcast %cst_8 : f32 to vector<24x1xf32>
    %17 = arith.addf %13, %16 : vector<24x1xf32>
    %18 = math.rsqrt %17 : vector<24x1xf32>
    %19 = vector.broadcast %18 : vector<24x1xf32> to vector<24x32xf32>
    %20 = arith.mulf %15, %19 : vector<24x32xf32>
    %21 = vector.broadcast %1 : vector<1x32xf32> to vector<24x32xf32>
    %22 = arith.mulf %20, %21 : vector<24x32xf32>
    %23 = vector.broadcast %2 : vector<1x32xf32> to vector<24x32xf32>
    %24 = arith.addf %22, %23 : vector<24x32xf32>
    %25 = arith.truncf %24 : vector<24x32xf32> to vector<24x32xbf16>
    %c0_9 = arith.constant 0 : index
    %c0_10 = arith.constant 0 : index
    %26 = vector.load %arg4[%c0_9, %c0_10] : memref<32x96xf32, #tpu.memory_space<vmem>>, vector<32x96xf32>
    %27 = arith.truncf %26 : vector<32x96xf32> to vector<32x96xbf16>
    %cst_11 = arith.constant dense<0.000000e+00> : vector<24x96xf32>
    %28 = tpu.matmul %25, %27, %cst_11 {dimension_numbers = #tpu.dot_dimension_numbers<[1], [0], [0], [1], [0, 0, 1, 1], [], []>} : vector<24x32xbf16>, vector<32x96xbf16>, vector<24x96xf32> -> vector<24x96xf32>
    %c0_12 = arith.constant 0 : index
    %c0_13 = arith.constant 0 : index
    %29 = vector.load %arg5[%c0_12, %c0_13] : memref<1x96xf32, #tpu.memory_space<vmem>>, vector<1x96xf32>
    %30 = vector.broadcast %29 : vector<1x96xf32> to vector<24x96xf32>
    %31 = arith.addf %28, %30 : vector<24x96xf32>
    %c0_14 = arith.constant 0 : index
    %c0_15 = arith.constant 0 : index
    %32 = vector.load %arg6[%c0_14, %c0_15] : memref<24x96xf32, #tpu.memory_space<vmem>>, vector<24x96xf32>
    tpu.vector_store %arg6[%c0_14, %c0_15], %31 {strides = array<i32>} : memref<24x96xf32, #tpu.memory_space<vmem>>, vector<24x96xf32>,
    return
  }
  func.func @transform_0(%arg0: i32) -> (i32, i32) {
    %c0_i32 = arith.constant 0 : i32
    %c0_i32_0 = arith.constant 0 : i32
    return %arg0, %c0_i32 : i32, i32
  }
  func.func @transform_1(%arg0: i32) -> (i32, i32) {
    %c0_i32 = arith.constant 0 : i32
    %c0_i32_0 = arith.constant 0 : i32
    %c0_i32_1 = arith.constant 0 : i32
    return %c0_i32, %c0_i32_0 : i32, i32
  }
  func.func @transform_2(%arg0: i32) -> (i32, i32) {
    %c0_i32 = arith.constant 0 : i32
    %c0_i32_0 = arith.constant 0 : i32
    %c0_i32_1 = arith.constant 0 : i32
    return %c0_i32, %c0_i32_0 : i32, i32
  }
  func.func @transform_3(%arg0: i32) -> (i32, i32) {
    %c0_i32 = arith.constant 0 : i32
    %c0_i32_0 = arith.constant 0 : i32
    %c0_i32_1 = arith.constant 0 : i32
    return %c0_i32, %c0_i32_0 : i32, i32
  }
  func.func @transform_4(%arg0: i32) -> (i32, i32) {
    %c0_i32 = arith.constant 0 : i32
    %c0_i32_0 = arith.constant 0 : i32
    %c0_i32_1 = arith.constant 0 : i32
    return %c0_i32, %c0_i32_0 : i32, i32
  }
  func.func @transform_5(%arg0: i32) -> (i32, i32) {
    %c0_i32 = arith.constant 0 : i32
    %c0_i32_0 = arith.constant 0 : i32
    return %arg0, %c0_i32 : i32, i32
  }
}

module attributes {stable_mosaic.version = 11 : i64} {
  func.func @_attn_block_kernel(%arg0: i32, %arg1: memref<1x24x96xf32, #tpu.memory_space<vmem>>, %arg2: memref<32x32xf32, #tpu.memory_space<vmem>>, %arg3: memref<1x32xf32, #tpu.memory_space<vmem>>, %arg4: memref<1x24x32xf32, #tpu.memory_space<vmem>>, %arg5: memref<1x24x32xf32, #tpu.memory_space<vmem>>) attributes {dimension_semantics = [#tpu.dimension_semantics<parallel>], iteration_bounds = array<i64: 2>, scalar_prefetch = 0 : i64, scratch_operands = 0 : i64, tpu.core_type = #tpu.core_type<tc>, window_params = [{transform_indices = @transform_0, window_bounds = array<i64: 1, 24, 96>}, {pipeline_mode = #tpu.pipeline_mode<synchronous>, transform_indices = @transform_1, window_bounds = array<i64: 32, 32>}, {pipeline_mode = #tpu.pipeline_mode<synchronous>, transform_indices = @transform_2, window_bounds = array<i64: 1, 32>}, {transform_indices = @transform_3, window_bounds = array<i64: 1, 24, 32>}, {transform_indices = @transform_4, window_bounds = array<i64: 1, 24, 32>}]} {
    %c0 = arith.constant 0 : index
    %c0_0 = arith.constant 0 : index
    %c0_1 = arith.constant 0 : index
    %0 = vector.load %arg1[%c0, %c0_0, %c0_1] : memref<1x24x96xf32, #tpu.memory_space<vmem>>, vector<1x24x96xf32>
    %1 = vector.shape_cast %0 : vector<1x24x96xf32> to vector<24x96xf32>
    %c0_2 = arith.constant 0 : index
    %c0_3 = arith.constant 0 : index
    %2 = vector.load %arg2[%c0_2, %c0_3] : memref<32x32xf32, #tpu.memory_space<vmem>>, vector<32x32xf32>
    %3 = arith.truncf %2 : vector<32x32xf32> to vector<32x32xbf16>
    %4 = tpu.iota {dimensions = array<i32: 1>} : vector<24x24xi32>
    %c17_i32 = arith.constant 17 : i32
    %5 = vector.broadcast %c17_i32 : i32 to vector<24x24xi32>
    %6 = arith.cmpi slt, %4, %5 : vector<24x24xi32>
    %cst = arith.constant 0.000000e+00 : f32
    %7 = vector.broadcast %cst : f32 to vector<24x32xf32>
    %8 = vector.extract_strided_slice %1 {offsets = [0, 0], sizes = [24, 8], strides = [1, 1]} : vector<24x96xf32> to vector<24x8xf32>
    %9 = vector.extract_strided_slice %1 {offsets = [0, 32], sizes = [24, 8], strides = [1, 1]} : vector<24x96xf32> to vector<24x8xf32>
    %10 = vector.extract_strided_slice %1 {offsets = [0, 64], sizes = [24, 8], strides = [1, 1]} : vector<24x96xf32> to vector<24x8xf32>
    %11 = arith.truncf %10 : vector<24x8xf32> to vector<24x8xbf16>
    %12 = tpu.transpose %9, [1, 0] : vector<24x8xf32> -> vector<8x24xf32>
    %cst_4 = arith.constant dense<0.000000e+00> : vector<24x24xf32>
    %13 = tpu.matmul %8, %12, %cst_4 {dimension_numbers = #tpu.dot_dimension_numbers<[1], [0], [0], [1], [0, 0, 1, 1], [], []>} : vector<24x8xf32>, vector<8x24xf32>, vector<24x24xf32> -> vector<24x24xf32>
    %cst_5 = arith.constant 0.353553385 : f32
    %14 = vector.broadcast %cst_5 : f32 to vector<24x24xf32>
    %15 = arith.mulf %13, %14 : vector<24x24xf32>
    %cst_6 = arith.constant -1.000000e+30 : f32
    %16 = vector.broadcast %cst_6 : f32 to vector<24x24xf32>
    %17 = arith.select %6, %15, %16 : vector<24x24xi1>, vector<24x24xf32>
    %cst_7 = arith.constant dense<0xFF800000> : vector<24xf32>
    %18 = vector.multi_reduction <maximumf>, %17, %cst_7 [1] : vector<24x24xf32> to vector<24xf32>
    %19 = vector.shape_cast %18 : vector<24xf32> to vector<24x1xf32>
    %20 = vector.broadcast %19 : vector<24x1xf32> to vector<24x24xf32>
    %21 = arith.subf %17, %20 : vector<24x24xf32>
    %22 = math.exp %21 : vector<24x24xf32>
    %cst_8 = arith.constant dense<0.000000e+00> : vector<24xf32>
    %23 = vector.multi_reduction <add>, %22, %cst_8 [1] : vector<24x24xf32> to vector<24xf32>
    %24 = vector.shape_cast %23 : vector<24xf32> to vector<24x1xf32>
    %25 = tpu.reciprocal %24 {approx = true} : vector<24x1xf32> -> vector<24x1xf32>
    %26 = vector.broadcast %25 : vector<24x1xf32> to vector<24x24xf32>
    %27 = arith.mulf %22, %26 : vector<24x24xf32>
    %28 = arith.truncf %27 : vector<24x24xf32> to vector<24x24xbf16>
    %cst_9 = arith.constant dense<0.000000e+00> : vector<24x8xf32>
    %29 = tpu.matmul %28, %11, %cst_9 {dimension_numbers = #tpu.dot_dimension_numbers<[1], [0], [0], [1], [0, 0, 1, 1], [], []>} : vector<24x24xbf16>, vector<24x8xbf16>, vector<24x8xf32> -> vector<24x8xf32>
    %30 = arith.truncf %29 : vector<24x8xf32> to vector<24x8xbf16>
    %31 = vector.extract_strided_slice %3 {offsets = [0, 0], sizes = [8, 32], strides = [1, 1]} : vector<32x32xbf16> to vector<8x32xbf16>
    %cst_10 = arith.constant dense<0.000000e+00> : vector<24x32xf32>
    %32 = tpu.matmul %30, %31, %cst_10 {dimension_numbers = #tpu.dot_dimension_numbers<[1], [0], [0], [1], [0, 0, 1, 1], [], []>} : vector<24x8xbf16>, vector<8x32xbf16>, vector<24x32xf32> -> vector<24x32xf32>
    %33 = arith.addf %7, %32 : vector<24x32xf32>
    %34 = vector.extract_strided_slice %1 {offsets = [0, 8], sizes = [24, 8], strides = [1, 1]} : vector<24x96xf32> to vector<24x8xf32>
    %35 = vector.extract_strided_slice %1 {offsets = [0, 40], sizes = [24, 8], strides = [1, 1]} : vector<24x96xf32> to vector<24x8xf32>
    %36 = vector.extract_strided_slice %1 {offsets = [0, 72], sizes = [24, 8], strides = [1, 1]} : vector<24x96xf32> to vector<24x8xf32>
    %37 = arith.truncf %36 : vector<24x8xf32> to vector<24x8xbf16>
    %38 = tpu.transpose %35, [1, 0] : vector<24x8xf32> -> vector<8x24xf32>
    %cst_11 = arith.constant dense<0.000000e+00> : vector<24x24xf32>
    %39 = tpu.matmul %34, %38, %cst_11 {dimension_numbers = #tpu.dot_dimension_numbers<[1], [0], [0], [1], [0, 0, 1, 1], [], []>} : vector<24x8xf32>, vector<8x24xf32>, vector<24x24xf32> -> vector<24x24xf32>
    %cst_12 = arith.constant 0.353553385 : f32
    %40 = vector.broadcast %cst_12 : f32 to vector<24x24xf32>
    %41 = arith.mulf %39, %40 : vector<24x24xf32>
    %cst_13 = arith.constant -1.000000e+30 : f32
    %42 = vector.broadcast %cst_13 : f32 to vector<24x24xf32>
    %43 = arith.select %6, %41, %42 : vector<24x24xi1>, vector<24x24xf32>
    %cst_14 = arith.constant dense<0xFF800000> : vector<24xf32>
    %44 = vector.multi_reduction <maximumf>, %43, %cst_14 [1] : vector<24x24xf32> to vector<24xf32>
    %45 = vector.shape_cast %44 : vector<24xf32> to vector<24x1xf32>
    %46 = vector.broadcast %45 : vector<24x1xf32> to vector<24x24xf32>
    %47 = arith.subf %43, %46 : vector<24x24xf32>
    %48 = math.exp %47 : vector<24x24xf32>
    %cst_15 = arith.constant dense<0.000000e+00> : vector<24xf32>
    %49 = vector.multi_reduction <add>, %48, %cst_15 [1] : vector<24x24xf32> to vector<24xf32>
    %50 = vector.shape_cast %49 : vector<24xf32> to vector<24x1xf32>
    %51 = tpu.reciprocal %50 {approx = true} : vector<24x1xf32> -> vector<24x1xf32>
    %52 = vector.broadcast %51 : vector<24x1xf32> to vector<24x24xf32>
    %53 = arith.mulf %48, %52 : vector<24x24xf32>
    %54 = arith.truncf %53 : vector<24x24xf32> to vector<24x24xbf16>
    %cst_16 = arith.constant dense<0.000000e+00> : vector<24x8xf32>
    %55 = tpu.matmul %54, %37, %cst_16 {dimension_numbers = #tpu.dot_dimension_numbers<[1], [0], [0], [1], [0, 0, 1, 1], [], []>} : vector<24x24xbf16>, vector<24x8xbf16>, vector<24x8xf32> -> vector<24x8xf32>
    %56 = arith.truncf %55 : vector<24x8xf32> to vector<24x8xbf16>
    %57 = vector.extract_strided_slice %3 {offsets = [8, 0], sizes = [8, 32], strides = [1, 1]} : vector<32x32xbf16> to vector<8x32xbf16>
    %cst_17 = arith.constant dense<0.000000e+00> : vector<24x32xf32>
    %58 = tpu.matmul %56, %57, %cst_17 {dimension_numbers = #tpu.dot_dimension_numbers<[1], [0], [0], [1], [0, 0, 1, 1], [], []>} : vector<24x8xbf16>, vector<8x32xbf16>, vector<24x32xf32> -> vector<24x32xf32>
    %59 = arith.addf %33, %58 : vector<24x32xf32>
    %60 = vector.extract_strided_slice %1 {offsets = [0, 16], sizes = [24, 8], strides = [1, 1]} : vector<24x96xf32> to vector<24x8xf32>
    %61 = vector.extract_strided_slice %1 {offsets = [0, 48], sizes = [24, 8], strides = [1, 1]} : vector<24x96xf32> to vector<24x8xf32>
    %62 = vector.extract_strided_slice %1 {offsets = [0, 80], sizes = [24, 8], strides = [1, 1]} : vector<24x96xf32> to vector<24x8xf32>
    %63 = arith.truncf %62 : vector<24x8xf32> to vector<24x8xbf16>
    %64 = tpu.transpose %61, [1, 0] : vector<24x8xf32> -> vector<8x24xf32>
    %cst_18 = arith.constant dense<0.000000e+00> : vector<24x24xf32>
    %65 = tpu.matmul %60, %64, %cst_18 {dimension_numbers = #tpu.dot_dimension_numbers<[1], [0], [0], [1], [0, 0, 1, 1], [], []>} : vector<24x8xf32>, vector<8x24xf32>, vector<24x24xf32> -> vector<24x24xf32>
    %cst_19 = arith.constant 0.353553385 : f32
    %66 = vector.broadcast %cst_19 : f32 to vector<24x24xf32>
    %67 = arith.mulf %65, %66 : vector<24x24xf32>
    %cst_20 = arith.constant -1.000000e+30 : f32
    %68 = vector.broadcast %cst_20 : f32 to vector<24x24xf32>
    %69 = arith.select %6, %67, %68 : vector<24x24xi1>, vector<24x24xf32>
    %cst_21 = arith.constant dense<0xFF800000> : vector<24xf32>
    %70 = vector.multi_reduction <maximumf>, %69, %cst_21 [1] : vector<24x24xf32> to vector<24xf32>
    %71 = vector.shape_cast %70 : vector<24xf32> to vector<24x1xf32>
    %72 = vector.broadcast %71 : vector<24x1xf32> to vector<24x24xf32>
    %73 = arith.subf %69, %72 : vector<24x24xf32>
    %74 = math.exp %73 : vector<24x24xf32>
    %cst_22 = arith.constant dense<0.000000e+00> : vector<24xf32>
    %75 = vector.multi_reduction <add>, %74, %cst_22 [1] : vector<24x24xf32> to vector<24xf32>
    %76 = vector.shape_cast %75 : vector<24xf32> to vector<24x1xf32>
    %77 = tpu.reciprocal %76 {approx = true} : vector<24x1xf32> -> vector<24x1xf32>
    %78 = vector.broadcast %77 : vector<24x1xf32> to vector<24x24xf32>
    %79 = arith.mulf %74, %78 : vector<24x24xf32>
    %80 = arith.truncf %79 : vector<24x24xf32> to vector<24x24xbf16>
    %cst_23 = arith.constant dense<0.000000e+00> : vector<24x8xf32>
    %81 = tpu.matmul %80, %63, %cst_23 {dimension_numbers = #tpu.dot_dimension_numbers<[1], [0], [0], [1], [0, 0, 1, 1], [], []>} : vector<24x24xbf16>, vector<24x8xbf16>, vector<24x8xf32> -> vector<24x8xf32>
    %82 = arith.truncf %81 : vector<24x8xf32> to vector<24x8xbf16>
    %83 = vector.extract_strided_slice %3 {offsets = [16, 0], sizes = [8, 32], strides = [1, 1]} : vector<32x32xbf16> to vector<8x32xbf16>
    %cst_24 = arith.constant dense<0.000000e+00> : vector<24x32xf32>
    %84 = tpu.matmul %82, %83, %cst_24 {dimension_numbers = #tpu.dot_dimension_numbers<[1], [0], [0], [1], [0, 0, 1, 1], [], []>} : vector<24x8xbf16>, vector<8x32xbf16>, vector<24x32xf32> -> vector<24x32xf32>
    %85 = arith.addf %59, %84 : vector<24x32xf32>
    %86 = vector.extract_strided_slice %1 {offsets = [0, 24], sizes = [24, 8], strides = [1, 1]} : vector<24x96xf32> to vector<24x8xf32>
    %87 = vector.extract_strided_slice %1 {offsets = [0, 56], sizes = [24, 8], strides = [1, 1]} : vector<24x96xf32> to vector<24x8xf32>
    %88 = vector.extract_strided_slice %1 {offsets = [0, 88], sizes = [24, 8], strides = [1, 1]} : vector<24x96xf32> to vector<24x8xf32>
    %89 = arith.truncf %88 : vector<24x8xf32> to vector<24x8xbf16>
    %90 = tpu.transpose %87, [1, 0] : vector<24x8xf32> -> vector<8x24xf32>
    %cst_25 = arith.constant dense<0.000000e+00> : vector<24x24xf32>
    %91 = tpu.matmul %86, %90, %cst_25 {dimension_numbers = #tpu.dot_dimension_numbers<[1], [0], [0], [1], [0, 0, 1, 1], [], []>} : vector<24x8xf32>, vector<8x24xf32>, vector<24x24xf32> -> vector<24x24xf32>
    %cst_26 = arith.constant 0.353553385 : f32
    %92 = vector.broadcast %cst_26 : f32 to vector<24x24xf32>
    %93 = arith.mulf %91, %92 : vector<24x24xf32>
    %cst_27 = arith.constant -1.000000e+30 : f32
    %94 = vector.broadcast %cst_27 : f32 to vector<24x24xf32>
    %95 = arith.select %6, %93, %94 : vector<24x24xi1>, vector<24x24xf32>
    %cst_28 = arith.constant dense<0xFF800000> : vector<24xf32>
    %96 = vector.multi_reduction <maximumf>, %95, %cst_28 [1] : vector<24x24xf32> to vector<24xf32>
    %97 = vector.shape_cast %96 : vector<24xf32> to vector<24x1xf32>
    %98 = vector.broadcast %97 : vector<24x1xf32> to vector<24x24xf32>
    %99 = arith.subf %95, %98 : vector<24x24xf32>
    %100 = math.exp %99 : vector<24x24xf32>
    %cst_29 = arith.constant dense<0.000000e+00> : vector<24xf32>
    %101 = vector.multi_reduction <add>, %100, %cst_29 [1] : vector<24x24xf32> to vector<24xf32>
    %102 = vector.shape_cast %101 : vector<24xf32> to vector<24x1xf32>
    %103 = tpu.reciprocal %102 {approx = true} : vector<24x1xf32> -> vector<24x1xf32>
    %104 = vector.broadcast %103 : vector<24x1xf32> to vector<24x24xf32>
    %105 = arith.mulf %100, %104 : vector<24x24xf32>
    %106 = arith.truncf %105 : vector<24x24xf32> to vector<24x24xbf16>
    %cst_30 = arith.constant dense<0.000000e+00> : vector<24x8xf32>
    %107 = tpu.matmul %106, %89, %cst_30 {dimension_numbers = #tpu.dot_dimension_numbers<[1], [0], [0], [1], [0, 0, 1, 1], [], []>} : vector<24x24xbf16>, vector<24x8xbf16>, vector<24x8xf32> -> vector<24x8xf32>
    %108 = arith.truncf %107 : vector<24x8xf32> to vector<24x8xbf16>
    %109 = vector.extract_strided_slice %3 {offsets = [24, 0], sizes = [8, 32], strides = [1, 1]} : vector<32x32xbf16> to vector<8x32xbf16>
    %cst_31 = arith.constant dense<0.000000e+00> : vector<24x32xf32>
    %110 = tpu.matmul %108, %109, %cst_31 {dimension_numbers = #tpu.dot_dimension_numbers<[1], [0], [0], [1], [0, 0, 1, 1], [], []>} : vector<24x8xbf16>, vector<8x32xbf16>, vector<24x32xf32> -> vector<24x32xf32>
    %111 = arith.addf %85, %110 : vector<24x32xf32>
    %c0_32 = arith.constant 0 : index
    %c0_33 = arith.constant 0 : index
    %c0_34 = arith.constant 0 : index
    %112 = vector.load %arg4[%c0_32, %c0_33, %c0_34] : memref<1x24x32xf32, #tpu.memory_space<vmem>>, vector<1x24x32xf32>
    %113 = vector.shape_cast %112 : vector<1x24x32xf32> to vector<24x32xf32>
    %114 = arith.addf %113, %111 : vector<24x32xf32>
    %c0_35 = arith.constant 0 : index
    %c0_36 = arith.constant 0 : index
    %115 = vector.load %arg3[%c0_35, %c0_36] : memref<1x32xf32, #tpu.memory_space<vmem>>, vector<1x32xf32>
    %116 = vector.broadcast %115 : vector<1x32xf32> to vector<24x32xf32>
    %117 = arith.addf %114, %116 : vector<24x32xf32>
    %c0_37 = arith.constant 0 : index
    %c0_38 = arith.constant 0 : index
    %c0_39 = arith.constant 0 : index
    %118 = vector.load %arg5[%c0_37, %c0_38, %c0_39] : memref<1x24x32xf32, #tpu.memory_space<vmem>>, vector<1x24x32xf32>
    %119 = vector.shape_cast %118 : vector<1x24x32xf32> to vector<24x32xf32>
    %120 = vector.shape_cast %117 : vector<24x32xf32> to vector<1x24x32xf32>
    tpu.vector_store %arg5[%c0_37, %c0_38, %c0_39], %120 {strides = array<i32>} : memref<1x24x32xf32, #tpu.memory_space<vmem>>, vector<1x24x32xf32>,
    return
  }
  func.func @transform_0(%arg0: i32) -> (i32, i32, i32) {
    %c0_i32 = arith.constant 0 : i32
    %c0_i32_0 = arith.constant 0 : i32
    %c0_i32_1 = arith.constant 0 : i32
    return %arg0, %c0_i32, %c0_i32_0 : i32, i32, i32
  }
  func.func @transform_1(%arg0: i32) -> (i32, i32) {
    %c0_i32 = arith.constant 0 : i32
    %c0_i32_0 = arith.constant 0 : i32
    %c0_i32_1 = arith.constant 0 : i32
    return %c0_i32, %c0_i32_0 : i32, i32
  }
  func.func @transform_2(%arg0: i32) -> (i32, i32) {
    %c0_i32 = arith.constant 0 : i32
    %c0_i32_0 = arith.constant 0 : i32
    %c0_i32_1 = arith.constant 0 : i32
    return %c0_i32, %c0_i32_0 : i32, i32
  }
  func.func @transform_3(%arg0: i32) -> (i32, i32, i32) {
    %c0_i32 = arith.constant 0 : i32
    %c0_i32_0 = arith.constant 0 : i32
    %c0_i32_1 = arith.constant 0 : i32
    return %arg0, %c0_i32, %c0_i32_0 : i32, i32, i32
  }
  func.func @transform_4(%arg0: i32) -> (i32, i32, i32) {
    %c0_i32 = arith.constant 0 : i32
    %c0_i32_0 = arith.constant 0 : i32
    %c0_i32_1 = arith.constant 0 : i32
    return %arg0, %c0_i32, %c0_i32_0 : i32, i32, i32
  }
}

module attributes {stable_mosaic.version = 11 : i64} {
  func.func @_ln_mlp_res_kernel(%arg0: i32, %arg1: memref<24x32xf32, #tpu.memory_space<vmem>>, %arg2: memref<1x32xf32, #tpu.memory_space<vmem>>, %arg3: memref<1x32xf32, #tpu.memory_space<vmem>>, %arg4: memref<32x128xf32, #tpu.memory_space<vmem>>, %arg5: memref<1x128xf32, #tpu.memory_space<vmem>>, %arg6: memref<128x32xf32, #tpu.memory_space<vmem>>, %arg7: memref<1x32xf32, #tpu.memory_space<vmem>>, %arg8: memref<24x32xf32, #tpu.memory_space<vmem>>) attributes {dimension_semantics = [#tpu.dimension_semantics<parallel>], iteration_bounds = array<i64: 2>, scalar_prefetch = 0 : i64, scratch_operands = 0 : i64, tpu.core_type = #tpu.core_type<tc>, window_params = [{transform_indices = @transform_0, window_bounds = array<i64: 24, 32>}, {pipeline_mode = #tpu.pipeline_mode<synchronous>, transform_indices = @transform_1, window_bounds = array<i64: 1, 32>}, {pipeline_mode = #tpu.pipeline_mode<synchronous>, transform_indices = @transform_2, window_bounds = array<i64: 1, 32>}, {pipeline_mode = #tpu.pipeline_mode<synchronous>, transform_indices = @transform_3, window_bounds = array<i64: 32, 128>}, {pipeline_mode = #tpu.pipeline_mode<synchronous>, transform_indices = @transform_4, window_bounds = array<i64: 1, 128>}, {pipeline_mode = #tpu.pipeline_mode<synchronous>, transform_indices = @transform_5, window_bounds = array<i64: 128, 32>}, {pipeline_mode = #tpu.pipeline_mode<synchronous>, transform_indices = @transform_6, window_bounds = array<i64: 1, 32>}, {transform_indices = @transform_7, window_bounds = array<i64: 24, 32>}]} {
    %c0 = arith.constant 0 : index
    %c0_0 = arith.constant 0 : index
    %0 = vector.load %arg1[%c0, %c0_0] : memref<24x32xf32, #tpu.memory_space<vmem>>, vector<24x32xf32>
    %c0_1 = arith.constant 0 : index
    %c0_2 = arith.constant 0 : index
    %1 = vector.load %arg2[%c0_1, %c0_2] : memref<1x32xf32, #tpu.memory_space<vmem>>, vector<1x32xf32>
    %c0_3 = arith.constant 0 : index
    %c0_4 = arith.constant 0 : index
    %2 = vector.load %arg3[%c0_3, %c0_4] : memref<1x32xf32, #tpu.memory_space<vmem>>, vector<1x32xf32>
    %cst = arith.constant dense<0.000000e+00> : vector<24xf32>
    %3 = vector.multi_reduction <add>, %0, %cst [1] : vector<24x32xf32> to vector<24xf32>
    %4 = vector.shape_cast %3 : vector<24xf32> to vector<24x1xf32>
    %cst_5 = arith.constant 3.200000e+01 : f32
    %5 = vector.broadcast %cst_5 : f32 to vector<24x1xf32>
    %6 = arith.divf %4, %5 : vector<24x1xf32>
    %7 = vector.broadcast %6 : vector<24x1xf32> to vector<24x32xf32>
    %8 = arith.subf %0, %7 : vector<24x32xf32>
    %9 = arith.mulf %8, %8 : vector<24x32xf32>
    %cst_6 = arith.constant dense<0.000000e+00> : vector<24xf32>
    %10 = vector.multi_reduction <add>, %9, %cst_6 [1] : vector<24x32xf32> to vector<24xf32>
    %11 = vector.shape_cast %10 : vector<24xf32> to vector<24x1xf32>
    %cst_7 = arith.constant 3.200000e+01 : f32
    %12 = vector.broadcast %cst_7 : f32 to vector<24x1xf32>
    %13 = arith.divf %11, %12 : vector<24x1xf32>
    %14 = vector.broadcast %6 : vector<24x1xf32> to vector<24x32xf32>
    %15 = arith.subf %0, %14 : vector<24x32xf32>
    %cst_8 = arith.constant 9.99999974E-6 : f32
    %16 = vector.broadcast %cst_8 : f32 to vector<24x1xf32>
    %17 = arith.addf %13, %16 : vector<24x1xf32>
    %18 = math.rsqrt %17 : vector<24x1xf32>
    %19 = vector.broadcast %18 : vector<24x1xf32> to vector<24x32xf32>
    %20 = arith.mulf %15, %19 : vector<24x32xf32>
    %21 = vector.broadcast %1 : vector<1x32xf32> to vector<24x32xf32>
    %22 = arith.mulf %20, %21 : vector<24x32xf32>
    %23 = vector.broadcast %2 : vector<1x32xf32> to vector<24x32xf32>
    %24 = arith.addf %22, %23 : vector<24x32xf32>
    %25 = arith.truncf %24 : vector<24x32xf32> to vector<24x32xbf16>
    %c0_9 = arith.constant 0 : index
    %c0_10 = arith.constant 0 : index
    %26 = vector.load %arg4[%c0_9, %c0_10] : memref<32x128xf32, #tpu.memory_space<vmem>>, vector<32x128xf32>
    %27 = arith.truncf %26 : vector<32x128xf32> to vector<32x128xbf16>
    %cst_11 = arith.constant dense<0.000000e+00> : vector<24x128xf32>
    %28 = tpu.matmul %25, %27, %cst_11 {dimension_numbers = #tpu.dot_dimension_numbers<[1], [0], [0], [1], [0, 0, 1, 1], [], []>} : vector<24x32xbf16>, vector<32x128xbf16>, vector<24x128xf32> -> vector<24x128xf32>
    %c0_12 = arith.constant 0 : index
    %c0_13 = arith.constant 0 : index
    %29 = vector.load %arg5[%c0_12, %c0_13] : memref<1x128xf32, #tpu.memory_space<vmem>>, vector<1x128xf32>
    %30 = vector.broadcast %29 : vector<1x128xf32> to vector<24x128xf32>
    %31 = arith.addf %28, %30 : vector<24x128xf32>
    %cst_14 = arith.constant 5.000000e-01 : f32
    %32 = vector.broadcast %cst_14 : f32 to vector<24x128xf32>
    %33 = arith.mulf %32, %31 : vector<24x128xf32>
    %cst_15 = arith.constant 0.707106769 : f32
    %34 = vector.broadcast %cst_15 : f32 to vector<24x128xf32>
    %35 = arith.mulf %31, %34 : vector<24x128xf32>
    %36 = math.erf %35 : vector<24x128xf32>
    %cst_16 = arith.constant 1.000000e+00 : f32
    %37 = vector.broadcast %cst_16 : f32 to vector<24x128xf32>
    %38 = arith.addf %37, %36 : vector<24x128xf32>
    %39 = arith.mulf %33, %38 : vector<24x128xf32>
    %40 = arith.truncf %39 : vector<24x128xf32> to vector<24x128xbf16>
    %c0_17 = arith.constant 0 : index
    %c0_18 = arith.constant 0 : index
    %41 = vector.load %arg6[%c0_17, %c0_18] : memref<128x32xf32, #tpu.memory_space<vmem>>, vector<128x32xf32>
    %42 = arith.truncf %41 : vector<128x32xf32> to vector<128x32xbf16>
    %cst_19 = arith.constant dense<0.000000e+00> : vector<24x32xf32>
    %43 = tpu.matmul %40, %42, %cst_19 {dimension_numbers = #tpu.dot_dimension_numbers<[1], [0], [0], [1], [0, 0, 1, 1], [], []>} : vector<24x128xbf16>, vector<128x32xbf16>, vector<24x32xf32> -> vector<24x32xf32>
    %c0_20 = arith.constant 0 : index
    %c0_21 = arith.constant 0 : index
    %44 = vector.load %arg7[%c0_20, %c0_21] : memref<1x32xf32, #tpu.memory_space<vmem>>, vector<1x32xf32>
    %45 = vector.broadcast %44 : vector<1x32xf32> to vector<24x32xf32>
    %46 = arith.addf %43, %45 : vector<24x32xf32>
    %47 = arith.addf %0, %46 : vector<24x32xf32>
    %c0_22 = arith.constant 0 : index
    %c0_23 = arith.constant 0 : index
    %48 = vector.load %arg8[%c0_22, %c0_23] : memref<24x32xf32, #tpu.memory_space<vmem>>, vector<24x32xf32>
    tpu.vector_store %arg8[%c0_22, %c0_23], %47 {strides = array<i32>} : memref<24x32xf32, #tpu.memory_space<vmem>>, vector<24x32xf32>,
    return
  }
  func.func @transform_0(%arg0: i32) -> (i32, i32) {
    %c0_i32 = arith.constant 0 : i32
    %c0_i32_0 = arith.constant 0 : i32
    return %arg0, %c0_i32 : i32, i32
  }
  func.func @transform_1(%arg0: i32) -> (i32, i32) {
    %c0_i32 = arith.constant 0 : i32
    %c0_i32_0 = arith.constant 0 : i32
    %c0_i32_1 = arith.constant 0 : i32
    return %c0_i32, %c0_i32_0 : i32, i32
  }
  func.func @transform_2(%arg0: i32) -> (i32, i32) {
    %c0_i32 = arith.constant 0 : i32
    %c0_i32_0 = arith.constant 0 : i32
    %c0_i32_1 = arith.constant 0 : i32
    return %c0_i32, %c0_i32_0 : i32, i32
  }
  func.func @transform_3(%arg0: i32) -> (i32, i32) {
    %c0_i32 = arith.constant 0 : i32
    %c0_i32_0 = arith.constant 0 : i32
    %c0_i32_1 = arith.constant 0 : i32
    return %c0_i32, %c0_i32_0 : i32, i32
  }
  func.func @transform_4(%arg0: i32) -> (i32, i32) {
    %c0_i32 = arith.constant 0 : i32
    %c0_i32_0 = arith.constant 0 : i32
    %c0_i32_1 = arith.constant 0 : i32
    return %c0_i32, %c0_i32_0 : i32, i32
  }
  func.func @transform_5(%arg0: i32) -> (i32, i32) {
    %c0_i32 = arith.constant 0 : i32
    %c0_i32_0 = arith.constant 0 : i32
    %c0_i32_1 = arith.constant 0 : i32
    return %c0_i32, %c0_i32_0 : i32, i32
  }
  func.func @transform_6(%arg0: i32) -> (i32, i32) {
    %c0_i32 = arith.constant 0 : i32
    %c0_i32_0 = arith.constant 0 : i32
    %c0_i32_1 = arith.constant 0 : i32
    return %c0_i32, %c0_i32_0 : i32, i32
  }
  func.func @transform_7(%arg0: i32) -> (i32, i32) {
    %c0_i32 = arith.constant 0 : i32
    %c0_i32_0 = arith.constant 0 : i32
    return %arg0, %c0_i32 : i32, i32
  }
}

module attributes {stable_mosaic.version = 11 : i64} {
  func.func @_ln_linear_kernel(%arg0: i32, %arg1: memref<2x32xf32, #tpu.memory_space<vmem>>, %arg2: memref<1x32xf32, #tpu.memory_space<vmem>>, %arg3: memref<1x32xf32, #tpu.memory_space<vmem>>, %arg4: memref<32x10xf32, #tpu.memory_space<vmem>>, %arg5: memref<1x10xf32, #tpu.memory_space<vmem>>, %arg6: memref<2x10xf32, #tpu.memory_space<vmem>>) attributes {dimension_semantics = [#tpu.dimension_semantics<parallel>], iteration_bounds = array<i64: 1>, scalar_prefetch = 0 : i64, scratch_operands = 0 : i64, tpu.core_type = #tpu.core_type<tc>, window_params = [{transform_indices = @transform_0, window_bounds = array<i64: 2, 32>}, {pipeline_mode = #tpu.pipeline_mode<synchronous>, transform_indices = @transform_1, window_bounds = array<i64: 1, 32>}, {pipeline_mode = #tpu.pipeline_mode<synchronous>, transform_indices = @transform_2, window_bounds = array<i64: 1, 32>}, {pipeline_mode = #tpu.pipeline_mode<synchronous>, transform_indices = @transform_3, window_bounds = array<i64: 32, 10>}, {pipeline_mode = #tpu.pipeline_mode<synchronous>, transform_indices = @transform_4, window_bounds = array<i64: 1, 10>}, {transform_indices = @transform_5, window_bounds = array<i64: 2, 10>}]} {
    %c0 = arith.constant 0 : index
    %c0_0 = arith.constant 0 : index
    %0 = vector.load %arg1[%c0, %c0_0] : memref<2x32xf32, #tpu.memory_space<vmem>>, vector<2x32xf32>
    %c0_1 = arith.constant 0 : index
    %c0_2 = arith.constant 0 : index
    %1 = vector.load %arg2[%c0_1, %c0_2] : memref<1x32xf32, #tpu.memory_space<vmem>>, vector<1x32xf32>
    %c0_3 = arith.constant 0 : index
    %c0_4 = arith.constant 0 : index
    %2 = vector.load %arg3[%c0_3, %c0_4] : memref<1x32xf32, #tpu.memory_space<vmem>>, vector<1x32xf32>
    %cst = arith.constant dense<0.000000e+00> : vector<2xf32>
    %3 = vector.multi_reduction <add>, %0, %cst [1] : vector<2x32xf32> to vector<2xf32>
    %4 = vector.shape_cast %3 : vector<2xf32> to vector<2x1xf32>
    %cst_5 = arith.constant 3.200000e+01 : f32
    %5 = vector.broadcast %cst_5 : f32 to vector<2x1xf32>
    %6 = arith.divf %4, %5 : vector<2x1xf32>
    %7 = vector.broadcast %6 : vector<2x1xf32> to vector<2x32xf32>
    %8 = arith.subf %0, %7 : vector<2x32xf32>
    %9 = arith.mulf %8, %8 : vector<2x32xf32>
    %cst_6 = arith.constant dense<0.000000e+00> : vector<2xf32>
    %10 = vector.multi_reduction <add>, %9, %cst_6 [1] : vector<2x32xf32> to vector<2xf32>
    %11 = vector.shape_cast %10 : vector<2xf32> to vector<2x1xf32>
    %cst_7 = arith.constant 3.200000e+01 : f32
    %12 = vector.broadcast %cst_7 : f32 to vector<2x1xf32>
    %13 = arith.divf %11, %12 : vector<2x1xf32>
    %14 = vector.broadcast %6 : vector<2x1xf32> to vector<2x32xf32>
    %15 = arith.subf %0, %14 : vector<2x32xf32>
    %cst_8 = arith.constant 9.99999974E-6 : f32
    %16 = vector.broadcast %cst_8 : f32 to vector<2x1xf32>
    %17 = arith.addf %13, %16 : vector<2x1xf32>
    %18 = math.rsqrt %17 : vector<2x1xf32>
    %19 = vector.broadcast %18 : vector<2x1xf32> to vector<2x32xf32>
    %20 = arith.mulf %15, %19 : vector<2x32xf32>
    %21 = vector.broadcast %1 : vector<1x32xf32> to vector<2x32xf32>
    %22 = arith.mulf %20, %21 : vector<2x32xf32>
    %23 = vector.broadcast %2 : vector<1x32xf32> to vector<2x32xf32>
    %24 = arith.addf %22, %23 : vector<2x32xf32>
    %25 = arith.truncf %24 : vector<2x32xf32> to vector<2x32xbf16>
    %c0_9 = arith.constant 0 : index
    %c0_10 = arith.constant 0 : index
    %26 = vector.load %arg4[%c0_9, %c0_10] : memref<32x10xf32, #tpu.memory_space<vmem>>, vector<32x10xf32>
    %27 = arith.truncf %26 : vector<32x10xf32> to vector<32x10xbf16>
    %cst_11 = arith.constant dense<0.000000e+00> : vector<2x10xf32>
    %28 = tpu.matmul %25, %27, %cst_11 {dimension_numbers = #tpu.dot_dimension_numbers<[1], [0], [0], [1], [0, 0, 1, 1], [], []>} : vector<2x32xbf16>, vector<32x10xbf16>, vector<2x10xf32> -> vector<2x10xf32>
    %c0_12 = arith.constant 0 : index
    %c0_13 = arith.constant 0 : index
    %29 = vector.load %arg5[%c0_12, %c0_13] : memref<1x10xf32, #tpu.memory_space<vmem>>, vector<1x10xf32>
    %30 = vector.broadcast %29 : vector<1x10xf32> to vector<2x10xf32>
    %31 = arith.addf %28, %30 : vector<2x10xf32>
    %c0_14 = arith.constant 0 : index
    %c0_15 = arith.constant 0 : index
    %32 = vector.load %arg6[%c0_14, %c0_15] : memref<2x10xf32, #tpu.memory_space<vmem>>, vector<2x10xf32>
    tpu.vector_store %arg6[%c0_14, %c0_15], %31 {strides = array<i32>} : memref<2x10xf32, #tpu.memory_space<vmem>>, vector<2x10xf32>,
    return
  }
  func.func @transform_0(%arg0: i32) -> (i32, i32) {
    %c0_i32 = arith.constant 0 : i32
    %c0_i32_0 = arith.constant 0 : i32
    return %arg0, %c0_i32 : i32, i32
  }
  func.func @transform_1(%arg0: i32) -> (i32, i32) {
    %c0_i32 = arith.constant 0 : i32
    %c0_i32_0 = arith.constant 0 : i32
    %c0_i32_1 = arith.constant 0 : i32
    return %c0_i32, %c0_i32_0 : i32, i32
  }
  func.func @transform_2(%arg0: i32) -> (i32, i32) {
    %c0_i32 = arith.constant 0 : i32
    %c0_i32_0 = arith.constant 0 : i32
    %c0_i32_1 = arith.constant 0 : i32
    return %c0_i32, %c0_i32_0 : i32, i32
  }
  func.func @transform_3(%arg0: i32) -> (i32, i32) {
    %c0_i32 = arith.constant 0 : i32
    %c0_i32_0 = arith.constant 0 : i32
    %c0_i32_1 = arith.constant 0 : i32
    return %c0_i32, %c0_i32_0 : i32, i32
  }
  func.func @transform_4(%arg0: i32) -> (i32, i32) {
    %c0_i32 = arith.constant 0 : i32
    %c0_i32_0 = arith.constant 0 : i32
    %c0_i32_1 = arith.constant 0 : i32
    return %c0_i32, %c0_i32_0 : i32, i32
  }
  func.func @transform_5(%arg0: i32) -> (i32, i32) {
    %c0_i32 = arith.constant 0 : i32
    %c0_i32_0 = arith.constant 0 : i32
    return %arg0, %c0_i32 : i32, i32
  }
}

</mosaic_0001>

<llo_original>
// kernel: vit_forward.8
$region0: #{vit_forward.8}
  #allocation0 [shape = 'u32[]', space=smem, size = 0x4, offset = 0x4, fixed_abs, tag = 'smem constant byte address 0x4 - core index']
  #allocation1 [shape = 'u32[144,128]{1,0:T(1,128)}', space=vmem, size = 0x12000, scoped, tag = 'internal scratch']
  %s0 = inlined_call_operand.vmem [shape: f32[32,64], index: 0, kind: input, shape index: {}]
  %s1 = inlined_call_operand.vmem [shape: f32[64,32], index: 1, kind: input, shape index: {}]
  %s2 = inlined_call_operand.vmem [shape: f32[1,32], index: 2, kind: input, shape index: {}]
  %s3 = inlined_call_operand.vmem [shape: f32[32,32], index: 3, kind: output, shape index: {}]
  %s4 = sld [smem:[#allocation0]]
  $region45: #{vit_forward.8} parent=0
    _
  %s6 = ssub.s32 1, %s4
  %s7 = scalar_select 0, %s6, %s4
  loop: start=0, step=1, limit=4
  $region2: #{vit_forward.8} parent=0 // loop_pre_header
    _
  $region3: #{vit_forward.8} parent=0 // loop_header
    %s9 = sphi 0, %s13
    %p10 = scmp.ge.s32.totalorder %s9, 4
    %s19 = sphi 0, %s21
    %s22 = sphi 0, %s19
    %s23 = sphi 0, %s22
    %s39 = sphi 0, %s23
    %s43 = sphi 0, %s43
    %s45 = sphi 0, %s43
    %s46 = sphi 0, %s45
    %s60 = sphi 0, %s46
    %s64 = sphi 0, %s64
    %s66 = sphi 0, %s64
    %s67 = sphi 0, %s66
    %s81 = sphi 0, %s67
    %s87 = sphi 0, %s89
    %s90 = sphi 0, %s87
    %s91 = sphi 0, %s90
    %s107 = sphi 0, %s91
  $region4: #{vit_forward.8} parent=0 // loop_header_branch
    %12 = sbr.rel (%p10) target = $region8
  $region5: #{vit_forward.8} parent=0 // loop_body
    %s14 = ssub.s32 %s9, 1
    %s15 = ssub.s32 %s9, 2
    %s16 = sadd.s32 %s9, 1
    %s17 = ssub.s32 %s9, %s16
    %p18 = scmp.eq.s32.totalorder %s17, 0
    %s20 = sadd.s32 %s19, 1
    %s21 = scalar_select %p18, %s19, %s20
    %p24 = pneg %p18
    %p25 = scmp.eq.s32.totalorder %s9, 1
    %p26 = por %p24, %p25
    %p27 = scmp.ne.s32.totalorder %s19, %s22
    %p28 = scmp.eq.s32.totalorder %s9, 0
    %p29 = por %p27, %p28
    %p30 = scmp.ne.s32.totalorder %s19, %s22
    %p31 = scmp.eq.s32.totalorder %s14, 1
    %p32 = por %p30, %p31
    %p33 = scmp.ne.s32.totalorder %s22, %s23
    %p34 = scmp.eq.s32.totalorder %s14, 0
    %p35 = por %p33, %p34
    %p36 = scmp.ne.s32.totalorder %s22, %s23
    %p37 = scmp.eq.s32.totalorder %s15, 1
    %p38 = por %p36, %p37
    %p40 = scmp.ne.s32.totalorder %s23, %s39
    %p41 = scmp.eq.s32.totalorder %s15, 0
    %p42 = por %p40, %p41
    %s44 = sadd.s32 %s43, 1
    %p47 = scmp.eq.s32.totalorder %s9, 1
    %p48 = scmp.ne.s32.totalorder %s43, %s45
    %p49 = scmp.eq.s32.totalorder %s9, 0
    %p50 = por %p48, %p49
    %p51 = scmp.ne.s32.totalorder %s43, %s45
    %p52 = scmp.eq.s32.totalorder %s14, 1
    %p53 = por %p51, %p52
    %p54 = scmp.ne.s32.totalorder %s45, %s46
    %p55 = scmp.eq.s32.totalorder %s14, 0
    %p56 = por %p54, %p55
    %p57 = scmp.ne.s32.totalorder %s45, %s46
    %p58 = scmp.eq.s32.totalorder %s15, 1
    %p59 = por %p57, %p58
    %p61 = scmp.ne.s32.totalorder %s46, %s60
    %p62 = scmp.eq.s32.totalorder %s15, 0
    %p63 = por %p61, %p62
    %s65 = sadd.s32 %s64, 1
    %p68 = scmp.eq.s32.totalorder %s9, 1
    %p69 = scmp.ne.s32.totalorder %s64, %s66
    %p70 = scmp.eq.s32.totalorder %s9, 0
    %p71 = por %p69, %p70
    %p72 = scmp.ne.s32.totalorder %s64, %s66
    %p73 = scmp.eq.s32.totalorder %s14, 1
    %p74 = por %p72, %p73
    %p75 = scmp.ne.s32.totalorder %s66, %s67
    %p76 = scmp.eq.s32.totalorder %s14, 0
    %p77 = por %p75, %p76
    %p78 = scmp.ne.s32.totalorder %s66, %s67
    %p79 = scmp.eq.s32.totalorder %s15, 1
    %p80 = por %p78, %p79
    %p82 = scmp.ne.s32.totalorder %s67, %s81
    %p83 = scmp.eq.s32.totalorder %s15, 0
    %p84 = por %p82, %p83
    %s85 = ssub.s32 %s9, %s16
    %p86 = scmp.eq.s32.totalorder %s85, 0
    %s88 = sadd.s32 %s87, 1
    %s89 = scalar_select %p86, %s87, %s88
    %p92 = pneg %p86
    %p93 = scmp.eq.s32.totalorder %s9, 1
    %p94 = por %p92, %p93
    %p95 = scmp.ne.s32.totalorder %s87, %s90
    %p96 = scmp.eq.s32.totalorder %s9, 0
    %p97 = por %p95, %p96
    %p98 = scmp.ne.s32.totalorder %s87, %s90
    %p99 = scmp.eq.s32.totalorder %s14, 1
    %p100 = por %p98, %p99
    %p101 = scmp.ne.s32.totalorder %s90, %s91
    %p102 = scmp.eq.s32.totalorder %s14, 0
    %p103 = por %p101, %p102
    %p104 = scmp.ne.s32.totalorder %s90, %s91
    %p105 = scmp.eq.s32.totalorder %s15, 1
    %p106 = por %p104, %p105
    %p108 = scmp.ne.s32.totalorder %s91, %s107
    %p109 = scmp.eq.s32.totalorder %s15, 0
    %p110 = por %p108, %p109
    %p111 = scmp.le.s32.totalorder 1, %s9
    %p112 = scmp.lt.s32.totalorder %s9, 3
    %p113 = pnand %p111, %p112
    %p114 = pneg %p113
    // Predicated region
    $region9: #{vit_forward.8} parent=5 // pred_check
      _
    $region10: #{vit_forward.8} parent=5 // pred_check_branch
      %116 = sbr.rel (%p113) target = $region12
    $region11: #{vit_forward.8} parent=5 // pred_region
      %s117 = ssub.s32 %s9, 1
      // Predicated region
      $region13: #{vit_forward.8} parent=11 // pred_check
        %p118 = pneg %p56
      $region14: #{vit_forward.8} parent=11 // pred_check_branch
        %120 = sbr.rel (%p118) target = $region16
      $region15: #{vit_forward.8} parent=11 // pred_region
        _
      $region16: #{vit_forward.8} parent=11 // pred_fallthru
        _
      // Predicated region
      $region17: #{vit_forward.8} parent=11 // pred_check
        %p121 = pneg %p77
      $region18: #{vit_forward.8} parent=11 // pred_check_branch
        %123 = sbr.rel (%p121) target = $region20
      $region19: #{vit_forward.8} parent=11 // pred_region
        _
      $region20: #{vit_forward.8} parent=11 // pred_fallthru
        _
    $region12: #{vit_forward.8} parent=5 // pred_fallthru
      _
    %p124 = scmp.lt.s32.totalorder %s9, 2
    // Predicated region
    $region21: #{vit_forward.8} parent=5 // pred_check
      %p125 = pneg %p124
    $region22: #{vit_forward.8} parent=5 // pred_check_branch
      %127 = sbr.rel (%p125) target = $region24
    $region23: #{vit_forward.8} parent=5 // pred_region
      // Predicated region
      $region25: #{vit_forward.8} parent=23 // pred_check
        %p128 = pneg %p29
      $region26: #{vit_forward.8} parent=23 // pred_check_branch
        %130 = sbr.rel (%p128) target = $region28
      $region27: #{vit_forward.8} parent=23 // pred_region
        %s131 = smul.u32 2, %s9
        %p132 = scmp.lt.s32.totalorder %s131, 3
        %s133 = scalar_select %p132, %s131, 3
        %s134 = smul.addr %s133, 8
        %s135 = scalar_lea.vmem %s0, %s134
        %s136 = smul.u32 2, %s9
      $region28: #{vit_forward.8} parent=23 // pred_fallthru
        _
    $region24: #{vit_forward.8} parent=5 // pred_fallthru
      _
    %p137 = scmp.le.s32.totalorder 1, %s9
    %p138 = scmp.lt.s32.totalorder %s9, 3
    %p139 = pnand %p137, %p138
    %p140 = pneg %p139
    // Predicated region
    $region29: #{vit_forward.8} parent=5 // pred_check
      _
    $region30: #{vit_forward.8} parent=5 // pred_check_branch
      %142 = sbr.rel (%p139) target = $region32
    $region31: #{vit_forward.8} parent=5 // pred_region
      %s143 = ssub.s32 %s9, 1
      %s144 = smul.u32 2, %s14
      %p145 = scmp.lt.s32.totalorder %s144, 3
      %s146 = scalar_select %p145, %s144, 3
      %s147 = smul.addr %s146, 8
      %s148 = scalar_lea.vmem %s0, %s147
      %p149 = pneg %p35
      %p150 = pneg %p32
      %p151 = pneg %p56
      %p152 = pneg %p53
      %p153 = pneg %p77
      %p154 = pneg %p74
      %p155 = pneg %p103
      %p156 = pneg %p100
      %s157 = smul.u32 2, %s14
      %p158 = scmp.lt.s32.totalorder %s157, 3
      %s159 = scalar_select %p158, %s157, 3
      %s160 = smul.addr %s159, 8
      %s161 = scalar_lea.vmem %s3, %s160
      %s162 = smul.u32 2, %s14
      %p163 = scmp.lt.s32.totalorder %s162, 3
      %s164 = scalar_select %p163, %s162, 3
      %s165 = smul.addr %s164, 8
      %s166 = scalar_lea.vmem %s0, %s165
      %s167 = smul.u32 2, %s14
      %s168 = smul.u32 2, %s14
      %p169 = scmp.lt.s32.totalorder %s168, 3
      %s170 = scalar_select %p169, %s168, 3
      %s171 = smul.addr %s170, 8
      %s172 = scalar_lea.vmem %s3, %s171
      %s173 = smul.u32 2, %s14
      %v175 = vld [vmem:[%s166] sm:$0xff]
      %v176 = vld [vmem:[%s166 + $0x8] sm:$0xff]
      %v177 = vpack.c.bf16 %v176, %v175
      %v178 = vld [vmem:[%s1] sm:$0xff]
      %v179 = vld [vmem:[%s1 + $0x8] sm:$0xff]
      %v180 = vld [vmem:[%s1 + $0x10] sm:$0xff]
      %v181 = vld [vmem:[%s1 + $0x18] sm:$0xff]
      %v182 = vld [vmem:[%s1 + $0x20] sm:$0xff]
      %v183 = vld [vmem:[%s1 + $0x28] sm:$0xff]
      %v184 = vld [vmem:[%s1 + $0x30] sm:$0xff]
      %v185 = vld [vmem:[%s1 + $0x38] sm:$0xff]
      %v186 = vpack.c.bf16 %v179, %v178
      %v187 = vpack.c.bf16 %v181, %v180
      %v188 = vpack.c.bf16 %v183, %v182
      %v189 = vpack.c.bf16 %v185, %v184
      %v190 = vld [vmem:[%s2] sm:$0x1]
      %v192 = vlaneseq
      %v193 = vshrl.u32 %v192, 7
      %v194 = vsub.s32 0, %v193
      %v195 = vrot.slane %v190, %v194
      %vm197 = vcmask 523264
      %v199 = vsel %vm197, %v177, 0
      %201 = vmatprep.subr.bf16.mxu0 0
      %202 = vmatpush1.bf16.msra.mxu0 %v186
      %203 = vmatprep.subr.bf16.mxu0 0
      %204 = vmatpush1.bf16.msra.mxu0 %v187
      %205 = vmatprep.subr.bf16.mxu0 0
      %206 = vmatpush1.bf16.msra.mxu0 %v188
      %207 = vmatprep.subr.bf16.mxu0 0
      %208 = vmatpush1.bf16.msra.mxu0 %v189
      %209 = vmatprep.subr.bf16.mxu0 0
      %210 = vmatpush1.bf16.msra.mxu0 0
      %211 = vmatprep.subr.bf16.mxu0 0
      %212 = vmatpush1.bf16.msra.mxu0 0
      %213 = vmatprep.subr.bf16.mxu0 0
      %214 = vmatpush1.bf16.msra.mxu0 0
      %215 = vmatprep.subr.bf16.mxu0 0
      %216 = vmatpush1.bf16.msra.mxu0 0
      %217 = vmatprep.subr.bf16.mxu0 0
      %218 = vmatpush1.bf16.msra.mxu0 0
      %219 = vmatprep.subr.bf16.mxu0 0
      %220 = vmatpush1.bf16.msra.mxu0 0
      %221 = vmatprep.subr.bf16.mxu0 0
      %222 = vmatpush1.bf16.msra.mxu0 0
      %223 = vmatprep.subr.bf16.mxu0 0
      %224 = vmatpush1.bf16.msra.mxu0 0
      %225 = vmatprep.subr.bf16.mxu0 0
      %226 = vmatpush1.bf16.msra.mxu0 0
      %227 = vmatprep.subr.bf16.mxu0 0
      %228 = vmatpush1.bf16.msra.mxu0 0
      %229 = vmatprep.subr.bf16.mxu0 0
      %230 = vmatpush1.bf16.msra.mxu0 0
      %231 = vmatprep.subr.bf16.mxu0 0
      %232 = vmatpush1.bf16.msra.mxu0 0
      %233 = vmatprep.mubr.bf16.mxu0 0
      %234 = vmatmul.mubr.bf16.gmra.mrb[0].mxu0 %v199
      %v235 = vpop.f32.mrb[0].mxu0
      %v236 = vadd.f32 %v195, %v235
      %v237 = vpop.f32.mrb[0].mxu0
      %v238 = vpop.f32.mrb[0].mxu0
      %v239 = vadd.f32 %v195, %v238
      %v240 = vpop.f32.mrb[0].mxu0
      %241 = vdwg.mxu0
      %vm242 = vcmask 261120
      %243 = vst.msk [vmem:[%s172] sm:$0xff] %vm242, %v236
      %244 = vst.msk [vmem:[%s172 + $0x8] sm:$0xff] %vm242, %v239
      %s245 = smul.u32 2, %s14
      %p246 = scmp.lt.s32.totalorder %s245, 3
      %s247 = scalar_select %p246, %s245, 3
      %s248 = smul.addr %s247, 8
      %s249 = scalar_lea.vmem %s3, %s248
      // Predicated region
      $region33: #{vit_forward.8} parent=31 // pred_check
        %p250 = pneg %p100
      $region34: #{vit_forward.8} parent=31 // pred_check_branch
        %252 = sbr.rel (%p250) target = $region36
      $region35: #{vit_forward.8} parent=31 // pred_region
        %s253 = smul.u32 2, %s14
      $region36: #{vit_forward.8} parent=31 // pred_fallthru
        _
    $region32: #{vit_forward.8} parent=5 // pred_fallthru
      _
    %p254 = scmp.le.s32.totalorder 2, %s9
    // Predicated region
    $region37: #{vit_forward.8} parent=5 // pred_check
      %p255 = pneg %p254
    $region38: #{vit_forward.8} parent=5 // pred_check_branch
      %257 = sbr.rel (%p255) target = $region40
    $region39: #{vit_forward.8} parent=5 // pred_region
      %s258 = ssub.s32 %s9, 2
      // Predicated region
      $region41: #{vit_forward.8} parent=39 // pred_check
        %p259 = pneg %p106
      $region42: #{vit_forward.8} parent=39 // pred_check_branch
        %261 = sbr.rel (%p259) target = $region44
      $region43: #{vit_forward.8} parent=39 // pred_region
        %s262 = smul.u32 2, %s15
        %p263 = scmp.lt.s32.totalorder %s262, 3
        %s264 = scalar_select %p263, %s262, 3
        %s265 = smul.addr %s264, 8
        %s266 = scalar_lea.vmem %s3, %s265
      $region44: #{vit_forward.8} parent=39 // pred_fallthru
        _
    $region40: #{vit_forward.8} parent=5 // pred_fallthru
      _
  $region6: #{vit_forward.8} parent=0 // loop_footer
    %s13 = sadd.s32 1, %s9
  $region7: #{vit_forward.8} parent=0 // loop_footer_branch
    %8 = sbr.rel target = $region3
  $region8: #{vit_forward.8} parent=0 // loop_exit
    _

// kernel: vit_forward.9
$region0: #{vit_forward.9}
  #allocation0 [shape = 'u32[]', space=smem, size = 0x4, offset = 0x4, fixed_abs, tag = 'smem constant byte address 0x4 - core index']
  #allocation1 [shape = 'u32[144,128]{1,0:T(1,128)}', space=vmem, size = 0x12000, scoped, tag = 'internal scratch']
  %s0 = inlined_call_operand.vmem [shape: f32[48,32], index: 0, kind: input, shape index: {}]
  %s1 = inlined_call_operand.vmem [shape: f32[1,32], index: 1, kind: input, shape index: {}]
  %s2 = inlined_call_operand.vmem [shape: f32[1,32], index: 2, kind: input, shape index: {}]
  %s3 = inlined_call_operand.vmem [shape: f32[32,96], index: 3, kind: input, shape index: {}]
  %s4 = inlined_call_operand.vmem [shape: f32[1,96], index: 4, kind: input, shape index: {}]
  %s5 = inlined_call_operand.vmem [shape: f32[48,96], index: 5, kind: output, shape index: {}]
  %s6 = sld [smem:[#allocation0]]
  $region53: #{vit_forward.9} parent=0
    _
  %s8 = ssub.s32 1, %s6
  %s9 = scalar_select 0, %s8, %s6
  loop: start=0, step=1, limit=4
  $region2: #{vit_forward.9} parent=0 // loop_pre_header
    _
  $region3: #{vit_forward.9} parent=0 // loop_header
    %s11 = sphi 0, %s15
    %p12 = scmp.ge.s32.totalorder %s11, 4
    %s21 = sphi 0, %s23
    %s24 = sphi 0, %s21
    %s25 = sphi 0, %s24
    %s41 = sphi 0, %s25
    %s45 = sphi 0, %s45
    %s47 = sphi 0, %s45
    %s48 = sphi 0, %s47
    %s62 = sphi 0, %s48
    %s66 = sphi 0, %s66
    %s68 = sphi 0, %s66
    %s69 = sphi 0, %s68
    %s83 = sphi 0, %s69
    %s87 = sphi 0, %s87
    %s89 = sphi 0, %s87
    %s90 = sphi 0, %s89
    %s104 = sphi 0, %s90
    %s108 = sphi 0, %s108
    %s110 = sphi 0, %s108
    %s111 = sphi 0, %s110
    %s125 = sphi 0, %s111
    %s131 = sphi 0, %s133
    %s134 = sphi 0, %s131
    %s135 = sphi 0, %s134
    %s151 = sphi 0, %s135
  $region4: #{vit_forward.9} parent=0 // loop_header_branch
    %14 = sbr.rel (%p12) target = $region8
  $region5: #{vit_forward.9} parent=0 // loop_body
    %s16 = ssub.s32 %s11, 1
    %s17 = ssub.s32 %s11, 2
    %s18 = sadd.s32 %s11, 1
    %s19 = ssub.s32 %s11, %s18
    %p20 = scmp.eq.s32.totalorder %s19, 0
    %s22 = sadd.s32 %s21, 1
    %s23 = scalar_select %p20, %s21, %s22
    %p26 = pneg %p20
    %p27 = scmp.eq.s32.totalorder %s11, 1
    %p28 = por %p26, %p27
    %p29 = scmp.ne.s32.totalorder %s21, %s24
    %p30 = scmp.eq.s32.totalorder %s11, 0
    %p31 = por %p29, %p30
    %p32 = scmp.ne.s32.totalorder %s21, %s24
    %p33 = scmp.eq.s32.totalorder %s16, 1
    %p34 = por %p32, %p33
    %p35 = scmp.ne.s32.totalorder %s24, %s25
    %p36 = scmp.eq.s32.totalorder %s16, 0
    %p37 = por %p35, %p36
    %p38 = scmp.ne.s32.totalorder %s24, %s25
    %p39 = scmp.eq.s32.totalorder %s17, 1
    %p40 = por %p38, %p39
    %p42 = scmp.ne.s32.totalorder %s25, %s41
    %p43 = scmp.eq.s32.totalorder %s17, 0
    %p44 = por %p42, %p43
    %s46 = sadd.s32 %s45, 1
    %p49 = scmp.eq.s32.totalorder %s11, 1
    %p50 = scmp.ne.s32.totalorder %s45, %s47
    %p51 = scmp.eq.s32.totalorder %s11, 0
    %p52 = por %p50, %p51
    %p53 = scmp.ne.s32.totalorder %s45, %s47
    %p54 = scmp.eq.s32.totalorder %s16, 1
    %p55 = por %p53, %p54
    %p56 = scmp.ne.s32.totalorder %s47, %s48
    %p57 = scmp.eq.s32.totalorder %s16, 0
    %p58 = por %p56, %p57
    %p59 = scmp.ne.s32.totalorder %s47, %s48
    %p60 = scmp.eq.s32.totalorder %s17, 1
    %p61 = por %p59, %p60
    %p63 = scmp.ne.s32.totalorder %s48, %s62
    %p64 = scmp.eq.s32.totalorder %s17, 0
    %p65 = por %p63, %p64
    %s67 = sadd.s32 %s66, 1
    %p70 = scmp.eq.s32.totalorder %s11, 1
    %p71 = scmp.ne.s32.totalorder %s66, %s68
    %p72 = scmp.eq.s32.totalorder %s11, 0
    %p73 = por %p71, %p72
    %p74 = scmp.ne.s32.totalorder %s66, %s68
    %p75 = scmp.eq.s32.totalorder %s16, 1
    %p76 = por %p74, %p75
    %p77 = scmp.ne.s32.totalorder %s68, %s69
    %p78 = scmp.eq.s32.totalorder %s16, 0
    %p79 = por %p77, %p78
    %p80 = scmp.ne.s32.totalorder %s68, %s69
    %p81 = scmp.eq.s32.totalorder %s17, 1
    %p82 = por %p80, %p81
    %p84 = scmp.ne.s32.totalorder %s69, %s83
    %p85 = scmp.eq.s32.totalorder %s17, 0
    %p86 = por %p84, %p85
    %s88 = sadd.s32 %s87, 1
    %p91 = scmp.eq.s32.totalorder %s11, 1
    %p92 = scmp.ne.s32.totalorder %s87, %s89
    %p93 = scmp.eq.s32.totalorder %s11, 0
    %p94 = por %p92, %p93
    %p95 = scmp.ne.s32.totalorder %s87, %s89
    %p96 = scmp.eq.s32.totalorder %s16, 1
    %p97 = por %p95, %p96
    %p98 = scmp.ne.s32.totalorder %s89, %s90
    %p99 = scmp.eq.s32.totalorder %s16, 0
    %p100 = por %p98, %p99
    %p101 = scmp.ne.s32.totalorder %s89, %s90
    %p102 = scmp.eq.s32.totalorder %s17, 1
    %p103 = por %p101, %p102
    %p105 = scmp.ne.s32.totalorder %s90, %s104
    %p106 = scmp.eq.s32.totalorder %s17, 0
    %p107 = por %p105, %p106
    %s109 = sadd.s32 %s108, 1
    %p112 = scmp.eq.s32.totalorder %s11, 1
    %p113 = scmp.ne.s32.totalorder %s108, %s110
    %p114 = scmp.eq.s32.totalorder %s11, 0
    %p115 = por %p113, %p114
    %p116 = scmp.ne.s32.totalorder %s108, %s110
    %p117 = scmp.eq.s32.totalorder %s16, 1
    %p118 = por %p116, %p117
    %p119 = scmp.ne.s32.totalorder %s110, %s111
    %p120 = scmp.eq.s32.totalorder %s16, 0
    %p121 = por %p119, %p120
    %p122 = scmp.ne.s32.totalorder %s110, %s111
    %p123 = scmp.eq.s32.totalorder %s17, 1
    %p124 = por %p122, %p123
    %p126 = scmp.ne.s32.totalorder %s111, %s125
    %p127 = scmp.eq.s32.totalorder %s17, 0
    %p128 = por %p126, %p127
    %s129 = ssub.s32 %s11, %s18
    %p130 = scmp.eq.s32.totalorder %s129, 0
    %s132 = sadd.s32 %s131, 1
    %s133 = scalar_select %p130, %s131, %s132
    %p136 = pneg %p130
    %p137 = scmp.eq.s32.totalorder %s11, 1
    %p138 = por %p136, %p137
    %p139 = scmp.ne.s32.totalorder %s131, %s134
    %p140 = scmp.eq.s32.totalorder %s11, 0
    %p141 = por %p139, %p140
    %p142 = scmp.ne.s32.totalorder %s131, %s134
    %p143 = scmp.eq.s32.totalorder %s16, 1
    %p144 = por %p142, %p143
    %p145 = scmp.ne.s32.totalorder %s134, %s135
    %p146 = scmp.eq.s32.totalorder %s16, 0
    %p147 = por %p145, %p146
    %p148 = scmp.ne.s32.totalorder %s134, %s135
    %p149 = scmp.eq.s32.totalorder %s17, 1
    %p150 = por %p148, %p149
    %p152 = scmp.ne.s32.totalorder %s135, %s151
    %p153 = scmp.eq.s32.totalorder %s17, 0
    %p154 = por %p152, %p153
    %p155 = scmp.le.s32.totalorder 1, %s11
    %p156 = scmp.lt.s32.totalorder %s11, 3
    %p157 = pnand %p155, %p156
    %p158 = pneg %p157
    // Predicated region
    $region9: #{vit_forward.9} parent=5 // pred_check
      _
    $region10: #{vit_forward.9} parent=5 // pred_check_branch
      %160 = sbr.rel (%p157) target = $region12
    $region11: #{vit_forward.9} parent=5 // pred_region
      %s161 = ssub.s32 %s11, 1
      // Predicated region
      $region13: #{vit_forward.9} parent=11 // pred_check
        %p162 = pneg %p58
      $region14: #{vit_forward.9} parent=11 // pred_check_branch
        %164 = sbr.rel (%p162) target = $region16
      $region15: #{vit_forward.9} parent=11 // pred_region
        _
      $region16: #{vit_forward.9} parent=11 // pred_fallthru
        _
      // Predicated region
      $region17: #{vit_forward.9} parent=11 // pred_check
        %p165 = pneg %p79
      $region18: #{vit_forward.9} parent=11 // pred_check_branch
        %167 = sbr.rel (%p165) target = $region20
      $region19: #{vit_forward.9} parent=11 // pred_region
        _
      $region20: #{vit_forward.9} parent=11 // pred_fallthru
        _
      // Predicated region
      $region21: #{vit_forward.9} parent=11 // pred_check
        %p168 = pneg %p100
      $region22: #{vit_forward.9} parent=11 // pred_check_branch
        %170 = sbr.rel (%p168) target = $region24
      $region23: #{vit_forward.9} parent=11 // pred_region
        _
      $region24: #{vit_forward.9} parent=11 // pred_fallthru
        _
      // Predicated region
      $region25: #{vit_forward.9} parent=11 // pred_check
        %p171 = pneg %p121
      $region26: #{vit_forward.9} parent=11 // pred_check_branch
        %173 = sbr.rel (%p171) target = $region28
      $region27: #{vit_forward.9} parent=11 // pred_region
        _
      $region28: #{vit_forward.9} parent=11 // pred_fallthru
        _
    $region12: #{vit_forward.9} parent=5 // pred_fallthru
      _
    %p174 = scmp.lt.s32.totalorder %s11, 2
    // Predicated region
    $region29: #{vit_forward.9} parent=5 // pred_check
      %p175 = pneg %p174
    $region30: #{vit_forward.9} parent=5 // pred_check_branch
      %177 = sbr.rel (%p175) target = $region32
    $region31: #{vit_forward.9} parent=5 // pred_region
      // Predicated region
      $region33: #{vit_forward.9} parent=31 // pred_check
        %p178 = pneg %p31
      $region34: #{vit_forward.9} parent=31 // pred_check_branch
        %180 = sbr.rel (%p178) target = $region36
      $region35: #{vit_forward.9} parent=31 // pred_region
        %s181 = smul.u32 3, %s11
        %p182 = scmp.lt.s32.totalorder %s181, 5
        %s183 = scalar_select %p182, %s181, 5
        %s184 = smul.addr %s183, 8
        %s185 = scalar_lea.vmem %s0, %s184
        %s186 = smul.u32 3, %s11
      $region36: #{vit_forward.9} parent=31 // pred_fallthru
        _
    $region32: #{vit_forward.9} parent=5 // pred_fallthru
      _
    %p187 = scmp.le.s32.totalorder 1, %s11
    %p188 = scmp.lt.s32.totalorder %s11, 3
    %p189 = pnand %p187, %p188
    %p190 = pneg %p189
    // Predicated region
    $region37: #{vit_forward.9} parent=5 // pred_check
      _
    $region38: #{vit_forward.9} parent=5 // pred_check_branch
      %192 = sbr.rel (%p189) target = $region40
    $region39: #{vit_forward.9} parent=5 // pred_region
      %s193 = ssub.s32 %s11, 1
      %s194 = smul.u32 3, %s16
      %p195 = scmp.lt.s32.totalorder %s194, 5
      %s196 = scalar_select %p195, %s194, 5
      %s197 = smul.addr %s196, 8
      %s198 = scalar_lea.vmem %s0, %s197
      %p199 = pneg %p37
      %p200 = pneg %p34
      %p201 = pneg %p58
      %p202 = pneg %p55
      %p203 = pneg %p79
      %p204 = pneg %p76
      %p205 = pneg %p100
      %p206 = pneg %p97
      %p207 = pneg %p121
      %p208 = pneg %p118
      %p209 = pneg %p147
      %p210 = pneg %p144
      %s211 = smul.u32 3, %s16
      %p212 = scmp.lt.s32.totalorder %s211, 5
      %s213 = scalar_select %p212, %s211, 5
      %s214 = smul.addr %s213, 8
      %s215 = scalar_lea.vmem %s5, %s214
      %s216 = smul.u32 3, %s16
      %p217 = scmp.lt.s32.totalorder %s216, 5
      %s218 = scalar_select %p217, %s216, 5
      %s219 = smul.addr %s218, 8
      %s220 = scalar_lea.vmem %s0, %s219
      %s221 = smul.u32 3, %s16
      %s222 = smul.u32 3, %s16
      %p223 = scmp.lt.s32.totalorder %s222, 5
      %s224 = scalar_select %p223, %s222, 5
      %s225 = smul.addr %s224, 8
      %s226 = scalar_lea.vmem %s5, %s225
      %s227 = smul.u32 3, %s16
      %v229 = vld [vmem:[%s220] sm:$0xff]
      %v230 = vld [vmem:[%s220 + $0x8] sm:$0xff]
      %v231 = vld [vmem:[%s220 + $0x10] sm:$0xff]
      %v232 = vld [vmem:[%s1] sm:$0x1]
      %v233 = vld [vmem:[%s2] sm:$0x1]
      %vm234 = vcmask 261120
      %v235 = vsel %vm234, %v229, 0.0
      %236 = vadd.xlane.f32.xlu0 %v235
      %v237 = vpop.xlane.xlu0 %236
      %v238 = vsel %vm234, %v230, 0.0
      %239 = vadd.xlane.f32.xlu0 %v238
      %v240 = vpop.xlane.xlu0 %239
      %v241 = vsel %vm234, %v231, 0.0
      %242 = vadd.xlane.f32.xlu0 %v241
      %v243 = vpop.xlane.xlu0 %242
      %v244 = vrcp.pop 32.0
      %v245 = vmul.f32 %v237, %v244
      %v246 = vmul.f32 %v240, %v244
      %v247 = vmul.f32 %v243, %v244
      %v248 = vsub.f32 %v229, %v245
      %v249 = vsub.f32 %v230, %v246
      %v250 = vsub.f32 %v231, %v247
      %v251 = vmul.f32 %v248, %v248
      %v252 = vmul.f32 %v249, %v249
      %v253 = vmul.f32 %v250, %v250
      %v254 = vsel %vm234, %v251, 0.0
      %255 = vadd.xlane.f32.xlu0 %v254
      %v256 = vpop.xlane.xlu0 %255
      %v257 = vsel %vm234, %v252, 0.0
      %258 = vadd.xlane.f32.xlu0 %v257
      %v259 = vpop.xlane.xlu0 %258
      %v260 = vsel %vm234, %v253, 0.0
      %261 = vadd.xlane.f32.xlu0 %v260
      %v262 = vpop.xlane.xlu0 %261
      %v263 = vmul.f32 %v256, %v244
      %v264 = vmul.f32 %v259, %v244
      %v265 = vmul.f32 %v262, %v244
      %v266 = vadd.f32 %v263, 1e-05
      %v267 = vadd.f32 %v264, 1e-05
      %v268 = vadd.f32 %v265, 1e-05
      %v269 = vrsqrt.pop %v266
      %v270 = vrsqrt.pop %v267
      %v271 = vrsqrt.pop %v268
      %v272 = vmul.f32 %v248, %v269
      %v273 = vmul.f32 %v249, %v270
      %v274 = vmul.f32 %v250, %v271
      %v276 = vlaneseq
      %v277 = vshrl.u32 %v276, 7
      %v278 = vsub.s32 0, %v277
      %v279 = vrot.slane %v232, %v278
      %v281 = vmul.f32 %v272, %v279
      %v282 = vmul.f32 %v273, %v279
      %v283 = vmul.f32 %v274, %v279
      %v285 = vlaneseq
      %v286 = vshrl.u32 %v285, 7
      %v287 = vsub.s32 0, %v286
      %v288 = vrot.slane %v233, %v287
      %v290 = vadd.f32 %v281, %v288
      %v291 = vadd.f32 %v282, %v288
      %v292 = vadd.f32 %v283, %v288
      %v293 = vpack.c.bf16 %v291, %v290
      %v294 = vpack.c.bf16 %v292, %v292
      %v295 = vld [vmem:[%s3] sm:$0xff]
      %v296 = vld [vmem:[%s3 + $0x8] sm:$0xff]
      %v297 = vld [vmem:[%s3 + $0x10] sm:$0xff]
      %v298 = vld [vmem:[%s3 + $0x18] sm:$0xff]
      %v299 = vpack.c.bf16 %v296, %v295
      %v300 = vpack.c.bf16 %v298, %v297
      %v301 = vld [vmem:[%s4] sm:$0x1]
      %v303 = vlaneseq
      %v304 = vshrl.u32 %v303, 7
      %v305 = vsub.s32 0, %v304
      %v306 = vrot.slane %v301, %v305
      %v309 = vsel %vm234, %v293, 0
      %v312 = vsel %vm234, %v294, 0
      %314 = vmatprep.subr.bf16.mxu0 0
      %315 = vmatpush1.bf16.msra.mxu0 %v299
      %316 = vmatprep.subr.bf16.mxu0 0
      %317 = vmatpush1.bf16.msra.mxu0 %v300
      %318 = vmatprep.subr.bf16.mxu0 0
      %319 = vmatpush1.bf16.msra.mxu0 0
      %320 = vmatprep.subr.bf16.mxu0 0
      %321 = vmatpush1.bf16.msra.mxu0 0
      %322 = vmatprep.subr.bf16.mxu0 0
      %323 = vmatpush1.bf16.msra.mxu0 0
      %324 = vmatprep.subr.bf16.mxu0 0
      %325 = vmatpush1.bf16.msra.mxu0 0
      %326 = vmatprep.subr.bf16.mxu0 0
      %327 = vmatpush1.bf16.msra.mxu0 0
      %328 = vmatprep.subr.bf16.mxu0 0
      %329 = vmatpush1.bf16.msra.mxu0 0
      %330 = vmatprep.subr.bf16.mxu0 0
      %331 = vmatpush1.bf16.msra.mxu0 0
      %332 = vmatprep.subr.bf16.mxu0 0
      %333 = vmatpush1.bf16.msra.mxu0 0
      %334 = vmatprep.subr.bf16.mxu0 0
      %335 = vmatpush1.bf16.msra.mxu0 0
      %336 = vmatprep.subr.bf16.mxu0 0
      %337 = vmatpush1.bf16.msra.mxu0 0
      %338 = vmatprep.subr.bf16.mxu0 0
      %339 = vmatpush1.bf16.msra.mxu0 0
      %340 = vmatprep.subr.bf16.mxu0 0
      %341 = vmatpush1.bf16.msra.mxu0 0
      %342 = vmatprep.subr.bf16.mxu0 0
      %343 = vmatpush1.bf16.msra.mxu0 0
      %344 = vmatprep.subr.bf16.mxu0 0
      %345 = vmatpush1.bf16.msra.mxu0 0
      %346 = vmatprep.mubr.bf16.mxu0 0
      %347 = vmatmul.mubr.bf16.gmra.mrb[0].mxu0 %v309
      %v348 = vpop.f32.mrb[0].mxu0
      %v349 = vadd.f32 %v306, %v348
      %v350 = vpop.f32.mrb[0].mxu0
      %v351 = vpop.f32.mrb[0].mxu0
      %v352 = vadd.f32 %v306, %v351
      %v353 = vpop.f32.mrb[0].mxu0
      %354 = vmatprep.mubr.bf16.mxu0 0
      %355 = vmatmul.mubr.bf16.gmra.mrb[0].mxu0 %v312
      %v356 = vpop.f32.mrb[0].mxu0
      %v357 = vadd.f32 %v306, %v356
      %v358 = vpop.f32.mrb[0].mxu0
      %v359 = vpop.f32.mrb[0].mxu0
      %v360 = vpop.f32.mrb[0].mxu0
      %361 = vdwg.mxu0
      %vm362 = vcmask 785408
      %363 = vst.msk [vmem:[%s226] sm:$0xff] %vm362, %v349
      %364 = vst.msk [vmem:[%s226 + $0x8] sm:$0xff] %vm362, %v352
      %365 = vst.msk [vmem:[%s226 + $0x10] sm:$0xff] %vm362, %v357
      %s366 = smul.u32 3, %s16
      %p367 = scmp.lt.s32.totalorder %s366, 5
      %s368 = scalar_select %p367, %s366, 5
      %s369 = smul.addr %s368, 8
      %s370 = scalar_lea.vmem %s5, %s369
      // Predicated region
      $region41: #{vit_forward.9} parent=39 // pred_check
        %p371 = pneg %p144
      $region42: #{vit_forward.9} parent=39 // pred_check_branch
        %373 = sbr.rel (%p371) target = $region44
      $region43: #{vit_forward.9} parent=39 // pred_region
        %s374 = smul.u32 3, %s16
      $region44: #{vit_forward.9} parent=39 // pred_fallthru
        _
    $region40: #{vit_forward.9} parent=5 // pred_fallthru
      _
    %p375 = scmp.le.s32.totalorder 2, %s11
    // Predicated region
    $region45: #{vit_forward.9} parent=5 // pred_check
      %p376 = pneg %p375
    $region46: #{vit_forward.9} parent=5 // pred_check_branch
      %378 = sbr.rel (%p376) target = $region48
    $region47: #{vit_forward.9} parent=5 // pred_region
      %s379 = ssub.s32 %s11, 2
      // Predicated region
      $region49: #{vit_forward.9} parent=47 // pred_check
        %p380 = pneg %p150
      $region50: #{vit_forward.9} parent=47 // pred_check_branch
        %382 = sbr.rel (%p380) target = $region52
      $region51: #{vit_forward.9} parent=47 // pred_region
        %s383 = smul.u32 3, %s17
        %p384 = scmp.lt.s32.totalorder %s383, 5
        %s385 = scalar_select %p384, %s383, 5
        %s386 = smul.addr %s385, 8
        %s387 = scalar_lea.vmem %s5, %s386
      $region52: #{vit_forward.9} parent=47 // pred_fallthru
        _
    $region48: #{vit_forward.9} parent=5 // pred_fallthru
      _
  $region6: #{vit_forward.9} parent=0 // loop_footer
    %s15 = sadd.s32 1, %s11
  $region7: #{vit_forward.9} parent=0 // loop_footer_branch
    %10 = sbr.rel target = $region3
  $region8: #{vit_forward.9} parent=0 // loop_exit
    _

// kernel: vit_forward.11
$region0: #{vit_forward.11}
  #allocation0 [shape = 'u32[]', space=smem, size = 0x4, offset = 0x4, fixed_abs, tag = 'smem constant byte address 0x4 - core index']
  #allocation1 [shape = 'u32[144,128]{1,0:T(1,128)}', space=vmem, size = 0x12000, scoped, tag = 'internal scratch']
  %s0 = inlined_call_operand.vmem [shape: f32[48,32], index: 0, kind: input, shape index: {}]
  %s1 = inlined_call_operand.vmem [shape: f32[1,32], index: 1, kind: input, shape index: {}]
  %s2 = inlined_call_operand.vmem [shape: f32[1,32], index: 2, kind: input, shape index: {}]
  %s3 = inlined_call_operand.vmem [shape: f32[32,128], index: 3, kind: input, shape index: {}]
  %s4 = inlined_call_operand.vmem [shape: f32[1,128], index: 4, kind: input, shape index: {}]
  %s5 = inlined_call_operand.vmem [shape: f32[128,32], index: 5, kind: input, shape index: {}]
  %s6 = inlined_call_operand.vmem [shape: f32[1,32], index: 6, kind: input, shape index: {}]
  %s7 = inlined_call_operand.vmem [shape: f32[48,32], index: 7, kind: output, shape index: {}]
  %s8 = sld [smem:[#allocation0]]
  $region61: #{vit_forward.11} parent=0
    _
  %s10 = ssub.s32 1, %s8
  %s11 = scalar_select 0, %s10, %s8
  loop: start=0, step=1, limit=4
  $region2: #{vit_forward.11} parent=0 // loop_pre_header
    _
  $region3: #{vit_forward.11} parent=0 // loop_header
    %s13 = sphi 0, %s17
    %p14 = scmp.ge.s32.totalorder %s13, 4
    %s23 = sphi 0, %s25
    %s26 = sphi 0, %s23
    %s27 = sphi 0, %s26
    %s43 = sphi 0, %s27
    %s47 = sphi 0, %s47
    %s49 = sphi 0, %s47
    %s50 = sphi 0, %s49
    %s64 = sphi 0, %s50
    %s68 = sphi 0, %s68
    %s70 = sphi 0, %s68
    %s71 = sphi 0, %s70
    %s85 = sphi 0, %s71
    %s89 = sphi 0, %s89
    %s91 = sphi 0, %s89
    %s92 = sphi 0, %s91
    %s106 = sphi 0, %s92
    %s110 = sphi 0, %s110
    %s112 = sphi 0, %s110
    %s113 = sphi 0, %s112
    %s127 = sphi 0, %s113
    %s131 = sphi 0, %s131
    %s133 = sphi 0, %s131
    %s134 = sphi 0, %s133
    %s148 = sphi 0, %s134
    %s152 = sphi 0, %s152
    %s154 = sphi 0, %s152
    %s155 = sphi 0, %s154
    %s169 = sphi 0, %s155
    %s175 = sphi 0, %s177
    %s178 = sphi 0, %s175
    %s179 = sphi 0, %s178
    %s195 = sphi 0, %s179
  $region4: #{vit_forward.11} parent=0 // loop_header_branch
    %16 = sbr.rel (%p14) target = $region8
  $region5: #{vit_forward.11} parent=0 // loop_body
    %s18 = ssub.s32 %s13, 1
    %s19 = ssub.s32 %s13, 2
    %s20 = sadd.s32 %s13, 1
    %s21 = ssub.s32 %s13, %s20
    %p22 = scmp.eq.s32.totalorder %s21, 0
    %s24 = sadd.s32 %s23, 1
    %s25 = scalar_select %p22, %s23, %s24
    %p28 = pneg %p22
    %p29 = scmp.eq.s32.totalorder %s13, 1
    %p30 = por %p28, %p29
    %p31 = scmp.ne.s32.totalorder %s23, %s26
    %p32 = scmp.eq.s32.totalorder %s13, 0
    %p33 = por %p31, %p32
    %p34 = scmp.ne.s32.totalorder %s23, %s26
    %p35 = scmp.eq.s32.totalorder %s18, 1
    %p36 = por %p34, %p35
    %p37 = scmp.ne.s32.totalorder %s26, %s27
    %p38 = scmp.eq.s32.totalorder %s18, 0
    %p39 = por %p37, %p38
    %p40 = scmp.ne.s32.totalorder %s26, %s27
    %p41 = scmp.eq.s32.totalorder %s19, 1
    %p42 = por %p40, %p41
    %p44 = scmp.ne.s32.totalorder %s27, %s43
    %p45 = scmp.eq.s32.totalorder %s19, 0
    %p46 = por %p44, %p45
    %s48 = sadd.s32 %s47, 1
    %p51 = scmp.eq.s32.totalorder %s13, 1
    %p52 = scmp.ne.s32.totalorder %s47, %s49
    %p53 = scmp.eq.s32.totalorder %s13, 0
    %p54 = por %p52, %p53
    %p55 = scmp.ne.s32.totalorder %s47, %s49
    %p56 = scmp.eq.s32.totalorder %s18, 1
    %p57 = por %p55, %p56
    %p58 = scmp.ne.s32.totalorder %s49, %s50
    %p59 = scmp.eq.s32.totalorder %s18, 0
    %p60 = por %p58, %p59
    %p61 = scmp.ne.s32.totalorder %s49, %s50
    %p62 = scmp.eq.s32.totalorder %s19, 1
    %p63 = por %p61, %p62
    %p65 = scmp.ne.s32.totalorder %s50, %s64
    %p66 = scmp.eq.s32.totalorder %s19, 0
    %p67 = por %p65, %p66
    %s69 = sadd.s32 %s68, 1
    %p72 = scmp.eq.s32.totalorder %s13, 1
    %p73 = scmp.ne.s32.totalorder %s68, %s70
    %p74 = scmp.eq.s32.totalorder %s13, 0
    %p75 = por %p73, %p74
    %p76 = scmp.ne.s32.totalorder %s68, %s70
    %p77 = scmp.eq.s32.totalorder %s18, 1
    %p78 = por %p76, %p77
    %p79 = scmp.ne.s32.totalorder %s70, %s71
    %p80 = scmp.eq.s32.totalorder %s18, 0
    %p81 = por %p79, %p80
    %p82 = scmp.ne.s32.totalorder %s70, %s71
    %p83 = scmp.eq.s32.totalorder %s19, 1
    %p84 = por %p82, %p83
    %p86 = scmp.ne.s32.totalorder %s71, %s85
    %p87 = scmp.eq.s32.totalorder %s19, 0
    %p88 = por %p86, %p87
    %s90 = sadd.s32 %s89, 1
    %p93 = scmp.eq.s32.totalorder %s13, 1
    %p94 = scmp.ne.s32.totalorder %s89, %s91
    %p95 = scmp.eq.s32.totalorder %s13, 0
    %p96 = por %p94, %p95
    %p97 = scmp.ne.s32.totalorder %s89, %s91
    %p98 = scmp.eq.s32.totalorder %s18, 1
    %p99 = por %p97, %p98
    %p100 = scmp.ne.s32.totalorder %s91, %s92
    %p101 = scmp.eq.s32.totalorder %s18, 0
    %p102 = por %p100, %p101
    %p103 = scmp.ne.s32.totalorder %s91, %s92
    %p104 = scmp.eq.s32.totalorder %s19, 1
    %p105 = por %p103, %p104
    %p107 = scmp.ne.s32.totalorder %s92, %s106
    %p108 = scmp.eq.s32.totalorder %s19, 0
    %p109 = por %p107, %p108
    %s111 = sadd.s32 %s110, 1
    %p114 = scmp.eq.s32.totalorder %s13, 1
    %p115 = scmp.ne.s32.totalorder %s110, %s112
    %p116 = scmp.eq.s32.totalorder %s13, 0
    %p117 = por %p115, %p116
    %p118 = scmp.ne.s32.totalorder %s110, %s112
    %p119 = scmp.eq.s32.totalorder %s18, 1
    %p120 = por %p118, %p119
    %p121 = scmp.ne.s32.totalorder %s112, %s113
    %p122 = scmp.eq.s32.totalorder %s18, 0
    %p123 = por %p121, %p122
    %p124 = scmp.ne.s32.totalorder %s112, %s113
    %p125 = scmp.eq.s32.totalorder %s19, 1
    %p126 = por %p124, %p125
    %p128 = scmp.ne.s32.totalorder %s113, %s127
    %p129 = scmp.eq.s32.totalorder %s19, 0
    %p130 = por %p128, %p129
    %s132 = sadd.s32 %s131, 1
    %p135 = scmp.eq.s32.totalorder %s13, 1
    %p136 = scmp.ne.s32.totalorder %s131, %s133
    %p137 = scmp.eq.s32.totalorder %s13, 0
    %p138 = por %p136, %p137
    %p139 = scmp.ne.s32.totalorder %s131, %s133
    %p140 = scmp.eq.s32.totalorder %s18, 1
    %p141 = por %p139, %p140
    %p142 = scmp.ne.s32.totalorder %s133, %s134
    %p143 = scmp.eq.s32.totalorder %s18, 0
    %p144 = por %p142, %p143
    %p145 = scmp.ne.s32.totalorder %s133, %s134
    %p146 = scmp.eq.s32.totalorder %s19, 1
    %p147 = por %p145, %p146
    %p149 = scmp.ne.s32.totalorder %s134, %s148
    %p150 = scmp.eq.s32.totalorder %s19, 0
    %p151 = por %p149, %p150
    %s153 = sadd.s32 %s152, 1
    %p156 = scmp.eq.s32.totalorder %s13, 1
    %p157 = scmp.ne.s32.totalorder %s152, %s154
    %p158 = scmp.eq.s32.totalorder %s13, 0
    %p159 = por %p157, %p158
    %p160 = scmp.ne.s32.totalorder %s152, %s154
    %p161 = scmp.eq.s32.totalorder %s18, 1
    %p162 = por %p160, %p161
    %p163 = scmp.ne.s32.totalorder %s154, %s155
    %p164 = scmp.eq.s32.totalorder %s18, 0
    %p165 = por %p163, %p164
    %p166 = scmp.ne.s32.totalorder %s154, %s155
    %p167 = scmp.eq.s32.totalorder %s19, 1
    %p168 = por %p166, %p167
    %p170 = scmp.ne.s32.totalorder %s155, %s169
    %p171 = scmp.eq.s32.totalorder %s19, 0
    %p172 = por %p170, %p171
    %s173 = ssub.s32 %s13, %s20
    %p174 = scmp.eq.s32.totalorder %s173, 0
    %s176 = sadd.s32 %s175, 1
    %s177 = scalar_select %p174, %s175, %s176
    %p180 = pneg %p174
    %p181 = scmp.eq.s32.totalorder %s13, 1
    %p182 = por %p180, %p181
    %p183 = scmp.ne.s32.totalorder %s175, %s178
    %p184 = scmp.eq.s32.totalorder %s13, 0
    %p185 = por %p183, %p184
    %p186 = scmp.ne.s32.totalorder %s175, %s178
    %p187 = scmp.eq.s32.totalorder %s18, 1
    %p188 = por %p186, %p187
    %p189 = scmp.ne.s32.totalorder %s178, %s179
    %p190 = scmp.eq.s32.totalorder %s18, 0
    %p191 = por %p189, %p190
    %p192 = scmp.ne.s32.totalorder %s178, %s179
    %p193 = scmp.eq.s32.totalorder %s19, 1
    %p194 = por %p192, %p193
    %p196 = scmp.ne.s32.totalorder %s179, %s195
    %p197 = scmp.eq.s32.totalorder %s19, 0
    %p198 = por %p196, %p197
    %p199 = scmp.le.s32.totalorder 1, %s13
    %p200 = scmp.lt.s32.totalorder %s13, 3
    %p201 = pnand %p199, %p200
    %p202 = pneg %p201
    // Predicated region
    $region9: #{vit_forward.11} parent=5 // pred_check
      _
    $region10: #{vit_forward.11} parent=5 // pred_check_branch
      %204 = sbr.rel (%p201) target = $region12
    $region11: #{vit_forward.11} parent=5 // pred_region
      %s205 = ssub.s32 %s13, 1
      // Predicated region
      $region13: #{vit_forward.11} parent=11 // pred_check
        %p206 = pneg %p60
      $region14: #{vit_forward.11} parent=11 // pred_check_branch
        %208 = sbr.rel (%p206) target = $region16
      $region15: #{vit_forward.11} parent=11 // pred_region
        _
      $region16: #{vit_forward.11} parent=11 // pred_fallthru
        _
      // Predicated region
      $region17: #{vit_forward.11} parent=11 // pred_check
        %p209 = pneg %p81
      $region18: #{vit_forward.11} parent=11 // pred_check_branch
        %211 = sbr.rel (%p209) target = $region20
      $region19: #{vit_forward.11} parent=11 // pred_region
        _
      $region20: #{vit_forward.11} parent=11 // pred_fallthru
        _
      // Predicated region
      $region21: #{vit_forward.11} parent=11 // pred_check
        %p212 = pneg %p102
      $region22: #{vit_forward.11} parent=11 // pred_check_branch
        %214 = sbr.rel (%p212) target = $region24
      $region23: #{vit_forward.11} parent=11 // pred_region
        _
      $region24: #{vit_forward.11} parent=11 // pred_fallthru
        _
      // Predicated region
      $region25: #{vit_forward.11} parent=11 // pred_check
        %p215 = pneg %p123
      $region26: #{vit_forward.11} parent=11 // pred_check_branch
        %217 = sbr.rel (%p215) target = $region28
      $region27: #{vit_forward.11} parent=11 // pred_region
        _
      $region28: #{vit_forward.11} parent=11 // pred_fallthru
        _
      // Predicated region
      $region29: #{vit_forward.11} parent=11 // pred_check
        %p218 = pneg %p144
      $region30: #{vit_forward.11} parent=11 // pred_check_branch
        %220 = sbr.rel (%p218) target = $region32
      $region31: #{vit_forward.11} parent=11 // pred_region
        _
      $region32: #{vit_forward.11} parent=11 // pred_fallthru
        _
      // Predicated region
      $region33: #{vit_forward.11} parent=11 // pred_check
        %p221 = pneg %p165
      $region34: #{vit_forward.11} parent=11 // pred_check_branch
        %223 = sbr.rel (%p221) target = $region36
      $region35: #{vit_forward.11} parent=11 // pred_region
        _
      $region36: #{vit_forward.11} parent=11 // pred_fallthru
        _
    $region12: #{vit_forward.11} parent=5 // pred_fallthru
      _
    %p224 = scmp.lt.s32.totalorder %s13, 2
    // Predicated region
    $region37: #{vit_forward.11} parent=5 // pred_check
      %p225 = pneg %p224
    $region38: #{vit_forward.11} parent=5 // pred_check_branch
      %227 = sbr.rel (%p225) target = $region40
    $region39: #{vit_forward.11} parent=5 // pred_region
      // Predicated region
      $region41: #{vit_forward.11} parent=39 // pred_check
        %p228 = pneg %p33
      $region42: #{vit_forward.11} parent=39 // pred_check_branch
        %230 = sbr.rel (%p228) target = $region44
      $region43: #{vit_forward.11} parent=39 // pred_region
        %s231 = smul.u32 3, %s13
        %p232 = scmp.lt.s32.totalorder %s231, 5
        %s233 = scalar_select %p232, %s231, 5
        %s234 = smul.addr %s233, 8
        %s235 = scalar_lea.vmem %s0, %s234
        %s236 = smul.u32 3, %s13
      $region44: #{vit_forward.11} parent=39 // pred_fallthru
        _
    $region40: #{vit_forward.11} parent=5 // pred_fallthru
      _
    %p237 = scmp.le.s32.totalorder 1, %s13
    %p238 = scmp.lt.s32.totalorder %s13, 3
    %p239 = pnand %p237, %p238
    %p240 = pneg %p239
    // Predicated region
    $region45: #{vit_forward.11} parent=5 // pred_check
      _
    $region46: #{vit_forward.11} parent=5 // pred_check_branch
      %242 = sbr.rel (%p239) target = $region48
    $region47: #{vit_forward.11} parent=5 // pred_region
      %s243 = ssub.s32 %s13, 1
      %s244 = smul.u32 3, %s18
      %p245 = scmp.lt.s32.totalorder %s244, 5
      %s246 = scalar_select %p245, %s244, 5
      %s247 = smul.addr %s246, 8
      %s248 = scalar_lea.vmem %s0, %s247
      %p249 = pneg %p39
      %p250 = pneg %p36
      %p251 = pneg %p60
      %p252 = pneg %p57
      %p253 = pneg %p81
      %p254 = pneg %p78
      %p255 = pneg %p102
      %p256 = pneg %p99
      %p257 = pneg %p123
      %p258 = pneg %p120
      %p259 = pneg %p144
      %p260 = pneg %p141
      %p261 = pneg %p165
      %p262 = pneg %p162
      %p263 = pneg %p191
      %p264 = pneg %p188
      %s265 = smul.u32 3, %s18
      %p266 = scmp.lt.s32.totalorder %s265, 5
      %s267 = scalar_select %p266, %s265, 5
      %s268 = smul.addr %s267, 8
      %s269 = scalar_lea.vmem %s7, %s268
      %s270 = smul.u32 3, %s18
      %p271 = scmp.lt.s32.totalorder %s270, 5
      %s272 = scalar_select %p271, %s270, 5
      %s273 = smul.addr %s272, 8
      %s274 = scalar_lea.vmem %s0, %s273
      %s275 = smul.u32 3, %s18
      %s276 = smul.u32 3, %s18
      %p277 = scmp.lt.s32.totalorder %s276, 5
      %s278 = scalar_select %p277, %s276, 5
      %s279 = smul.addr %s278, 8
      %s280 = scalar_lea.vmem %s7, %s279
      %s281 = smul.u32 3, %s18
      %v283 = vld [vmem:[%s274] sm:$0xff]
      %v284 = vld [vmem:[%s274 + $0x8] sm:$0xff]
      %v285 = vld [vmem:[%s274 + $0x10] sm:$0xff]
      %v286 = vld [vmem:[%s1] sm:$0x1]
      %v287 = vld [vmem:[%s2] sm:$0x1]
      %vm288 = vcmask 261120
      %v289 = vsel %vm288, %v283, 0.0
      %290 = vadd.xlane.f32.xlu0 %v289
      %v291 = vpop.xlane.xlu0 %290
      %v292 = vsel %vm288, %v284, 0.0
      %293 = vadd.xlane.f32.xlu0 %v292
      %v294 = vpop.xlane.xlu0 %293
      %v295 = vsel %vm288, %v285, 0.0
      %296 = vadd.xlane.f32.xlu0 %v295
      %v297 = vpop.xlane.xlu0 %296
      %v298 = vrcp.pop 32.0
      %v299 = vmul.f32 %v291, %v298
      %v300 = vmul.f32 %v294, %v298
      %v301 = vmul.f32 %v297, %v298
      %v302 = vsub.f32 %v283, %v299
      %v303 = vsub.f32 %v284, %v300
      %v304 = vsub.f32 %v285, %v301
      %v305 = vmul.f32 %v302, %v302
      %v306 = vmul.f32 %v303, %v303
      %v307 = vmul.f32 %v304, %v304
      %v308 = vsel %vm288, %v305, 0.0
      %309 = vadd.xlane.f32.xlu0 %v308
      %v310 = vpop.xlane.xlu0 %309
      %v311 = vsel %vm288, %v306, 0.0
      %312 = vadd.xlane.f32.xlu0 %v311
      %v313 = vpop.xlane.xlu0 %312
      %v314 = vsel %vm288, %v307, 0.0
      %315 = vadd.xlane.f32.xlu0 %v314
      %v316 = vpop.xlane.xlu0 %315
      %v317 = vmul.f32 %v310, %v298
      %v318 = vmul.f32 %v313, %v298
      %v319 = vmul.f32 %v316, %v298
      %v320 = vadd.f32 %v317, 1e-05
      %v321 = vadd.f32 %v318, 1e-05
      %v322 = vadd.f32 %v319, 1e-05
      %v323 = vrsqrt.pop %v320
      %v324 = vrsqrt.pop %v321
      %v325 = vrsqrt.pop %v322
      %v326 = vmul.f32 %v302, %v323
      %v327 = vmul.f32 %v303, %v324
      %v328 = vmul.f32 %v304, %v325
      %v330 = vlaneseq
      %v331 = vshrl.u32 %v330, 7
      %v332 = vsub.s32 0, %v331
      %v333 = vrot.slane %v286, %v332
      %v335 = vmul.f32 %v326, %v333
      %v336 = vmul.f32 %v327, %v333
      %v337 = vmul.f32 %v328, %v333
      %v339 = vlaneseq
      %v340 = vshrl.u32 %v339, 7
      %v341 = vsub.s32 0, %v340
      %v342 = vrot.slane %v287, %v341
      %v344 = vadd.f32 %v335, %v342
      %v345 = vadd.f32 %v336, %v342
      %v346 = vadd.f32 %v337, %v342
      %v347 = vpack.c.bf16 %v345, %v344
      %v348 = vpack.c.bf16 %v346, %v346
      %v349 = vld [vmem:[%s3] sm:$0xff]
      %v350 = vld [vmem:[%s3 + $0x8] sm:$0xff]
      %v351 = vld [vmem:[%s3 + $0x10] sm:$0xff]
      %v352 = vld [vmem:[%s3 + $0x18] sm:$0xff]
      %v353 = vpack.c.bf16 %v350, %v349
      %v354 = vpack.c.bf16 %v352, %v351
      %v355 = vld [vmem:[%s4] sm:$0x1]
      %v357 = vlaneseq
      %v358 = vshrl.u32 %v357, 7
      %v359 = vsub.s32 0, %v358
      %v360 = vrot.slane %v355, %v359
      %v363 = vsel %vm288, %v347, 0
      %v366 = vsel %vm288, %v348, 0
      %368 = vmatprep.subr.bf16.mxu0 0
      %369 = vmatpush1.bf16.msra.mxu0 %v353
      %370 = vmatprep.subr.bf16.mxu0 0
      %371 = vmatpush1.bf16.msra.mxu0 %v354
      %372 = vmatprep.subr.bf16.mxu0 0
      %373 = vmatpush1.bf16.msra.mxu0 0
      %374 = vmatprep.subr.bf16.mxu0 0
      %375 = vmatpush1.bf16.msra.mxu0 0
      %376 = vmatprep.subr.bf16.mxu0 0
      %377 = vmatpush1.bf16.msra.mxu0 0
      %378 = vmatprep.subr.bf16.mxu0 0
      %379 = vmatpush1.bf16.msra.mxu0 0
      %380 = vmatprep.subr.bf16.mxu0 0
      %381 = vmatpush1.bf16.msra.mxu0 0
      %382 = vmatprep.subr.bf16.mxu0 0
      %383 = vmatpush1.bf16.msra.mxu0 0
      %384 = vmatprep.subr.bf16.mxu0 0
      %385 = vmatpush1.bf16.msra.mxu0 0
      %386 = vmatprep.subr.bf16.mxu0 0
      %387 = vmatpush1.bf16.msra.mxu0 0
      %388 = vmatprep.subr.bf16.mxu0 0
      %389 = vmatpush1.bf16.msra.mxu0 0
      %390 = vmatprep.subr.bf16.mxu0 0
      %391 = vmatpush1.bf16.msra.mxu0 0
      %392 = vmatprep.subr.bf16.mxu0 0
      %393 = vmatpush1.bf16.msra.mxu0 0
      %394 = vmatprep.subr.bf16.mxu0 0
      %395 = vmatpush1.bf16.msra.mxu0 0
      %396 = vmatprep.subr.bf16.mxu0 0
      %397 = vmatpush1.bf16.msra.mxu0 0
      %398 = vmatprep.subr.bf16.mxu0 0
      %399 = vmatpush1.bf16.msra.mxu0 0
      %400 = vmatprep.mubr.bf16.mxu0 0
      %401 = vmatmul.mubr.bf16.gmra.mrb[0].mxu0 %v363
      %v402 = vpop.f32.mrb[0].mxu0
      %v403 = vadd.f32 %v360, %v402
      %v404 = vpop.f32.mrb[0].mxu0
      %v405 = vpop.f32.mrb[0].mxu0
      %v406 = vadd.f32 %v360, %v405
      %v407 = vpop.f32.mrb[0].mxu0
      %408 = vmatprep.mubr.bf16.mxu0 0
      %409 = vmatmul.mubr.bf16.gmra.mrb[0].mxu0 %v366
      %v410 = vpop.f32.mrb[0].mxu0
      %v411 = vadd.f32 %v360, %v410
      %v412 = vpop.f32.mrb[0].mxu0
      %v413 = vpop.f32.mrb[0].mxu0
      %v414 = vpop.f32.mrb[0].mxu0
      %415 = vdwg.mxu0
      %v416 = vmul.f32 %v403, 0.5
      %v417 = vmul.f32 %v406, 0.5
      %v418 = vmul.f32 %v411, 0.5
      %v419 = vmul.f32 %v403, 0.70710677
      %v420 = vmul.f32 %v406, 0.70710677
      %v421 = vmul.f32 %v411, 0.70710677
      %v422 = verf.f32.pop %v419
      %v423 = verf.f32.pop %v420
      %v424 = verf.f32.pop %v421
      %v425 = vadd.f32 %v422, 1.0
      %v426 = vadd.f32 %v423, 1.0
      %v427 = vadd.f32 %v424, 1.0
      %v428 = vmul.f32 %v416, %v425
      %v429 = vmul.f32 %v417, %v426
      %v430 = vmul.f32 %v418, %v427
      %v431 = vpack.c.bf16 %v429, %v428
      %v432 = vpack.c.bf16 %v430, %v430
      %v433 = vld [vmem:[%s5] sm:$0xff]
      %v434 = vld [vmem:[%s5 + $0x8] sm:$0xff]
      %v435 = vld [vmem:[%s5 + $0x10] sm:$0xff]
      %v436 = vld [vmem:[%s5 + $0x18] sm:$0xff]
      %v437 = vld [vmem:[%s5 + $0x20] sm:$0xff]
      %v438 = vld [vmem:[%s5 + $0x28] sm:$0xff]
      %v439 = vld [vmem:[%s5 + $0x30] sm:$0xff]
      %v440 = vld [vmem:[%s5 + $0x38] sm:$0xff]
      %v441 = vld [vmem:[%s5 + $0x40] sm:$0xff]
      %v442 = vld [vmem:[%s5 + $0x48] sm:$0xff]
      %v443 = vld [vmem:[%s5 + $0x50] sm:$0xff]
      %v444 = vld [vmem:[%s5 + $0x58] sm:$0xff]
      %v445 = vld [vmem:[%s5 + $0x60] sm:$0xff]
      %v446 = vld [vmem:[%s5 + $0x68] sm:$0xff]
      %v447 = vld [vmem:[%s5 + $0x70] sm:$0xff]
      %v448 = vld [vmem:[%s5 + $0x78] sm:$0xff]
      %v449 = vpack.c.bf16 %v434, %v433
      %v450 = vpack.c.bf16 %v436, %v435
      %v451 = vpack.c.bf16 %v438, %v437
      %v452 = vpack.c.bf16 %v440, %v439
      %v453 = vpack.c.bf16 %v442, %v441
      %v454 = vpack.c.bf16 %v444, %v443
      %v455 = vpack.c.bf16 %v446, %v445
      %v456 = vpack.c.bf16 %v448, %v447
      %v457 = vld [vmem:[%s6] sm:$0x1]
      %v459 = vlaneseq
      %v460 = vshrl.u32 %v459, 7
      %v461 = vsub.s32 0, %v460
      %v462 = vrot.slane %v457, %v461
      %464 = vmatprep.subr.bf16.mxu0 0
      %465 = vmatpush1.bf16.msra.mxu0 %v449
      %466 = vmatprep.subr.bf16.mxu0 0
      %467 = vmatpush1.bf16.msra.mxu0 %v450
      %468 = vmatprep.subr.bf16.mxu0 0
      %469 = vmatpush1.bf16.msra.mxu0 %v451
      %470 = vmatprep.subr.bf16.mxu0 0
      %471 = vmatpush1.bf16.msra.mxu0 %v452
      %472 = vmatprep.subr.bf16.mxu0 0
      %473 = vmatpush1.bf16.msra.mxu0 %v453
      %474 = vmatprep.subr.bf16.mxu0 0
      %475 = vmatpush1.bf16.msra.mxu0 %v454
      %476 = vmatprep.subr.bf16.mxu0 0
      %477 = vmatpush1.bf16.msra.mxu0 %v455
      %478 = vmatprep.subr.bf16.mxu0 0
      %479 = vmatpush1.bf16.msra.mxu0 %v456
      %480 = vmatprep.subr.bf16.mxu0 0
      %481 = vmatpush1.bf16.msra.mxu0 0
      %482 = vmatprep.subr.bf16.mxu0 0
      %483 = vmatpush1.bf16.msra.mxu0 0
      %484 = vmatprep.subr.bf16.mxu0 0
      %485 = vmatpush1.bf16.msra.mxu0 0
      %486 = vmatprep.subr.bf16.mxu0 0
      %487 = vmatpush1.bf16.msra.mxu0 0
      %488 = vmatprep.subr.bf16.mxu0 0
      %489 = vmatpush1.bf16.msra.mxu0 0
      %490 = vmatprep.subr.bf16.mxu0 0
      %491 = vmatpush1.bf16.msra.mxu0 0
      %492 = vmatprep.subr.bf16.mxu0 0
      %493 = vmatpush1.bf16.msra.mxu0 0
      %494 = vmatprep.subr.bf16.mxu0 0
      %495 = vmatpush1.bf16.msra.mxu0 0
      %496 = vmatprep.mubr.bf16.mxu0 0
      %497 = vmatmul.mubr.bf16.gmra.mrb[0].mxu0 %v431
      %v498 = vpop.f32.mrb[0].mxu0
      %v499 = vadd.f32 %v462, %v498
      %v500 = vpop.f32.mrb[0].mxu0
      %v501 = vpop.f32.mrb[0].mxu0
      %v502 = vadd.f32 %v462, %v501
      %v503 = vpop.f32.mrb[0].mxu0
      %504 = vmatprep.mubr.bf16.mxu0 0
      %505 = vmatmul.mubr.bf16.gmra.mrb[0].mxu0 %v432
      %v506 = vpop.f32.mrb[0].mxu0
      %v507 = vadd.f32 %v462, %v506
      %v508 = vpop.f32.mrb[0].mxu0
      %v509 = vpop.f32.mrb[0].mxu0
      %v510 = vpop.f32.mrb[0].mxu0
      %511 = vdwg.mxu0
      %v512 = vadd.f32 %v283, %v499
      %v513 = vadd.f32 %v284, %v502
      %v514 = vadd.f32 %v285, %v507
      %515 = vst.msk [vmem:[%s280] sm:$0xff] %vm288, %v512
      %516 = vst.msk [vmem:[%s280 + $0x8] sm:$0xff] %vm288, %v513
      %517 = vst.msk [vmem:[%s280 + $0x10] sm:$0xff] %vm288, %v514
      %s518 = smul.u32 3, %s18
      %p519 = scmp.lt.s32.totalorder %s518, 5
      %s520 = scalar_select %p519, %s518, 5
      %s521 = smul.addr %s520, 8
      %s522 = scalar_lea.vmem %s7, %s521
      // Predicated region
      $region49: #{vit_forward.11} parent=47 // pred_check
        %p523 = pneg %p188
      $region50: #{vit_forward.11} parent=47 // pred_check_branch
        %525 = sbr.rel (%p523) target = $region52
      $region51: #{vit_forward.11} parent=47 // pred_region
        %s526 = smul.u32 3, %s18
      $region52: #{vit_forward.11} parent=47 // pred_fallthru
        _
    $region48: #{vit_forward.11} parent=5 // pred_fallthru
      _
    %p527 = scmp.le.s32.totalorder 2, %s13
    // Predicated region
    $region53: #{vit_forward.11} parent=5 // pred_check
      %p528 = pneg %p527
    $region54: #{vit_forward.11} parent=5 // pred_check_branch
      %530 = sbr.rel (%p528) target = $region56
    $region55: #{vit_forward.11} parent=5 // pred_region
      %s531 = ssub.s32 %s13, 2
      // Predicated region
      $region57: #{vit_forward.11} parent=55 // pred_check
        %p532 = pneg %p194
      $region58: #{vit_forward.11} parent=55 // pred_check_branch
        %534 = sbr.rel (%p532) target = $region60
      $region59: #{vit_forward.11} parent=55 // pred_region
        %s535 = smul.u32 3, %s19
        %p536 = scmp.lt.s32.totalorder %s535, 5
        %s537 = scalar_select %p536, %s535, 5
        %s538 = smul.addr %s537, 8
        %s539 = scalar_lea.vmem %s7, %s538
      $region60: #{vit_forward.11} parent=55 // pred_fallthru
        _
    $region56: #{vit_forward.11} parent=5 // pred_fallthru
      _
  $region6: #{vit_forward.11} parent=0 // loop_footer
    %s17 = sadd.s32 1, %s13
  $region7: #{vit_forward.11} parent=0 // loop_footer_branch
    %12 = sbr.rel target = $region3
  $region8: #{vit_forward.11} parent=0 // loop_exit
    _

// kernel: vit_forward.10
$region0: #{vit_forward.10}
  #allocation0 [shape = 'u32[]', space=smem, size = 0x4, offset = 0x4, fixed_abs, tag = 'smem constant byte address 0x4 - core index']
  #allocation1 [shape = 'u32[144,128]{1,0:T(1,128)}', space=vmem, size = 0x12000, scoped, tag = 'internal scratch']
  %s0 = inlined_call_operand.vmem [shape: f32[2,24,96], index: 0, kind: input, shape index: {}]
  %s1 = inlined_call_operand.vmem [shape: f32[32,32], index: 1, kind: input, shape index: {}]
  %s2 = inlined_call_operand.vmem [shape: f32[1,32], index: 2, kind: input, shape index: {}]
  %s3 = inlined_call_operand.vmem [shape: f32[2,24,32], index: 3, kind: input, shape index: {}]
  %s4 = inlined_call_operand.vmem [shape: f32[2,24,32], index: 4, kind: output, shape index: {}]
  %s5 = sld [smem:[#allocation0]]
  $region49: #{vit_forward.10} parent=0
    _
  %s7 = ssub.s32 1, %s5
  %s8 = scalar_select 0, %s7, %s5
  loop: start=0, step=1, limit=4
  $region2: #{vit_forward.10} parent=0 // loop_pre_header
    _
  $region3: #{vit_forward.10} parent=0 // loop_header
    %s10 = sphi 0, %s14
    %p11 = scmp.ge.s32.totalorder %s10, 4
    %s20 = sphi 0, %s22
    %s23 = sphi 0, %s20
    %s24 = sphi 0, %s23
    %s40 = sphi 0, %s24
    %s44 = sphi 0, %s44
    %s46 = sphi 0, %s44
    %s47 = sphi 0, %s46
    %s61 = sphi 0, %s47
    %s65 = sphi 0, %s65
    %s67 = sphi 0, %s65
    %s68 = sphi 0, %s67
    %s82 = sphi 0, %s68
    %s88 = sphi 0, %s90
    %s91 = sphi 0, %s88
    %s92 = sphi 0, %s91
    %s108 = sphi 0, %s92
    %s114 = sphi 0, %s116
    %s117 = sphi 0, %s114
    %s118 = sphi 0, %s117
    %s134 = sphi 0, %s118
  $region4: #{vit_forward.10} parent=0 // loop_header_branch
    %13 = sbr.rel (%p11) target = $region8
  $region5: #{vit_forward.10} parent=0 // loop_body
    %s15 = ssub.s32 %s10, 1
    %s16 = ssub.s32 %s10, 2
    %s17 = sadd.s32 %s10, 1
    %s18 = ssub.s32 %s10, %s17
    %p19 = scmp.eq.s32.totalorder %s18, 0
    %s21 = sadd.s32 %s20, 1
    %s22 = scalar_select %p19, %s20, %s21
    %p25 = pneg %p19
    %p26 = scmp.eq.s32.totalorder %s10, 1
    %p27 = por %p25, %p26
    %p28 = scmp.ne.s32.totalorder %s20, %s23
    %p29 = scmp.eq.s32.totalorder %s10, 0
    %p30 = por %p28, %p29
    %p31 = scmp.ne.s32.totalorder %s20, %s23
    %p32 = scmp.eq.s32.totalorder %s15, 1
    %p33 = por %p31, %p32
    %p34 = scmp.ne.s32.totalorder %s23, %s24
    %p35 = scmp.eq.s32.totalorder %s15, 0
    %p36 = por %p34, %p35
    %p37 = scmp.ne.s32.totalorder %s23, %s24
    %p38 = scmp.eq.s32.totalorder %s16, 1
    %p39 = por %p37, %p38
    %p41 = scmp.ne.s32.totalorder %s24, %s40
    %p42 = scmp.eq.s32.totalorder %s16, 0
    %p43 = por %p41, %p42
    %s45 = sadd.s32 %s44, 1
    %p48 = scmp.eq.s32.totalorder %s10, 1
    %p49 = scmp.ne.s32.totalorder %s44, %s46
    %p50 = scmp.eq.s32.totalorder %s10, 0
    %p51 = por %p49, %p50
    %p52 = scmp.ne.s32.totalorder %s44, %s46
    %p53 = scmp.eq.s32.totalorder %s15, 1
    %p54 = por %p52, %p53
    %p55 = scmp.ne.s32.totalorder %s46, %s47
    %p56 = scmp.eq.s32.totalorder %s15, 0
    %p57 = por %p55, %p56
    %p58 = scmp.ne.s32.totalorder %s46, %s47
    %p59 = scmp.eq.s32.totalorder %s16, 1
    %p60 = por %p58, %p59
    %p62 = scmp.ne.s32.totalorder %s47, %s61
    %p63 = scmp.eq.s32.totalorder %s16, 0
    %p64 = por %p62, %p63
    %s66 = sadd.s32 %s65, 1
    %p69 = scmp.eq.s32.totalorder %s10, 1
    %p70 = scmp.ne.s32.totalorder %s65, %s67
    %p71 = scmp.eq.s32.totalorder %s10, 0
    %p72 = por %p70, %p71
    %p73 = scmp.ne.s32.totalorder %s65, %s67
    %p74 = scmp.eq.s32.totalorder %s15, 1
    %p75 = por %p73, %p74
    %p76 = scmp.ne.s32.totalorder %s67, %s68
    %p77 = scmp.eq.s32.totalorder %s15, 0
    %p78 = por %p76, %p77
    %p79 = scmp.ne.s32.totalorder %s67, %s68
    %p80 = scmp.eq.s32.totalorder %s16, 1
    %p81 = por %p79, %p80
    %p83 = scmp.ne.s32.totalorder %s68, %s82
    %p84 = scmp.eq.s32.totalorder %s16, 0
    %p85 = por %p83, %p84
    %s86 = ssub.s32 %s10, %s17
    %p87 = scmp.eq.s32.totalorder %s86, 0
    %s89 = sadd.s32 %s88, 1
    %s90 = scalar_select %p87, %s88, %s89
    %p93 = pneg %p87
    %p94 = scmp.eq.s32.totalorder %s10, 1
    %p95 = por %p93, %p94
    %p96 = scmp.ne.s32.totalorder %s88, %s91
    %p97 = scmp.eq.s32.totalorder %s10, 0
    %p98 = por %p96, %p97
    %p99 = scmp.ne.s32.totalorder %s88, %s91
    %p100 = scmp.eq.s32.totalorder %s15, 1
    %p101 = por %p99, %p100
    %p102 = scmp.ne.s32.totalorder %s91, %s92
    %p103 = scmp.eq.s32.totalorder %s15, 0
    %p104 = por %p102, %p103
    %p105 = scmp.ne.s32.totalorder %s91, %s92
    %p106 = scmp.eq.s32.totalorder %s16, 1
    %p107 = por %p105, %p106
    %p109 = scmp.ne.s32.totalorder %s92, %s108
    %p110 = scmp.eq.s32.totalorder %s16, 0
    %p111 = por %p109, %p110
    %s112 = ssub.s32 %s10, %s17
    %p113 = scmp.eq.s32.totalorder %s112, 0
    %s115 = sadd.s32 %s114, 1
    %s116 = scalar_select %p113, %s114, %s115
    %p119 = pneg %p113
    %p120 = scmp.eq.s32.totalorder %s10, 1
    %p121 = por %p119, %p120
    %p122 = scmp.ne.s32.totalorder %s114, %s117
    %p123 = scmp.eq.s32.totalorder %s10, 0
    %p124 = por %p122, %p123
    %p125 = scmp.ne.s32.totalorder %s114, %s117
    %p126 = scmp.eq.s32.totalorder %s15, 1
    %p127 = por %p125, %p126
    %p128 = scmp.ne.s32.totalorder %s117, %s118
    %p129 = scmp.eq.s32.totalorder %s15, 0
    %p130 = por %p128, %p129
    %p131 = scmp.ne.s32.totalorder %s117, %s118
    %p132 = scmp.eq.s32.totalorder %s16, 1
    %p133 = por %p131, %p132
    %p135 = scmp.ne.s32.totalorder %s118, %s134
    %p136 = scmp.eq.s32.totalorder %s16, 0
    %p137 = por %p135, %p136
    %p138 = scmp.le.s32.totalorder 1, %s10
    %p139 = scmp.lt.s32.totalorder %s10, 3
    %p140 = pnand %p138, %p139
    %p141 = pneg %p140
    // Predicated region
    $region9: #{vit_forward.10} parent=5 // pred_check
      _
    $region10: #{vit_forward.10} parent=5 // pred_check_branch
      %143 = sbr.rel (%p140) target = $region12
    $region11: #{vit_forward.10} parent=5 // pred_region
      %s144 = ssub.s32 %s10, 1
      // Predicated region
      $region13: #{vit_forward.10} parent=11 // pred_check
        %p145 = pneg %p57
      $region14: #{vit_forward.10} parent=11 // pred_check_branch
        %147 = sbr.rel (%p145) target = $region16
      $region15: #{vit_forward.10} parent=11 // pred_region
        _
      $region16: #{vit_forward.10} parent=11 // pred_fallthru
        _
      // Predicated region
      $region17: #{vit_forward.10} parent=11 // pred_check
        %p148 = pneg %p78
      $region18: #{vit_forward.10} parent=11 // pred_check_branch
        %150 = sbr.rel (%p148) target = $region20
      $region19: #{vit_forward.10} parent=11 // pred_region
        _
      $region20: #{vit_forward.10} parent=11 // pred_fallthru
        _
    $region12: #{vit_forward.10} parent=5 // pred_fallthru
      _
    %p151 = scmp.lt.s32.totalorder %s10, 2
    // Predicated region
    $region21: #{vit_forward.10} parent=5 // pred_check
      %p152 = pneg %p151
    $region22: #{vit_forward.10} parent=5 // pred_check_branch
      %154 = sbr.rel (%p152) target = $region24
    $region23: #{vit_forward.10} parent=5 // pred_region
      // Predicated region
      $region25: #{vit_forward.10} parent=23 // pred_check
        %p155 = pneg %p30
      $region26: #{vit_forward.10} parent=23 // pred_check_branch
        %157 = sbr.rel (%p155) target = $region28
      $region27: #{vit_forward.10} parent=23 // pred_region
        %p158 = scmp.lt.s32.totalorder %s10, 1
        %s159 = scalar_select %p158, %s10, 1
        %s160 = smul.addr %s159, 3
        %s161 = smul.addr %s160, 8
        %s162 = scalar_lea.vmem %s0, %s161
      $region28: #{vit_forward.10} parent=23 // pred_fallthru
        _
      // Predicated region
      $region29: #{vit_forward.10} parent=23 // pred_check
        %p163 = pneg %p98
      $region30: #{vit_forward.10} parent=23 // pred_check_branch
        %165 = sbr.rel (%p163) target = $region32
      $region31: #{vit_forward.10} parent=23 // pred_region
        %p166 = scmp.lt.s32.totalorder %s10, 1
        %s167 = scalar_select %p166, %s10, 1
        %s168 = smul.addr %s167, 3
        %s169 = smul.addr %s168, 8
        %s170 = scalar_lea.vmem %s3, %s169
      $region32: #{vit_forward.10} parent=23 // pred_fallthru
        _
    $region24: #{vit_forward.10} parent=5 // pred_fallthru
      _
    %p171 = scmp.le.s32.totalorder 1, %s10
    %p172 = scmp.lt.s32.totalorder %s10, 3
    %p173 = pnand %p171, %p172
    %p174 = pneg %p173
    // Predicated region
    $region33: #{vit_forward.10} parent=5 // pred_check
      _
    $region34: #{vit_forward.10} parent=5 // pred_check_branch
      %176 = sbr.rel (%p173) target = $region36
    $region35: #{vit_forward.10} parent=5 // pred_region
      %s177 = ssub.s32 %s10, 1
      %p178 = scmp.lt.s32.totalorder %s15, 1
      %s179 = scalar_select %p178, %s15, 1
      %s180 = smul.addr %s179, 3
      %s181 = smul.addr %s180, 8
      %s182 = scalar_lea.vmem %s0, %s181
      %p183 = pneg %p36
      %p184 = pneg %p33
      %p185 = pneg %p57
      %p186 = pneg %p54
      %p187 = pneg %p78
      %p188 = pneg %p75
      %p189 = scmp.lt.s32.totalorder %s15, 1
      %s190 = scalar_select %p189, %s15, 1
      %s191 = smul.addr %s190, 3
      %s192 = smul.addr %s191, 8
      %s193 = scalar_lea.vmem %s3, %s192
      %p194 = pneg %p104
      %p195 = pneg %p101
      %p196 = pneg %p130
      %p197 = pneg %p127
      %p198 = scmp.lt.s32.totalorder %s15, 1
      %s199 = scalar_select %p198, %s15, 1
      %s200 = smul.addr %s199, 3
      %s201 = smul.addr %s200, 8
      %s202 = scalar_lea.vmem %s4, %s201
      %p203 = scmp.lt.s32.totalorder %s15, 1
      %s204 = scalar_select %p203, %s15, 1
      %s205 = smul.addr %s204, 3
      %s206 = smul.addr %s205, 8
      %s207 = scalar_lea.vmem %s0, %s206
      %p208 = scmp.lt.s32.totalorder %s15, 1
      %s209 = scalar_select %p208, %s15, 1
      %s210 = smul.addr %s209, 3
      %s211 = smul.addr %s210, 8
      %s212 = scalar_lea.vmem %s3, %s211
      %p213 = scmp.lt.s32.totalorder %s15, 1
      %s214 = scalar_select %p213, %s15, 1
      %s215 = smul.addr %s214, 3
      %s216 = smul.addr %s215, 8
      %s217 = scalar_lea.vmem %s4, %s216
      %v219 = vld [vmem:[%s207] sm:$0xff]
      %v220 = vld [vmem:[%s207 + $0x8] sm:$0xff]
      %v221 = vld [vmem:[%s207 + $0x10] sm:$0xff]
      %v222 = vld [vmem:[%s1] sm:$0xff]
      %v223 = vld [vmem:[%s1 + $0x8] sm:$0xff]
      %v224 = vld [vmem:[%s1 + $0x10] sm:$0xff]
      %v225 = vld [vmem:[%s1 + $0x18] sm:$0xff]
      %v226 = vpack.c.bf16 %v223, %v222
      %v227 = vpack.c.bf16 %v225, %v224
      %v228 = vlaneseq
      %v229 = vand.u32 %v228, 127
      %vm230 = vcmp.lt.s32.totalorder %v229, 17
      %v231 = vpack.c.bf16 %v220, %v219
      %v232 = vpack.c.bf16 %v221, %v221
      %236 = vrot.lane.b32.xlu0 %v219, 96
      %v237 = vpop.permute.xlu0 %236
      %238 = vrot.lane.b32.xlu0 %v220, 96
      %v239 = vpop.permute.xlu0 %238
      %240 = vrot.lane.b32.xlu0 %v221, 96
      %v241 = vpop.permute.xlu0 %240
      %vm242 = vcmask 64512
      %v243 = vsel %vm242, %v219, 0
      %v245 = vsel %vm242, %v220, 0
      %v247 = vsel %vm242, %v221, 0
      %v249 = vsel %vm242, %v237, 0
      %v251 = vsel %vm242, %v239, 0
      %v253 = vsel %vm242, %v241, 0
      %255 = vmatprep.subr.mxu0 0.0
      %256 = vmatpush1.xpose.msra.mxu0 %v249
      %257 = vmatprep.subr.mxu0 0.0
      %258 = vmatpush1.xpose.msra.mxu0 %v251
      %259 = vmatprep.subr.mxu0 0.0
      %260 = vmatpush1.xpose.msra.mxu0 %v253
      %261 = vmatprep.subr.mxu0 0.0
      %262 = vmatpush1.xpose.msra.mxu0 0.0
      %263 = vmatprep.subr.mxu0 0.0
      %264 = vmatpush1.xpose.msra.mxu0 0.0
      %265 = vmatprep.subr.mxu0 0.0
      %266 = vmatpush1.xpose.msra.mxu0 0.0
      %267 = vmatprep.subr.mxu0 0.0
      %268 = vmatpush1.xpose.msra.mxu0 0.0
      %269 = vmatprep.subr.mxu0 0.0
      %270 = vmatpush1.xpose.msra.mxu0 0.0
      %271 = vmatprep.subr.mxu0 0.0
      %272 = vmatpush1.xpose.msra.mxu0 0.0
      %273 = vmatprep.subr.mxu0 0.0
      %274 = vmatpush1.xpose.msra.mxu0 0.0
      %275 = vmatprep.subr.mxu0 0.0
      %276 = vmatpush1.xpose.msra.mxu0 0.0
      %277 = vmatprep.subr.mxu0 0.0
      %278 = vmatpush1.xpose.msra.mxu0 0.0
      %279 = vmatprep.subr.mxu0 0.0
      %280 = vmatpush1.xpose.msra.mxu0 0.0
      %281 = vmatprep.subr.mxu0 0.0
      %282 = vmatpush1.xpose.msra.mxu0 0.0
      %283 = vmatprep.subr.mxu0 0.0
      %284 = vmatpush1.xpose.msra.mxu0 0.0
      %285 = vmatprep.subr.mxu0 0.0
      %286 = vmatpush1.xpose.msra.mxu0 0.0
      %287 = vmatprep.subr.mxu0 0.0
      %288 = vmatpush1.xpose.msra.mxu0 0.0
      %289 = vmatprep.subr.mxu0 0.0
      %290 = vmatpush1.xpose.msra.mxu0 0.0
      %291 = vmatprep.subr.mxu0 0.0
      %292 = vmatpush1.xpose.msra.mxu0 0.0
      %293 = vmatprep.subr.mxu0 0.0
      %294 = vmatpush1.xpose.msra.mxu0 0.0
      %295 = vmatprep.subr.mxu0 0.0
      %296 = vmatpush1.xpose.msra.mxu0 0.0
      %297 = vmatprep.subr.mxu0 0.0
      %298 = vmatpush1.xpose.msra.mxu0 0.0
      %299 = vmatprep.subr.mxu0 0.0
      %300 = vmatpush1.xpose.msra.mxu0 0.0
      %301 = vmatprep.subr.mxu0 0.0
      %302 = vmatpush1.xpose.msra.mxu0 0.0
      %303 = vmatprep.subr.mxu0 0.0
      %304 = vmatpush1.xpose.msra.mxu0 0.0
      %305 = vmatprep.subr.mxu0 0.0
      %306 = vmatpush1.xpose.msra.mxu0 0.0
      %307 = vmatprep.subr.mxu0 0.0
      %308 = vmatpush1.xpose.msra.mxu0 0.0
      %309 = vmatprep.subr.mxu0 0.0
      %310 = vmatpush1.xpose.msra.mxu0 0.0
      %311 = vmatprep.subr.mxu0 0.0
      %312 = vmatpush1.xpose.msra.mxu0 0.0
      %313 = vmatprep.subr.mxu0 0.0
      %314 = vmatpush1.xpose.msra.mxu0 0.0
      %315 = vmatprep.subr.mxu0 0.0
      %316 = vmatpush1.xpose.msra.mxu0 0.0
      %317 = vmatprep.subr.mxu0 0.0
      %318 = vmatpush1.xpose.msra.mxu0 0.0
      %319 = vmatprep.mubr.f32.mxu0 0.0
      %320 = vmatmul.mubr.f32.gmra.mrb[0].mxu0 %v243
      %v321 = vpop.f32.mrb[0].mxu0
      %v322 = vadd.f32 0.0, %v321
      %v323 = vpop.f32.mrb[0].mxu0
      %324 = vmatprep.mubr.f32.mxu0 0.0
      %325 = vmatmul.mubr.f32.gmra.mrb[0].mxu0 %v245
      %v326 = vpop.f32.mrb[0].mxu0
      %v327 = vadd.f32 0.0, %v326
      %v328 = vpop.f32.mrb[0].mxu0
      %329 = vmatprep.mubr.f32.mxu0 0.0
      %330 = vmatmul.mubr.f32.gmra.mrb[0].mxu0 %v247
      %v331 = vpop.f32.mrb[0].mxu0
      %v332 = vadd.f32 0.0, %v331
      %v333 = vpop.f32.mrb[0].mxu0
      %334 = vdwg.mxu0
      %v335 = vmul.f32 %v322, 0.35355338
      %v336 = vmul.f32 %v327, 0.35355338
      %v337 = vmul.f32 %v332, 0.35355338
      %v338 = vsel %vm230, %v335, -1e+30
      %v339 = vsel %vm230, %v336, -1e+30
      %v340 = vsel %vm230, %v337, -1e+30
      %vm341 = vcmask 195584
      %v342 = vsel %vm341, %v338, -inf
      %343 = vmax.xlane.f32.xlu0 %v342
      %v344 = vpop.xlane.xlu0 %343
      %v345 = vsel %vm341, %v339, -inf
      %346 = vmax.xlane.f32.xlu0 %v345
      %v347 = vpop.xlane.xlu0 %346
      %v348 = vsel %vm341, %v340, -inf
      %349 = vmax.xlane.f32.xlu0 %v348
      %v350 = vpop.xlane.xlu0 %349
      %v351 = vsub.f32 %v338, %v344
      %v352 = vsub.f32 %v339, %v347
      %v353 = vsub.f32 %v340, %v350
      %v354 = vmul.f32 %v351, 1.442695
      %v355 = vpow.pop %v354
      %v356 = vmul.f32 %v352, 1.442695
      %v357 = vpow.pop %v356
      %v358 = vmul.f32 %v353, 1.442695
      %v359 = vpow.pop %v358
      %v360 = vsel %vm341, %v355, 0.0
      %361 = vadd.xlane.f32.xlu0 %v360
      %v362 = vpop.xlane.xlu0 %361
      %v363 = vsel %vm341, %v357, 0.0
      %364 = vadd.xlane.f32.xlu0 %v363
      %v365 = vpop.xlane.xlu0 %364
      %v366 = vsel %vm341, %v359, 0.0
      %367 = vadd.xlane.f32.xlu0 %v366
      %v368 = vpop.xlane.xlu0 %367
      %v369 = vrcp.pop %v362
      %v370 = vrcp.pop %v365
      %v371 = vrcp.pop %v368
      %v372 = vmul.f32 %v355, %v369
      %v373 = vmul.f32 %v357, %v370
      %v374 = vmul.f32 %v359, %v371
      %v375 = vpack.c.bf16 %v373, %v372
      %v376 = vpack.c.bf16 %v374, %v374
      %379 = vrot.lane.b32.xlu0 %v231, 64
      %v380 = vpop.permute.xlu0 %379
      %381 = vrot.lane.b32.xlu0 %v232, 64
      %v382 = vpop.permute.xlu0 %381
      %v385 = vsel %vm341, %v375, 0
      %v388 = vsel %vm341, %v376, 0
      %vm390 = vcmask 1043456
      %v392 = vsel %vm390, %v382, 0
      %394 = vmatprep.subr.bf16.mxu0 0
      %395 = vmatpush1.bf16.msra.mxu0 %v380
      %396 = vmatprep.subr.bf16.mxu0 0
      %397 = vmatpush1.bf16.msra.mxu0 %v392
      %398 = vmatprep.subr.bf16.mxu0 0
      %399 = vmatpush1.bf16.msra.mxu0 0
      %400 = vmatprep.subr.bf16.mxu0 0
      %401 = vmatpush1.bf16.msra.mxu0 0
      %402 = vmatprep.subr.bf16.mxu0 0
      %403 = vmatpush1.bf16.msra.mxu0 0
      %404 = vmatprep.subr.bf16.mxu0 0
      %405 = vmatpush1.bf16.msra.mxu0 0
      %406 = vmatprep.subr.bf16.mxu0 0
      %407 = vmatpush1.bf16.msra.mxu0 0
      %408 = vmatprep.subr.bf16.mxu0 0
      %409 = vmatpush1.bf16.msra.mxu0 0
      %410 = vmatprep.subr.bf16.mxu0 0
      %411 = vmatpush1.bf16.msra.mxu0 0
      %412 = vmatprep.subr.bf16.mxu0 0
      %413 = vmatpush1.bf16.msra.mxu0 0
      %414 = vmatprep.subr.bf16.mxu0 0
      %415 = vmatpush1.bf16.msra.mxu0 0
      %416 = vmatprep.subr.bf16.mxu0 0
      %417 = vmatpush1.bf16.msra.mxu0 0
      %418 = vmatprep.subr.bf16.mxu0 0
      %419 = vmatpush1.bf16.msra.mxu0 0
      %420 = vmatprep.subr.bf16.mxu0 0
      %421 = vmatpush1.bf16.msra.mxu0 0
      %422 = vmatprep.subr.bf16.mxu0 0
      %423 = vmatpush1.bf16.msra.mxu0 0
      %424 = vmatprep.subr.bf16.mxu0 0
      %425 = vmatpush1.bf16.msra.mxu0 0
      %426 = vmatprep.mubr.bf16.mxu0 0
      %427 = vmatmul.mubr.bf16.gmra.mrb[0].mxu0 %v385
      %v428 = vpop.f32.mrb[0].mxu0
      %v429 = vadd.f32 0.0, %v428
      %v430 = vpop.f32.mrb[0].mxu0
      %v431 = vpop.f32.mrb[0].mxu0
      %v432 = vadd.f32 0.0, %v431
      %v433 = vpop.f32.mrb[0].mxu0
      %434 = vmatprep.mubr.bf16.mxu0 0
      %435 = vmatmul.mubr.bf16.gmra.mrb[0].mxu0 %v388
      %v436 = vpop.f32.mrb[0].mxu0
      %v437 = vadd.f32 0.0, %v436
      %v438 = vpop.f32.mrb[0].mxu0
      %v439 = vpop.f32.mrb[0].mxu0
      %v440 = vpop.f32.mrb[0].mxu0
      %441 = vdwg.mxu0
      %v442 = vpack.c.bf16 %v432, %v429
      %v443 = vpack.c.bf16 %v437, %v437
      %444 = vrot.lane.b32.xlu0 %v219, 120
      %v445 = vpop.permute.xlu0 %444
      %446 = vrot.lane.b32.xlu0 %v220, 120
      %v447 = vpop.permute.xlu0 %446
      %448 = vrot.lane.b32.xlu0 %v221, 120
      %v449 = vpop.permute.xlu0 %448
      %450 = vrot.lane.b32.xlu0 %v219, 88
      %v451 = vpop.permute.xlu0 %450
      %452 = vrot.lane.b32.xlu0 %v220, 88
      %v453 = vpop.permute.xlu0 %452
      %454 = vrot.lane.b32.xlu0 %v221, 88
      %v455 = vpop.permute.xlu0 %454
      %v456 = vsel %vm242, %v445, 0
      %v458 = vsel %vm242, %v447, 0
      %v460 = vsel %vm242, %v449, 0
      %v462 = vsel %vm242, %v451, 0
      %v464 = vsel %vm242, %v453, 0
      %v466 = vsel %vm242, %v455, 0
      %468 = vmatprep.subr.mxu0 0.0
      %469 = vmatpush1.xpose.msra.mxu0 %v462
      %470 = vmatprep.subr.mxu0 0.0
      %471 = vmatpush1.xpose.msra.mxu0 %v464
      %472 = vmatprep.subr.mxu0 0.0
      %473 = vmatpush1.xpose.msra.mxu0 %v466
      %474 = vmatprep.subr.mxu0 0.0
      %475 = vmatpush1.xpose.msra.mxu0 0.0
      %476 = vmatprep.subr.mxu0 0.0
      %477 = vmatpush1.xpose.msra.mxu0 0.0
      %478 = vmatprep.subr.mxu0 0.0
      %479 = vmatpush1.xpose.msra.mxu0 0.0
      %480 = vmatprep.subr.mxu0 0.0
      %481 = vmatpush1.xpose.msra.mxu0 0.0
      %482 = vmatprep.subr.mxu0 0.0
      %483 = vmatpush1.xpose.msra.mxu0 0.0
      %484 = vmatprep.subr.mxu0 0.0
      %485 = vmatpush1.xpose.msra.mxu0 0.0
      %486 = vmatprep.subr.mxu0 0.0
      %487 = vmatpush1.xpose.msra.mxu0 0.0
      %488 = vmatprep.subr.mxu0 0.0
      %489 = vmatpush1.xpose.msra.mxu0 0.0
      %490 = vmatprep.subr.mxu0 0.0
      %491 = vmatpush1.xpose.msra.mxu0 0.0
      %492 = vmatprep.subr.mxu0 0.0
      %493 = vmatpush1.xpose.msra.mxu0 0.0
      %494 = vmatprep.subr.mxu0 0.0
      %495 = vmatpush1.xpose.msra.mxu0 0.0
      %496 = vmatprep.subr.mxu0 0.0
      %497 = vmatpush1.xpose.msra.mxu0 0.0
      %498 = vmatprep.subr.mxu0 0.0
      %499 = vmatpush1.xpose.msra.mxu0 0.0
      %500 = vmatprep.subr.mxu0 0.0
      %501 = vmatpush1.xpose.msra.mxu0 0.0
      %502 = vmatprep.subr.mxu0 0.0
      %503 = vmatpush1.xpose.msra.mxu0 0.0
      %504 = vmatprep.subr.mxu0 0.0
      %505 = vmatpush1.xpose.msra.mxu0 0.0
      %506 = vmatprep.subr.mxu0 0.0
      %507 = vmatpush1.xpose.msra.mxu0 0.0
      %508 = vmatprep.subr.mxu0 0.0
      %509 = vmatpush1.xpose.msra.mxu0 0.0
      %510 = vmatprep.subr.mxu0 0.0
      %511 = vmatpush1.xpose.msra.mxu0 0.0
      %512 = vmatprep.subr.mxu0 0.0
      %513 = vmatpush1.xpose.msra.mxu0 0.0
      %514 = vmatprep.subr.mxu0 0.0
      %515 = vmatpush1.xpose.msra.mxu0 0.0
      %516 = vmatprep.subr.mxu0 0.0
      %517 = vmatpush1.xpose.msra.mxu0 0.0
      %518 = vmatprep.subr.mxu0 0.0
      %519 = vmatpush1.xpose.msra.mxu0 0.0
      %520 = vmatprep.subr.mxu0 0.0
      %521 = vmatpush1.xpose.msra.mxu0 0.0
      %522 = vmatprep.subr.mxu0 0.0
      %523 = vmatpush1.xpose.msra.mxu0 0.0
      %524 = vmatprep.subr.mxu0 0.0
      %525 = vmatpush1.xpose.msra.mxu0 0.0
      %526 = vmatprep.subr.mxu0 0.0
      %527 = vmatpush1.xpose.msra.mxu0 0.0
      %528 = vmatprep.subr.mxu0 0.0
      %529 = vmatpush1.xpose.msra.mxu0 0.0
      %530 = vmatprep.subr.mxu0 0.0
      %531 = vmatpush1.xpose.msra.mxu0 0.0
      %532 = vmatprep.mubr.f32.mxu0 0.0
      %533 = vmatmul.mubr.f32.gmra.mrb[0].mxu0 %v456
      %v534 = vpop.f32.mrb[0].mxu0
      %v535 = vadd.f32 0.0, %v534
      %v536 = vpop.f32.mrb[0].mxu0
      %537 = vmatprep.mubr.f32.mxu0 0.0
      %538 = vmatmul.mubr.f32.gmra.mrb[0].mxu0 %v458
      %v539 = vpop.f32.mrb[0].mxu0
      %v540 = vadd.f32 0.0, %v539
      %v541 = vpop.f32.mrb[0].mxu0
      %542 = vmatprep.mubr.f32.mxu0 0.0
      %543 = vmatmul.mubr.f32.gmra.mrb[0].mxu0 %v460
      %v544 = vpop.f32.mrb[0].mxu0
      %v545 = vadd.f32 0.0, %v544
      %v546 = vpop.f32.mrb[0].mxu0
      %547 = vdwg.mxu0
      %v548 = vmul.f32 %v535, 0.35355338
      %v549 = vmul.f32 %v540, 0.35355338
      %v550 = vmul.f32 %v545, 0.35355338
      %v551 = vsel %vm230, %v548, -1e+30
      %v552 = vsel %vm230, %v549, -1e+30
      %v553 = vsel %vm230, %v550, -1e+30
      %v554 = vsel %vm341, %v551, -inf
      %555 = vmax.xlane.f32.xlu0 %v554
      %v556 = vpop.xlane.xlu0 %555
      %v557 = vsel %vm341, %v552, -inf
      %558 = vmax.xlane.f32.xlu0 %v557
      %v559 = vpop.xlane.xlu0 %558
      %v560 = vsel %vm341, %v553, -inf
      %561 = vmax.xlane.f32.xlu0 %v560
      %v562 = vpop.xlane.xlu0 %561
      %v563 = vsub.f32 %v551, %v556
      %v564 = vsub.f32 %v552, %v559
      %v565 = vsub.f32 %v553, %v562
      %v566 = vmul.f32 %v563, 1.442695
      %v567 = vpow.pop %v566
      %v568 = vmul.f32 %v564, 1.442695
      %v569 = vpow.pop %v568
      %v570 = vmul.f32 %v565, 1.442695
      %v571 = vpow.pop %v570
      %v572 = vsel %vm341, %v567, 0.0
      %573 = vadd.xlane.f32.xlu0 %v572
      %v574 = vpop.xlane.xlu0 %573
      %v575 = vsel %vm341, %v569, 0.0
      %576 = vadd.xlane.f32.xlu0 %v575
      %v577 = vpop.xlane.xlu0 %576
      %v578 = vsel %vm341, %v571, 0.0
      %579 = vadd.xlane.f32.xlu0 %v578
      %v580 = vpop.xlane.xlu0 %579
      %v581 = vrcp.pop %v574
      %v582 = vrcp.pop %v577
      %v583 = vrcp.pop %v580
      %v584 = vmul.f32 %v567, %v581
      %v585 = vmul.f32 %v569, %v582
      %v586 = vmul.f32 %v571, %v583
      %v587 = vpack.c.bf16 %v585, %v584
      %v588 = vpack.c.bf16 %v586, %v586
      %589 = vrot.lane.b32.xlu0 %v231, 56
      %v590 = vpop.permute.xlu0 %589
      %591 = vrot.lane.b32.xlu0 %v232, 56
      %v592 = vpop.permute.xlu0 %591
      %v595 = vsel %vm341, %v587, 0
      %v598 = vsel %vm341, %v588, 0
      %v601 = vsel %vm390, %v592, 0
      %603 = vmatprep.subr.bf16.mxu0 0
      %604 = vmatpush1.bf16.msra.mxu0 %v590
      %605 = vmatprep.subr.bf16.mxu0 0
      %606 = vmatpush1.bf16.msra.mxu0 %v601
      %607 = vmatprep.subr.bf16.mxu0 0
      %608 = vmatpush1.bf16.msra.mxu0 0
      %609 = vmatprep.subr.bf16.mxu0 0
      %610 = vmatpush1.bf16.msra.mxu0 0
      %611 = vmatprep.subr.bf16.mxu0 0
      %612 = vmatpush1.bf16.msra.mxu0 0
      %613 = vmatprep.subr.bf16.mxu0 0
      %614 = vmatpush1.bf16.msra.mxu0 0
      %615 = vmatprep.subr.bf16.mxu0 0
      %616 = vmatpush1.bf16.msra.mxu0 0
      %617 = vmatprep.subr.bf16.mxu0 0
      %618 = vmatpush1.bf16.msra.mxu0 0
      %619 = vmatprep.subr.bf16.mxu0 0
      %620 = vmatpush1.bf16.msra.mxu0 0
      %621 = vmatprep.subr.bf16.mxu0 0
      %622 = vmatpush1.bf16.msra.mxu0 0
      %623 = vmatprep.subr.bf16.mxu0 0
      %624 = vmatpush1.bf16.msra.mxu0 0
      %625 = vmatprep.subr.bf16.mxu0 0
      %626 = vmatpush1.bf16.msra.mxu0 0
      %627 = vmatprep.subr.bf16.mxu0 0
      %628 = vmatpush1.bf16.msra.mxu0 0
      %629 = vmatprep.subr.bf16.mxu0 0
      %630 = vmatpush1.bf16.msra.mxu0 0
      %631 = vmatprep.subr.bf16.mxu0 0
      %632 = vmatpush1.bf16.msra.mxu0 0
      %633 = vmatprep.subr.bf16.mxu0 0
      %634 = vmatpush1.bf16.msra.mxu0 0
      %635 = vmatprep.mubr.bf16.mxu0 0
      %636 = vmatmul.mubr.bf16.gmra.mrb[0].mxu0 %v595
      %v637 = vpop.f32.mrb[0].mxu0
      %v638 = vadd.f32 0.0, %v637
      %v639 = vpop.f32.mrb[0].mxu0
      %v640 = vpop.f32.mrb[0].mxu0
      %v641 = vadd.f32 0.0, %v640
      %v642 = vpop.f32.mrb[0].mxu0
      %643 = vmatprep.mubr.bf16.mxu0 0
      %644 = vmatmul.mubr.bf16.gmra.mrb[0].mxu0 %v598
      %v645 = vpop.f32.mrb[0].mxu0
      %v646 = vadd.f32 0.0, %v645
      %v647 = vpop.f32.mrb[0].mxu0
      %v648 = vpop.f32.mrb[0].mxu0
      %v649 = vpop.f32.mrb[0].mxu0
      %650 = vdwg.mxu0
      %v651 = vpack.c.bf16 %v641, %v638
      %v652 = vpack.c.bf16 %v646, %v646
      %v654 = vrot.slane %v226, 4
      %v656 = vsel %vm242, %v651, 0
      %v659 = vsel %vm242, %v652, 0
      %v662 = vsel %vm390, %v654, 0
      %664 = vmatprep.subr.bf16.mxu0 0
      %665 = vmatpush1.bf16.msra.mxu0 %v662
      %666 = vmatprep.subr.bf16.mxu0 0
      %667 = vmatpush1.bf16.msra.mxu0 0
      %668 = vmatprep.subr.bf16.mxu0 0
      %669 = vmatpush1.bf16.msra.mxu0 0
      %670 = vmatprep.subr.bf16.mxu0 0
      %671 = vmatpush1.bf16.msra.mxu0 0
      %672 = vmatprep.subr.bf16.mxu0 0
      %673 = vmatpush1.bf16.msra.mxu0 0
      %674 = vmatprep.subr.bf16.mxu0 0
      %675 = vmatpush1.bf16.msra.mxu0 0
      %676 = vmatprep.subr.bf16.mxu0 0
      %677 = vmatpush1.bf16.msra.mxu0 0
      %678 = vmatprep.subr.bf16.mxu0 0
      %679 = vmatpush1.bf16.msra.mxu0 0
      %680 = vmatprep.subr.bf16.mxu0 0
      %681 = vmatpush1.bf16.msra.mxu0 0
      %682 = vmatprep.subr.bf16.mxu0 0
      %683 = vmatpush1.bf16.msra.mxu0 0
      %684 = vmatprep.subr.bf16.mxu0 0
      %685 = vmatpush1.bf16.msra.mxu0 0
      %686 = vmatprep.subr.bf16.mxu0 0
      %687 = vmatpush1.bf16.msra.mxu0 0
      %688 = vmatprep.subr.bf16.mxu0 0
      %689 = vmatpush1.bf16.msra.mxu0 0
      %690 = vmatprep.subr.bf16.mxu0 0
      %691 = vmatpush1.bf16.msra.mxu0 0
      %692 = vmatprep.subr.bf16.mxu0 0
      %693 = vmatpush1.bf16.msra.mxu0 0
      %694 = vmatprep.subr.bf16.mxu0 0
      %695 = vmatpush1.bf16.msra.mxu0 0
      %696 = vmatprep.mubr.bf16.mxu0 0
      %697 = vmatmul.mubr.bf16.gmra.mrb[0].mxu0 %v656
      %v698 = vpop.f32.mrb[0].mxu0
      %v699 = vadd.f32 0.0, %v698
      %v700 = vpop.f32.mrb[0].mxu0
      %v701 = vpop.f32.mrb[0].mxu0
      %v702 = vadd.f32 0.0, %v701
      %v703 = vpop.f32.mrb[0].mxu0
      %704 = vmatprep.mubr.bf16.mxu0 0
      %705 = vmatmul.mubr.bf16.gmra.mrb[0].mxu0 %v659
      %v706 = vpop.f32.mrb[0].mxu0
      %v707 = vadd.f32 0.0, %v706
      %v708 = vpop.f32.mrb[0].mxu0
      %v709 = vpop.f32.mrb[0].mxu0
      %v710 = vpop.f32.mrb[0].mxu0
      %711 = vdwg.mxu0
      %v713 = vsel %vm242, %v442, 0
      %v716 = vsel %vm242, %v443, 0
      %v719 = vsel %vm390, %v226, 0
      %721 = vmatprep.subr.bf16.mxu0 0
      %722 = vmatpush1.bf16.msra.mxu0 %v719
      %723 = vmatprep.subr.bf16.mxu0 0
      %724 = vmatpush1.bf16.msra.mxu0 0
      %725 = vmatprep.subr.bf16.mxu0 0
      %726 = vmatpush1.bf16.msra.mxu0 0
      %727 = vmatprep.subr.bf16.mxu0 0
      %728 = vmatpush1.bf16.msra.mxu0 0
      %729 = vmatprep.subr.bf16.mxu0 0
      %730 = vmatpush1.bf16.msra.mxu0 0
      %731 = vmatprep.subr.bf16.mxu0 0
      %732 = vmatpush1.bf16.msra.mxu0 0
      %733 = vmatprep.subr.bf16.mxu0 0
      %734 = vmatpush1.bf16.msra.mxu0 0
      %735 = vmatprep.subr.bf16.mxu0 0
      %736 = vmatpush1.bf16.msra.mxu0 0
      %737 = vmatprep.subr.bf16.mxu0 0
      %738 = vmatpush1.bf16.msra.mxu0 0
      %739 = vmatprep.subr.bf16.mxu0 0
      %740 = vmatpush1.bf16.msra.mxu0 0
      %741 = vmatprep.subr.bf16.mxu0 0
      %742 = vmatpush1.bf16.msra.mxu0 0
      %743 = vmatprep.subr.bf16.mxu0 0
      %744 = vmatpush1.bf16.msra.mxu0 0
      %745 = vmatprep.subr.bf16.mxu0 0
      %746 = vmatpush1.bf16.msra.mxu0 0
      %747 = vmatprep.subr.bf16.mxu0 0
      %748 = vmatpush1.bf16.msra.mxu0 0
      %749 = vmatprep.subr.bf16.mxu0 0
      %750 = vmatpush1.bf16.msra.mxu0 0
      %751 = vmatprep.subr.bf16.mxu0 0
      %752 = vmatpush1.bf16.msra.mxu0 0
      %753 = vmatprep.mubr.bf16.mxu0 0
      %754 = vmatmul.mubr.bf16.gmra.mrb[0].mxu0 %v713
      %v755 = vpop.f32.mrb[0].mxu0
      %v756 = vadd.f32 %v699, %v755
      %v757 = vpop.f32.mrb[0].mxu0
      %v758 = vpop.f32.mrb[0].mxu0
      %v759 = vadd.f32 %v702, %v758
      %v760 = vpop.f32.mrb[0].mxu0
      %761 = vmatprep.mubr.bf16.mxu0 0
      %762 = vmatmul.mubr.bf16.gmra.mrb[0].mxu0 %v716
      %v763 = vpop.f32.mrb[0].mxu0
      %v764 = vadd.f32 %v707, %v763
      %v765 = vpop.f32.mrb[0].mxu0
      %v766 = vpop.f32.mrb[0].mxu0
      %v767 = vpop.f32.mrb[0].mxu0
      %768 = vdwg.mxu0
      %769 = vrot.lane.b32.xlu0 %v219, 112
      %v770 = vpop.permute.xlu0 %769
      %771 = vrot.lane.b32.xlu0 %v220, 112
      %v772 = vpop.permute.xlu0 %771
      %773 = vrot.lane.b32.xlu0 %v221, 112
      %v774 = vpop.permute.xlu0 %773
      %775 = vrot.lane.b32.xlu0 %v219, 80
      %v776 = vpop.permute.xlu0 %775
      %777 = vrot.lane.b32.xlu0 %v220, 80
      %v778 = vpop.permute.xlu0 %777
      %779 = vrot.lane.b32.xlu0 %v221, 80
      %v780 = vpop.permute.xlu0 %779
      %v781 = vsel %vm242, %v770, 0
      %v783 = vsel %vm242, %v772, 0
      %v785 = vsel %vm242, %v774, 0
      %v787 = vsel %vm242, %v776, 0
      %v789 = vsel %vm242, %v778, 0
      %v791 = vsel %vm242, %v780, 0
      %793 = vmatprep.subr.mxu0 0.0
      %794 = vmatpush1.xpose.msra.mxu0 %v787
      %795 = vmatprep.subr.mxu0 0.0
      %796 = vmatpush1.xpose.msra.mxu0 %v789
      %797 = vmatprep.subr.mxu0 0.0
      %798 = vmatpush1.xpose.msra.mxu0 %v791
      %799 = vmatprep.subr.mxu0 0.0
      %800 = vmatpush1.xpose.msra.mxu0 0.0
      %801 = vmatprep.subr.mxu0 0.0
      %802 = vmatpush1.xpose.msra.mxu0 0.0
      %803 = vmatprep.subr.mxu0 0.0
      %804 = vmatpush1.xpose.msra.mxu0 0.0
      %805 = vmatprep.subr.mxu0 0.0
      %806 = vmatpush1.xpose.msra.mxu0 0.0
      %807 = vmatprep.subr.mxu0 0.0
      %808 = vmatpush1.xpose.msra.mxu0 0.0
      %809 = vmatprep.subr.mxu0 0.0
      %810 = vmatpush1.xpose.msra.mxu0 0.0
      %811 = vmatprep.subr.mxu0 0.0
      %812 = vmatpush1.xpose.msra.mxu0 0.0
      %813 = vmatprep.subr.mxu0 0.0
      %814 = vmatpush1.xpose.msra.mxu0 0.0
      %815 = vmatprep.subr.mxu0 0.0
      %816 = vmatpush1.xpose.msra.mxu0 0.0
      %817 = vmatprep.subr.mxu0 0.0
      %818 = vmatpush1.xpose.msra.mxu0 0.0
      %819 = vmatprep.subr.mxu0 0.0
      %820 = vmatpush1.xpose.msra.mxu0 0.0
      %821 = vmatprep.subr.mxu0 0.0
      %822 = vmatpush1.xpose.msra.mxu0 0.0
      %823 = vmatprep.subr.mxu0 0.0
      %824 = vmatpush1.xpose.msra.mxu0 0.0
      %825 = vmatprep.subr.mxu0 0.0
      %826 = vmatpush1.xpose.msra.mxu0 0.0
      %827 = vmatprep.subr.mxu0 0.0
      %828 = vmatpush1.xpose.msra.mxu0 0.0
      %829 = vmatprep.subr.mxu0 0.0
      %830 = vmatpush1.xpose.msra.mxu0 0.0
      %831 = vmatprep.subr.mxu0 0.0
      %832 = vmatpush1.xpose.msra.mxu0 0.0
      %833 = vmatprep.subr.mxu0 0.0
      %834 = vmatpush1.xpose.msra.mxu0 0.0
      %835 = vmatprep.subr.mxu0 0.0
      %836 = vmatpush1.xpose.msra.mxu0 0.0
      %837 = vmatprep.subr.mxu0 0.0
      %838 = vmatpush1.xpose.msra.mxu0 0.0
      %839 = vmatprep.subr.mxu0 0.0
      %840 = vmatpush1.xpose.msra.mxu0 0.0
      %841 = vmatprep.subr.mxu0 0.0
      %842 = vmatpush1.xpose.msra.mxu0 0.0
      %843 = vmatprep.subr.mxu0 0.0
      %844 = vmatpush1.xpose.msra.mxu0 0.0
      %845 = vmatprep.subr.mxu0 0.0
      %846 = vmatpush1.xpose.msra.mxu0 0.0
      %847 = vmatprep.subr.mxu0 0.0
      %848 = vmatpush1.xpose.msra.mxu0 0.0
      %849 = vmatprep.subr.mxu0 0.0
      %850 = vmatpush1.xpose.msra.mxu0 0.0
      %851 = vmatprep.subr.mxu0 0.0
      %852 = vmatpush1.xpose.msra.mxu0 0.0
      %853 = vmatprep.subr.mxu0 0.0
      %854 = vmatpush1.xpose.msra.mxu0 0.0
      %855 = vmatprep.subr.mxu0 0.0
      %856 = vmatpush1.xpose.msra.mxu0 0.0
      %857 = vmatprep.mubr.f32.mxu0 0.0
      %858 = vmatmul.mubr.f32.gmra.mrb[0].mxu0 %v781
      %v859 = vpop.f32.mrb[0].mxu0
      %v860 = vadd.f32 0.0, %v859
      %v861 = vpop.f32.mrb[0].mxu0
      %862 = vmatprep.mubr.f32.mxu0 0.0
      %863 = vmatmul.mubr.f32.gmra.mrb[0].mxu0 %v783
      %v864 = vpop.f32.mrb[0].mxu0
      %v865 = vadd.f32 0.0, %v864
      %v866 = vpop.f32.mrb[0].mxu0
      %867 = vmatprep.mubr.f32.mxu0 0.0
      %868 = vmatmul.mubr.f32.gmra.mrb[0].mxu0 %v785
      %v869 = vpop.f32.mrb[0].mxu0
      %v870 = vadd.f32 0.0, %v869
      %v871 = vpop.f32.mrb[0].mxu0
      %872 = vdwg.mxu0
      %v873 = vmul.f32 %v860, 0.35355338
      %v874 = vmul.f32 %v865, 0.35355338
      %v875 = vmul.f32 %v870, 0.35355338
      %v876 = vsel %vm230, %v873, -1e+30
      %v877 = vsel %vm230, %v874, -1e+30
      %v878 = vsel %vm230, %v875, -1e+30
      %v879 = vsel %vm341, %v876, -inf
      %880 = vmax.xlane.f32.xlu0 %v879
      %v881 = vpop.xlane.xlu0 %880
      %v882 = vsel %vm341, %v877, -inf
      %883 = vmax.xlane.f32.xlu0 %v882
      %v884 = vpop.xlane.xlu0 %883
      %v885 = vsel %vm341, %v878, -inf
      %886 = vmax.xlane.f32.xlu0 %v885
      %v887 = vpop.xlane.xlu0 %886
      %v888 = vsub.f32 %v876, %v881
      %v889 = vsub.f32 %v877, %v884
      %v890 = vsub.f32 %v878, %v887
      %v891 = vmul.f32 %v888, 1.442695
      %v892 = vpow.pop %v891
      %v893 = vmul.f32 %v889, 1.442695
      %v894 = vpow.pop %v893
      %v895 = vmul.f32 %v890, 1.442695
      %v896 = vpow.pop %v895
      %v897 = vsel %vm341, %v892, 0.0
      %898 = vadd.xlane.f32.xlu0 %v897
      %v899 = vpop.xlane.xlu0 %898
      %v900 = vsel %vm341, %v894, 0.0
      %901 = vadd.xlane.f32.xlu0 %v900
      %v902 = vpop.xlane.xlu0 %901
      %v903 = vsel %vm341, %v896, 0.0
      %904 = vadd.xlane.f32.xlu0 %v903
      %v905 = vpop.xlane.xlu0 %904
      %v906 = vrcp.pop %v899
      %v907 = vrcp.pop %v902
      %v908 = vrcp.pop %v905
      %v909 = vmul.f32 %v892, %v906
      %v910 = vmul.f32 %v894, %v907
      %v911 = vmul.f32 %v896, %v908
      %v912 = vpack.c.bf16 %v910, %v909
      %v913 = vpack.c.bf16 %v911, %v911
      %914 = vrot.lane.b32.xlu0 %v231, 48
      %v915 = vpop.permute.xlu0 %914
      %916 = vrot.lane.b32.xlu0 %v232, 48
      %v917 = vpop.permute.xlu0 %916
      %v920 = vsel %vm341, %v912, 0
      %v923 = vsel %vm341, %v913, 0
      %v926 = vsel %vm390, %v917, 0
      %928 = vmatprep.subr.bf16.mxu0 0
      %929 = vmatpush1.bf16.msra.mxu0 %v915
      %930 = vmatprep.subr.bf16.mxu0 0
      %931 = vmatpush1.bf16.msra.mxu0 %v926
      %932 = vmatprep.subr.bf16.mxu0 0
      %933 = vmatpush1.bf16.msra.mxu0 0
      %934 = vmatprep.subr.bf16.mxu0 0
      %935 = vmatpush1.bf16.msra.mxu0 0
      %936 = vmatprep.subr.bf16.mxu0 0
      %937 = vmatpush1.bf16.msra.mxu0 0
      %938 = vmatprep.subr.bf16.mxu0 0
      %939 = vmatpush1.bf16.msra.mxu0 0
      %940 = vmatprep.subr.bf16.mxu0 0
      %941 = vmatpush1.bf16.msra.mxu0 0
      %942 = vmatprep.subr.bf16.mxu0 0
      %943 = vmatpush1.bf16.msra.mxu0 0
      %944 = vmatprep.subr.bf16.mxu0 0
      %945 = vmatpush1.bf16.msra.mxu0 0
      %946 = vmatprep.subr.bf16.mxu0 0
      %947 = vmatpush1.bf16.msra.mxu0 0
      %948 = vmatprep.subr.bf16.mxu0 0
      %949 = vmatpush1.bf16.msra.mxu0 0
      %950 = vmatprep.subr.bf16.mxu0 0
      %951 = vmatpush1.bf16.msra.mxu0 0
      %952 = vmatprep.subr.bf16.mxu0 0
      %953 = vmatpush1.bf16.msra.mxu0 0
      %954 = vmatprep.subr.bf16.mxu0 0
      %955 = vmatpush1.bf16.msra.mxu0 0
      %956 = vmatprep.subr.bf16.mxu0 0
      %957 = vmatpush1.bf16.msra.mxu0 0
      %958 = vmatprep.subr.bf16.mxu0 0
      %959 = vmatpush1.bf16.msra.mxu0 0
      %960 = vmatprep.mubr.bf16.mxu0 0
      %961 = vmatmul.mubr.bf16.gmra.mrb[0].mxu0 %v920
      %v962 = vpop.f32.mrb[0].mxu0
      %v963 = vadd.f32 0.0, %v962
      %v964 = vpop.f32.mrb[0].mxu0
      %v965 = vpop.f32.mrb[0].mxu0
      %v966 = vadd.f32 0.0, %v965
      %v967 = vpop.f32.mrb[0].mxu0
      %968 = vmatprep.mubr.bf16.mxu0 0
      %969 = vmatmul.mubr.bf16.gmra.mrb[0].mxu0 %v923
      %v970 = vpop.f32.mrb[0].mxu0
      %v971 = vadd.f32 0.0, %v970
      %v972 = vpop.f32.mrb[0].mxu0
      %v973 = vpop.f32.mrb[0].mxu0
      %v974 = vpop.f32.mrb[0].mxu0
      %975 = vdwg.mxu0
      %v976 = vpack.c.bf16 %v966, %v963
      %v977 = vpack.c.bf16 %v971, %v971
      %v979 = vsel %vm242, %v976, 0
      %v982 = vsel %vm242, %v977, 0
      %v985 = vsel %vm390, %v227, 0
      %987 = vmatprep.subr.bf16.mxu0 0
      %988 = vmatpush1.bf16.msra.mxu0 %v985
      %989 = vmatprep.subr.bf16.mxu0 0
      %990 = vmatpush1.bf16.msra.mxu0 0
      %991 = vmatprep.subr.bf16.mxu0 0
      %992 = vmatpush1.bf16.msra.mxu0 0
      %993 = vmatprep.subr.bf16.mxu0 0
      %994 = vmatpush1.bf16.msra.mxu0 0
      %995 = vmatprep.subr.bf16.mxu0 0
      %996 = vmatpush1.bf16.msra.mxu0 0
      %997 = vmatprep.subr.bf16.mxu0 0
      %998 = vmatpush1.bf16.msra.mxu0 0
      %999 = vmatprep.subr.bf16.mxu0 0
      %1000 = vmatpush1.bf16.msra.mxu0 0
      %1001 = vmatprep.subr.bf16.mxu0 0
      %1002 = vmatpush1.bf16.msra.mxu0 0
      %1003 = vmatprep.subr.bf16.mxu0 0
      %1004 = vmatpush1.bf16.msra.mxu0 0
      %1005 = vmatprep.subr.bf16.mxu0 0
      %1006 = vmatpush1.bf16.msra.mxu0 0
      %1007 = vmatprep.subr.bf16.mxu0 0
      %1008 = vmatpush1.bf16.msra.mxu0 0
      %1009 = vmatprep.subr.bf16.mxu0 0
      %1010 = vmatpush1.bf16.msra.mxu0 0
      %1011 = vmatprep.subr.bf16.mxu0 0
      %1012 = vmatpush1.bf16.msra.mxu0 0
      %1013 = vmatprep.subr.bf16.mxu0 0
      %1014 = vmatpush1.bf16.msra.mxu0 0
      %1015 = vmatprep.subr.bf16.mxu0 0
      %1016 = vmatpush1.bf16.msra.mxu0 0
      %1017 = vmatprep.subr.bf16.mxu0 0
      %1018 = vmatpush1.bf16.msra.mxu0 0
      %1019 = vmatprep.mubr.bf16.mxu0 0
      %1020 = vmatmul.mubr.bf16.gmra.mrb[0].mxu0 %v979
      %v1021 = vpop.f32.mrb[0].mxu0
      %v1022 = vadd.f32 0.0, %v1021
      %v1023 = vpop.f32.mrb[0].mxu0
      %v1024 = vpop.f32.mrb[0].mxu0
      %v1025 = vadd.f32 0.0, %v1024
      %v1026 = vpop.f32.mrb[0].mxu0
      %1027 = vmatprep.mubr.bf16.mxu0 0
      %1028 = vmatmul.mubr.bf16.gmra.mrb[0].mxu0 %v982
      %v1029 = vpop.f32.mrb[0].mxu0
      %v1030 = vadd.f32 0.0, %v1029
      %v1031 = vpop.f32.mrb[0].mxu0
      %v1032 = vpop.f32.mrb[0].mxu0
      %v1033 = vpop.f32.mrb[0].mxu0
      %1034 = vdwg.mxu0
      %v1035 = vadd.f32 %v756, %v1022
      %v1036 = vadd.f32 %v759, %v1025
      %v1037 = vadd.f32 %v764, %v1030
      %1038 = vrot.lane.b32.xlu0 %v219, 104
      %v1039 = vpop.permute.xlu0 %1038
      %1040 = vrot.lane.b32.xlu0 %v220, 104
      %v1041 = vpop.permute.xlu0 %1040
      %1042 = vrot.lane.b32.xlu0 %v221, 104
      %v1043 = vpop.permute.xlu0 %1042
      %1044 = vrot.lane.b32.xlu0 %v219, 72
      %v1045 = vpop.permute.xlu0 %1044
      %1046 = vrot.lane.b32.xlu0 %v220, 72
      %v1047 = vpop.permute.xlu0 %1046
      %1048 = vrot.lane.b32.xlu0 %v221, 72
      %v1049 = vpop.permute.xlu0 %1048
      %v1050 = vsel %vm242, %v1039, 0
      %v1052 = vsel %vm242, %v1041, 0
      %v1054 = vsel %vm242, %v1043, 0
      %v1056 = vsel %vm242, %v1045, 0
      %v1058 = vsel %vm242, %v1047, 0
      %v1060 = vsel %vm242, %v1049, 0
      %1062 = vmatprep.subr.mxu0 0.0
      %1063 = vmatpush1.xpose.msra.mxu0 %v1056
      %1064 = vmatprep.subr.mxu0 0.0
      %1065 = vmatpush1.xpose.msra.mxu0 %v1058
      %1066 = vmatprep.subr.mxu0 0.0
      %1067 = vmatpush1.xpose.msra.mxu0 %v1060
      %1068 = vmatprep.subr.mxu0 0.0
      %1069 = vmatpush1.xpose.msra.mxu0 0.0
      %1070 = vmatprep.subr.mxu0 0.0
      %1071 = vmatpush1.xpose.msra.mxu0 0.0
      %1072 = vmatprep.subr.mxu0 0.0
      %1073 = vmatpush1.xpose.msra.mxu0 0.0
      %1074 = vmatprep.subr.mxu0 0.0
      %1075 = vmatpush1.xpose.msra.mxu0 0.0
      %1076 = vmatprep.subr.mxu0 0.0
      %1077 = vmatpush1.xpose.msra.mxu0 0.0
      %1078 = vmatprep.subr.mxu0 0.0
      %1079 = vmatpush1.xpose.msra.mxu0 0.0
      %1080 = vmatprep.subr.mxu0 0.0
      %1081 = vmatpush1.xpose.msra.mxu0 0.0
      %1082 = vmatprep.subr.mxu0 0.0
      %1083 = vmatpush1.xpose.msra.mxu0 0.0
      %1084 = vmatprep.subr.mxu0 0.0
      %1085 = vmatpush1.xpose.msra.mxu0 0.0
      %1086 = vmatprep.subr.mxu0 0.0
      %1087 = vmatpush1.xpose.msra.mxu0 0.0
      %1088 = vmatprep.subr.mxu0 0.0
      %1089 = vmatpush1.xpose.msra.mxu0 0.0
      %1090 = vmatprep.subr.mxu0 0.0
      %1091 = vmatpush1.xpose.msra.mxu0 0.0
      %1092 = vmatprep.subr.mxu0 0.0
      %1093 = vmatpush1.xpose.msra.mxu0 0.0
      %1094 = vmatprep.subr.mxu0 0.0
      %1095 = vmatpush1.xpose.msra.mxu0 0.0
      %1096 = vmatprep.subr.mxu0 0.0
      %1097 = vmatpush1.xpose.msra.mxu0 0.0
      %1098 = vmatprep.subr.mxu0 0.0
      %1099 = vmatpush1.xpose.msra.mxu0 0.0
      %1100 = vmatprep.subr.mxu0 0.0
      %1101 = vmatpush1.xpose.msra.mxu0 0.0
      %1102 = vmatprep.subr.mxu0 0.0
      %1103 = vmatpush1.xpose.msra.mxu0 0.0
      %1104 = vmatprep.subr.mxu0 0.0
      %1105 = vmatpush1.xpose.msra.mxu0 0.0
      %1106 = vmatprep.subr.mxu0 0.0
      %1107 = vmatpush1.xpose.msra.mxu0 0.0
      %1108 = vmatprep.subr.mxu0 0.0
      %1109 = vmatpush1.xpose.msra.mxu0 0.0
      %1110 = vmatprep.subr.mxu0 0.0
      %1111 = vmatpush1.xpose.msra.mxu0 0.0
      %1112 = vmatprep.subr.mxu0 0.0
      %1113 = vmatpush1.xpose.msra.mxu0 0.0
      %1114 = vmatprep.subr.mxu0 0.0
      %1115 = vmatpush1.xpose.msra.mxu0 0.0
      %1116 = vmatprep.subr.mxu0 0.0
      %1117 = vmatpush1.xpose.msra.mxu0 0.0
      %1118 = vmatprep.subr.mxu0 0.0
      %1119 = vmatpush1.xpose.msra.mxu0 0.0
      %1120 = vmatprep.subr.mxu0 0.0
      %1121 = vmatpush1.xpose.msra.mxu0 0.0
      %1122 = vmatprep.subr.mxu0 0.0
      %1123 = vmatpush1.xpose.msra.mxu0 0.0
      %1124 = vmatprep.subr.mxu0 0.0
      %1125 = vmatpush1.xpose.msra.mxu0 0.0
      %1126 = vmatprep.mubr.f32.mxu0 0.0
      %1127 = vmatmul.mubr.f32.gmra.mrb[0].mxu0 %v1050
      %v1128 = vpop.f32.mrb[0].mxu0
      %v1129 = vadd.f32 0.0, %v1128
      %v1130 = vpop.f32.mrb[0].mxu0
      %1131 = vmatprep.mubr.f32.mxu0 0.0
      %1132 = vmatmul.mubr.f32.gmra.mrb[0].mxu0 %v1052
      %v1133 = vpop.f32.mrb[0].mxu0
      %v1134 = vadd.f32 0.0, %v1133
      %v1135 = vpop.f32.mrb[0].mxu0
      %1136 = vmatprep.mubr.f32.mxu0 0.0
      %1137 = vmatmul.mubr.f32.gmra.mrb[0].mxu0 %v1054
      %v1138 = vpop.f32.mrb[0].mxu0
      %v1139 = vadd.f32 0.0, %v1138
      %v1140 = vpop.f32.mrb[0].mxu0
      %1141 = vdwg.mxu0
      %v1142 = vmul.f32 %v1129, 0.35355338
      %v1143 = vmul.f32 %v1134, 0.35355338
      %v1144 = vmul.f32 %v1139, 0.35355338
      %v1145 = vsel %vm230, %v1142, -1e+30
      %v1146 = vsel %vm230, %v1143, -1e+30
      %v1147 = vsel %vm230, %v1144, -1e+30
      %v1148 = vsel %vm341, %v1145, -inf
      %1149 = vmax.xlane.f32.xlu0 %v1148
      %v1150 = vpop.xlane.xlu0 %1149
      %v1151 = vsel %vm341, %v1146, -inf
      %1152 = vmax.xlane.f32.xlu0 %v1151
      %v1153 = vpop.xlane.xlu0 %1152
      %v1154 = vsel %vm341, %v1147, -inf
      %1155 = vmax.xlane.f32.xlu0 %v1154
      %v1156 = vpop.xlane.xlu0 %1155
      %v1157 = vsub.f32 %v1145, %v1150
      %v1158 = vsub.f32 %v1146, %v1153
      %v1159 = vsub.f32 %v1147, %v1156
      %v1160 = vmul.f32 %v1157, 1.442695
      %v1161 = vpow.pop %v1160
      %v1162 = vmul.f32 %v1158, 1.442695
      %v1163 = vpow.pop %v1162
      %v1164 = vmul.f32 %v1159, 1.442695
      %v1165 = vpow.pop %v1164
      %v1166 = vsel %vm341, %v1161, 0.0
      %1167 = vadd.xlane.f32.xlu0 %v1166
      %v1168 = vpop.xlane.xlu0 %1167
      %v1169 = vsel %vm341, %v1163, 0.0
      %1170 = vadd.xlane.f32.xlu0 %v1169
      %v1171 = vpop.xlane.xlu0 %1170
      %v1172 = vsel %vm341, %v1165, 0.0
      %1173 = vadd.xlane.f32.xlu0 %v1172
      %v1174 = vpop.xlane.xlu0 %1173
      %v1175 = vrcp.pop %v1168
      %v1176 = vrcp.pop %v1171
      %v1177 = vrcp.pop %v1174
      %v1178 = vmul.f32 %v1161, %v1175
      %v1179 = vmul.f32 %v1163, %v1176
      %v1180 = vmul.f32 %v1165, %v1177
      %v1181 = vpack.c.bf16 %v1179, %v1178
      %v1182 = vpack.c.bf16 %v1180, %v1180
      %1183 = vrot.lane.b32.xlu0 %v231, 40
      %v1184 = vpop.permute.xlu0 %1183
      %1185 = vrot.lane.b32.xlu0 %v232, 40
      %v1186 = vpop.permute.xlu0 %1185
      %v1189 = vsel %vm341, %v1181, 0
      %v1192 = vsel %vm341, %v1182, 0
      %v1195 = vsel %vm390, %v1186, 0
      %1197 = vmatprep.subr.bf16.mxu0 0
      %1198 = vmatpush1.bf16.msra.mxu0 %v1184
      %1199 = vmatprep.subr.bf16.mxu0 0
      %1200 = vmatpush1.bf16.msra.mxu0 %v1195
      %1201 = vmatprep.subr.bf16.mxu0 0
      %1202 = vmatpush1.bf16.msra.mxu0 0
      %1203 = vmatprep.subr.bf16.mxu0 0
      %1204 = vmatpush1.bf16.msra.mxu0 0
      %1205 = vmatprep.subr.bf16.mxu0 0
      %1206 = vmatpush1.bf16.msra.mxu0 0
      %1207 = vmatprep.subr.bf16.mxu0 0
      %1208 = vmatpush1.bf16.msra.mxu0 0
      %1209 = vmatprep.subr.bf16.mxu0 0
      %1210 = vmatpush1.bf16.msra.mxu0 0
      %1211 = vmatprep.subr.bf16.mxu0 0
      %1212 = vmatpush1.bf16.msra.mxu0 0
      %1213 = vmatprep.subr.bf16.mxu0 0
      %1214 = vmatpush1.bf16.msra.mxu0 0
      %1215 = vmatprep.subr.bf16.mxu0 0
      %1216 = vmatpush1.bf16.msra.mxu0 0
      %1217 = vmatprep.subr.bf16.mxu0 0
      %1218 = vmatpush1.bf16.msra.mxu0 0
      %1219 = vmatprep.subr.bf16.mxu0 0
      %1220 = vmatpush1.bf16.msra.mxu0 0
      %1221 = vmatprep.subr.bf16.mxu0 0
      %1222 = vmatpush1.bf16.msra.mxu0 0
      %1223 = vmatprep.subr.bf16.mxu0 0
      %1224 = vmatpush1.bf16.msra.mxu0 0
      %1225 = vmatprep.subr.bf16.mxu0 0
      %1226 = vmatpush1.bf16.msra.mxu0 0
      %1227 = vmatprep.subr.bf16.mxu0 0
      %1228 = vmatpush1.bf16.msra.mxu0 0
      %1229 = vmatprep.mubr.bf16.mxu0 0
      %1230 = vmatmul.mubr.bf16.gmra.mrb[0].mxu0 %v1189
      %v1231 = vpop.f32.mrb[0].mxu0
      %v1232 = vadd.f32 0.0, %v1231
      %v1233 = vpop.f32.mrb[0].mxu0
      %v1234 = vpop.f32.mrb[0].mxu0
      %v1235 = vadd.f32 0.0, %v1234
      %v1236 = vpop.f32.mrb[0].mxu0
      %1237 = vmatprep.mubr.bf16.mxu0 0
      %1238 = vmatmul.mubr.bf16.gmra.mrb[0].mxu0 %v1192
      %v1239 = vpop.f32.mrb[0].mxu0
      %v1240 = vadd.f32 0.0, %v1239
      %v1241 = vpop.f32.mrb[0].mxu0
      %v1242 = vpop.f32.mrb[0].mxu0
      %v1243 = vpop.f32.mrb[0].mxu0
      %1244 = vdwg.mxu0
      %v1245 = vpack.c.bf16 %v1235, %v1232
      %v1246 = vpack.c.bf16 %v1240, %v1240
      %v1248 = vrot.slane %v227, 4
      %v1250 = vsel %vm242, %v1245, 0
      %v1253 = vsel %vm242, %v1246, 0
      %v1256 = vsel %vm390, %v1248, 0
      %1258 = vmatprep.subr.bf16.mxu0 0
      %1259 = vmatpush1.bf16.msra.mxu0 %v1256
      %1260 = vmatprep.subr.bf16.mxu0 0
      %1261 = vmatpush1.bf16.msra.mxu0 0
      %1262 = vmatprep.subr.bf16.mxu0 0
      %1263 = vmatpush1.bf16.msra.mxu0 0
      %1264 = vmatprep.subr.bf16.mxu0 0
      %1265 = vmatpush1.bf16.msra.mxu0 0
      %1266 = vmatprep.subr.bf16.mxu0 0
      %1267 = vmatpush1.bf16.msra.mxu0 0
      %1268 = vmatprep.subr.bf16.mxu0 0
      %1269 = vmatpush1.bf16.msra.mxu0 0
      %1270 = vmatprep.subr.bf16.mxu0 0
      %1271 = vmatpush1.bf16.msra.mxu0 0
      %1272 = vmatprep.subr.bf16.mxu0 0
      %1273 = vmatpush1.bf16.msra.mxu0 0
      %1274 = vmatprep.subr.bf16.mxu0 0
      %1275 = vmatpush1.bf16.msra.mxu0 0
      %1276 = vmatprep.subr.bf16.mxu0 0
      %1277 = vmatpush1.bf16.msra.mxu0 0
      %1278 = vmatprep.subr.bf16.mxu0 0
      %1279 = vmatpush1.bf16.msra.mxu0 0
      %1280 = vmatprep.subr.bf16.mxu0 0
      %1281 = vmatpush1.bf16.msra.mxu0 0
      %1282 = vmatprep.subr.bf16.mxu0 0
      %1283 = vmatpush1.bf16.msra.mxu0 0
      %1284 = vmatprep.subr.bf16.mxu0 0
      %1285 = vmatpush1.bf16.msra.mxu0 0
      %1286 = vmatprep.subr.bf16.mxu0 0
      %1287 = vmatpush1.bf16.msra.mxu0 0
      %1288 = vmatprep.subr.bf16.mxu0 0
      %1289 = vmatpush1.bf16.msra.mxu0 0
      %1290 = vmatprep.mubr.bf16.mxu0 0
      %1291 = vmatmul.mubr.bf16.gmra.mrb[0].mxu0 %v1250
      %v1292 = vpop.f32.mrb[0].mxu0
      %v1293 = vadd.f32 0.0, %v1292
      %v1294 = vpop.f32.mrb[0].mxu0
      %v1295 = vpop.f32.mrb[0].mxu0
      %v1296 = vadd.f32 0.0, %v1295
      %v1297 = vpop.f32.mrb[0].mxu0
      %1298 = vmatprep.mubr.bf16.mxu0 0
      %1299 = vmatmul.mubr.bf16.gmra.mrb[0].mxu0 %v1253
      %v1300 = vpop.f32.mrb[0].mxu0
      %v1301 = vadd.f32 0.0, %v1300
      %v1302 = vpop.f32.mrb[0].mxu0
      %v1303 = vpop.f32.mrb[0].mxu0
      %v1304 = vpop.f32.mrb[0].mxu0
      %1305 = vdwg.mxu0
      %v1306 = vadd.f32 %v1035, %v1293
      %v1307 = vadd.f32 %v1036, %v1296
      %v1308 = vadd.f32 %v1037, %v1301
      %v1309 = vld [vmem:[%s212] sm:$0xff]
      %v1310 = vld [vmem:[%s212 + $0x8] sm:$0xff]
      %v1311 = vld [vmem:[%s212 + $0x10] sm:$0xff]
      %v1312 = vadd.f32 %v1309, %v1306
      %v1313 = vadd.f32 %v1310, %v1307
      %v1314 = vadd.f32 %v1311, %v1308
      %v1315 = vld [vmem:[%s2] sm:$0x1]
      %v1317 = vlaneseq
      %v1318 = vshrl.u32 %v1317, 7
      %v1319 = vsub.s32 0, %v1318
      %v1320 = vrot.slane %v1315, %v1319
      %v1322 = vadd.f32 %v1312, %v1320
      %v1323 = vadd.f32 %v1313, %v1320
      %v1324 = vadd.f32 %v1314, %v1320
      %vm1325 = vcmask 261120
      %1326 = vst.msk [vmem:[%s217] sm:$0xff] %vm1325, %v1322
      %1327 = vst.msk [vmem:[%s217 + $0x8] sm:$0xff] %vm1325, %v1323
      %1328 = vst.msk [vmem:[%s217 + $0x10] sm:$0xff] %vm1325, %v1324
      %p1329 = scmp.lt.s32.totalorder %s15, 1
      %s1330 = scalar_select %p1329, %s15, 1
      %s1331 = smul.addr %s1330, 3
      %s1332 = smul.addr %s1331, 8
      %s1333 = scalar_lea.vmem %s4, %s1332
      // Predicated region
      $region37: #{vit_forward.10} parent=35 // pred_check
        %p1334 = pneg %p127
      $region38: #{vit_forward.10} parent=35 // pred_check_branch
        %1336 = sbr.rel (%p1334) target = $region40
      $region39: #{vit_forward.10} parent=35 // pred_region
        _
      $region40: #{vit_forward.10} parent=35 // pred_fallthru
        _
    $region36: #{vit_forward.10} parent=5 // pred_fallthru
      _
    %p1337 = scmp.le.s32.totalorder 2, %s10
    // Predicated region
    $region41: #{vit_forward.10} parent=5 // pred_check
      %p1338 = pneg %p1337
    $region42: #{vit_forward.10} parent=5 // pred_check_branch
      %1340 = sbr.rel (%p1338) target = $region44
    $region43: #{vit_forward.10} parent=5 // pred_region
      %s1341 = ssub.s32 %s10, 2
      // Predicated region
      $region45: #{vit_forward.10} parent=43 // pred_check
        %p1342 = pneg %p133
      $region46: #{vit_forward.10} parent=43 // pred_check_branch
        %1344 = sbr.rel (%p1342) target = $region48
      $region47: #{vit_forward.10} parent=43 // pred_region
        %p1345 = scmp.lt.s32.totalorder %s16, 1
        %s1346 = scalar_select %p1345, %s16, 1
        %s1347 = smul.addr %s1346, 3
        %s1348 = smul.addr %s1347, 8
        %s1349 = scalar_lea.vmem %s4, %s1348
      $region48: #{vit_forward.10} parent=43 // pred_fallthru
        _
    $region44: #{vit_forward.10} parent=5 // pred_fallthru
      _
  $region6: #{vit_forward.10} parent=0 // loop_footer
    %s14 = sadd.s32 1, %s10
  $region7: #{vit_forward.10} parent=0 // loop_footer_branch
    %9 = sbr.rel target = $region3
  $region8: #{vit_forward.10} parent=0 // loop_exit
    _

// kernel: vit_forward.15
$region0: #{vit_forward.15}
  #allocation0 [shape = 'u32[]', space=smem, size = 0x4, offset = 0x4, fixed_abs, tag = 'smem constant byte address 0x4 - core index']
  #allocation1 [shape = 'u32[144,128]{1,0:T(1,128)}', space=vmem, size = 0x12000, scoped, tag = 'internal scratch']
  %s0 = inlined_call_operand.vmem [shape: f32[2,32], index: 0, kind: input, shape index: {}]
  %s1 = inlined_call_operand.vmem [shape: f32[1,32], index: 1, kind: input, shape index: {}]
  %s2 = inlined_call_operand.vmem [shape: f32[1,32], index: 2, kind: input, shape index: {}]
  %s3 = inlined_call_operand.vmem [shape: f32[32,10], index: 3, kind: input, shape index: {}]
  %s4 = inlined_call_operand.vmem [shape: f32[1,10], index: 4, kind: input, shape index: {}]
  %s5 = inlined_call_operand.hbm [shape: f32[2,10], index: 5, kind: output, shape index: {}]
  %s6 = sld [smem:[#allocation0]]
  $region30: #{vit_forward.15} parent=0
    _
  %s8 = ssub.s32 1, %s6
  %s9 = scalar_select 0, %s8, %s6
  $region1: #{vit_forward.15} parent=0
    #allocation2 [shape = 'u8[1024]{0}', space=vmem, size = 0x400, scoped, tag = 'output window, operand 0, single buffered']
    #allocation3 [shape = 's32[1]{0}', space=sflag, size = 0x4, scoped, tag = 'scoped memory for vit_forward.15']
    %10 = vsyncpa [#allocation3], 0
    // Predicated region
    $region2: #{vit_forward.15} parent=1 // pred_check
      _
    $region3: #{vit_forward.15} parent=1 // pred_check_branch
      %12 = sbr.rel (0) target = $region5
    $region4: #{vit_forward.15} parent=1 // pred_region
      _
    $region5: #{vit_forward.15} parent=1 // pred_fallthru
      _
    // Predicated region
    $region6: #{vit_forward.15} parent=1 // pred_check
      _
    $region7: #{vit_forward.15} parent=1 // pred_check_branch
      %14 = sbr.rel (0) target = $region9
    $region8: #{vit_forward.15} parent=1 // pred_region
      _
    $region9: #{vit_forward.15} parent=1 // pred_fallthru
      _
    // Predicated region
    $region10: #{vit_forward.15} parent=1 // pred_check
      _
    $region11: #{vit_forward.15} parent=1 // pred_check_branch
      %16 = sbr.rel (0) target = $region13
    $region12: #{vit_forward.15} parent=1 // pred_region
      _
    $region13: #{vit_forward.15} parent=1 // pred_fallthru
      _
    // Predicated region
    $region14: #{vit_forward.15} parent=1 // pred_check
      _
    $region15: #{vit_forward.15} parent=1 // pred_check_branch
      %18 = sbr.rel (0) target = $region17
    $region16: #{vit_forward.15} parent=1 // pred_region
      _
    $region17: #{vit_forward.15} parent=1 // pred_fallthru
      _
    // Predicated region
    $region18: #{vit_forward.15} parent=1 // pred_check
      _
    $region19: #{vit_forward.15} parent=1 // pred_check_branch
      %20 = sbr.rel (0) target = $region21
    $region20: #{vit_forward.15} parent=1 // pred_region
      _
    $region21: #{vit_forward.15} parent=1 // pred_fallthru
      _
    %v22 = vld [vmem:[%s0] sm:$0x3]
    %v23 = vld [vmem:[%s1] sm:$0x1]
    %v24 = vld [vmem:[%s2] sm:$0x1]
    %vm25 = vcmask 254976
    %v26 = vsel %vm25, %v22, 0.0
    %27 = vadd.xlane.f32.xlu0 %v26
    %v28 = vpop.xlane.xlu0 %27
    %v29 = vrcp.pop 32.0
    %v30 = vmul.f32 %v28, %v29
    %v31 = vsub.f32 %v22, %v30
    %v32 = vmul.f32 %v31, %v31
    %v33 = vsel %vm25, %v32, 0.0
    %34 = vadd.xlane.f32.xlu0 %v33
    %v35 = vpop.xlane.xlu0 %34
    %v36 = vmul.f32 %v35, %v29
    %v37 = vadd.f32 %v36, 1e-05
    %v38 = vrsqrt.pop %v37
    %v39 = vmul.f32 %v31, %v38
    %v41 = vlaneseq
    %v42 = vshrl.u32 %v41, 7
    %v43 = vsub.s32 0, %v42
    %v44 = vrot.slane %v23, %v43
    %v46 = vmul.f32 %v39, %v44
    %v48 = vlaneseq
    %v49 = vshrl.u32 %v48, 7
    %v50 = vsub.s32 0, %v49
    %v51 = vrot.slane %v24, %v50
    %v53 = vadd.f32 %v46, %v51
    %v54 = vpack.c.bf16 %v53, %v53
    %v55 = vld [vmem:[%s3] sm:$0xff]
    %v56 = vld [vmem:[%s3 + $0x8] sm:$0xff]
    %v57 = vld [vmem:[%s3 + $0x10] sm:$0xff]
    %v58 = vld [vmem:[%s3 + $0x18] sm:$0xff]
    %v59 = vpack.c.bf16 %v56, %v55
    %v60 = vpack.c.bf16 %v58, %v57
    %v61 = vld [vmem:[%s4] sm:$0x1]
    %v63 = vlaneseq
    %v64 = vshrl.u32 %v63, 7
    %v65 = vsub.s32 0, %v64
    %v66 = vrot.slane %v61, %v65
    %vm68 = vcmask 261120
    %v70 = vsel %vm68, %v54, 0
    %72 = vmatprep.subr.bf16.mxu0 0
    %73 = vmatpush1.bf16.msra.mxu0 %v59
    %74 = vmatprep.subr.bf16.mxu0 0
    %75 = vmatpush1.bf16.msra.mxu0 %v60
    %76 = vmatprep.subr.bf16.mxu0 0
    %77 = vmatpush1.bf16.msra.mxu0 0
    %78 = vmatprep.subr.bf16.mxu0 0
    %79 = vmatpush1.bf16.msra.mxu0 0
    %80 = vmatprep.subr.bf16.mxu0 0
    %81 = vmatpush1.bf16.msra.mxu0 0
    %82 = vmatprep.subr.bf16.mxu0 0
    %83 = vmatpush1.bf16.msra.mxu0 0
    %84 = vmatprep.subr.bf16.mxu0 0
    %85 = vmatpush1.bf16.msra.mxu0 0
    %86 = vmatprep.subr.bf16.mxu0 0
    %87 = vmatpush1.bf16.msra.mxu0 0
    %88 = vmatprep.subr.bf16.mxu0 0
    %89 = vmatpush1.bf16.msra.mxu0 0
    %90 = vmatprep.subr.bf16.mxu0 0
    %91 = vmatpush1.bf16.msra.mxu0 0
    %92 = vmatprep.subr.bf16.mxu0 0
    %93 = vmatpush1.bf16.msra.mxu0 0
    %94 = vmatprep.subr.bf16.mxu0 0
    %95 = vmatpush1.bf16.msra.mxu0 0
    %96 = vmatprep.subr.bf16.mxu0 0
    %97 = vmatpush1.bf16.msra.mxu0 0
    %98 = vmatprep.subr.bf16.mxu0 0
    %99 = vmatpush1.bf16.msra.mxu0 0
    %100 = vmatprep.subr.bf16.mxu0 0
    %101 = vmatpush1.bf16.msra.mxu0 0
    %102 = vmatprep.subr.bf16.mxu0 0
    %103 = vmatpush1.bf16.msra.mxu0 0
    %104 = vmatprep.mubr.bf16.mxu0 0
    %105 = vmatmul.mubr.bf16.gmra.mrb[0].mxu0 %v70
    %v106 = vpop.f32.mrb[0].mxu0
    %v107 = vadd.f32 %v66, %v106
    %v108 = vpop.f32.mrb[0].mxu0
    %v109 = vpop.f32.mrb[0].mxu0
    %v110 = vpop.f32.mrb[0].mxu0
    %111 = vdwg.mxu0
    %vm112 = vcmask 74752
    %113 = vst.msk [vmem:[#allocation2] sm:$0x3] %vm112, %v107
    // Predicated region
    $region22: #{vit_forward.15} parent=1 // pred_check
      _
    $region23: #{vit_forward.15} parent=1 // pred_check_branch
      %115 = sbr.rel (0) target = $region25
    $region24: #{vit_forward.15} parent=1 // pred_region
      %s117 = ssub.s32 32, 32
      %118 = vsyncadd [#allocation3], %s117
      %s120 = sshll.u32 [#allocation2], 4
      %s121 = int_to_ptr.vmem [resolvable:$true] %s120
      %123 = dma.vmem_to_hbm [thread:$0]  %s121, 32, %s5, [#allocation3]
    $region25: #{vit_forward.15} parent=1 // pred_fallthru
      _
    // Predicated region
    $region26: #{vit_forward.15} parent=1 // pred_check
      _
    $region27: #{vit_forward.15} parent=1 // pred_check_branch
      %125 = sbr.rel (0) target = $region29
    $region28: #{vit_forward.15} parent=1 // pred_region
      %126 = dma.done [#allocation3], 32
    $region29: #{vit_forward.15} parent=1 // pred_fallthru
      _
    %127 = vsyncpa [#allocation3], 1

</llo_original>
